<compile_context>
chip_gen: v6e
topology: v6e:2x2x1
jax: 0.10.0
libtpu: 0.0.40
codegen_flags: <defaults>
</compile_context>

<pallas_src>
import math
import functools

import jax
import jax.numpy as jnp
from jax.experimental import pallas as pl
from jax.experimental.pallas import tpu as pltpu


# ---------------------------------------------------------------------------
# Pallas kernel: the FULL encoder stack (all layers) for ONE batch element.
# ---------------------------------------------------------------------------
def encoder_stack_kernel(x_ref,
                         wqkv_ref, bqkv_ref, wo_ref, bo_ref,
                         ln1w_ref, ln1b_ref,
                         w1_ref, b1_ref, w2_ref, b2_ref,
                         ln2w_ref, ln2b_ref,
                         o_ref, *, num_layers, num_heads):
    H = num_heads
    x = x_ref[...]                                     # (S, E) f32
    S, E = x.shape
    dh = E // H

    def layer_norm(z, w, b):                           # f32 elementwise (v5e-safe)
        mu = jnp.mean(z, axis=-1, keepdims=True)
        var = jnp.mean((z - mu) ** 2, axis=-1, keepdims=True)
        return (z - mu) * jax.lax.rsqrt(var + 1e-5) * w + b

    for l in range(num_layers):                        # static unroll (small L)
        # ---- fused QKV projection; attention scale already folded into Wq ----
        qkv = jnp.dot(x.astype(jnp.bfloat16), wqkv_ref[l],
                      preferred_element_type=jnp.float32) + bqkv_ref[l]      # (S, 3E)

        # ---- single relayout to head-major, then cast to bf16 ONCE ----
        qkv_h = jnp.swapaxes(qkv.reshape(S, 3 * H, dh), 0, 1)                # (3H, S, dh)
        qkv_h = qkv_h.astype(jnp.bfloat16)
        q = qkv_h[0:H]                                                       # (H, S, dh)
        k = qkv_h[H:2 * H]
        v = qkv_h[2 * H:3 * H]

        # ---- head-batched scaled-dot-product attention (scale folded in Wq) ----
        s = jnp.einsum("hqd,hkd->hqk", q, k,
                       preferred_element_type=jnp.float32)                   # (H, S, S)
        s = s - jnp.max(s, axis=-1, keepdims=True)
        p = jnp.exp(s)
        p = p * pl.reciprocal(jnp.sum(p, axis=-1, keepdims=True), approx=True)
        a = jnp.einsum("hqk,hkd->hqd", p.astype(jnp.bfloat16), v,
                       preferred_element_type=jnp.float32)                   # (H, S, dh)

        # ---- head merge folded into the output projection: wo stored (H, dh, E) ----
        attn = jnp.einsum("hqd,hde->hqe", a.astype(jnp.bfloat16), wo_ref[l],
                          preferred_element_type=jnp.float32)                # (H, S, E)
        attn = jnp.sum(attn, axis=0) + bo_ref[l]                             # (S, E)

        # ---- residual + LayerNorm (dropout1 == identity in eval) ----
        x = layer_norm(x + attn, ln1w_ref[l], ln1b_ref[l])

        # ---- FFN: Linear -> ReLU -> Linear, residual + LayerNorm (dropout2 identity) ----
        h1 = jnp.maximum(jnp.dot(x.astype(jnp.bfloat16), w1_ref[l],
                                 preferred_element_type=jnp.float32) + b1_ref[l], 0.0)
        ffn = jnp.dot(h1.astype(jnp.bfloat16), w2_ref[l],
                      preferred_element_type=jnp.float32) + b2_ref[l]
        x = layer_norm(x + ffn, ln2w_ref[l], ln2b_ref[l])

    o_ref[...] = x.astype(o_ref.dtype)


# ---------------------------------------------------------------------------
# Parameter init (deterministic, synthetic) with fused + stacked layer weights.
# ---------------------------------------------------------------------------
def make_positional_encoding(max_len, d_model):
    pe = jnp.zeros((max_len, d_model), dtype=jnp.float32)
    position = jnp.arange(0, max_len, dtype=jnp.float32)[:, None]
    div_term = jnp.exp(jnp.arange(0, d_model, 2, dtype=jnp.float32)
                       * (-math.log(10000.0) / d_model))
    pe = pe.at[:, 0::2].set(jnp.sin(position * div_term))
    pe = pe.at[:, 1::2].set(jnp.cos(position * div_term))
    return pe[None, :, :]                               # (1, max_len, d_model)


def init_encoder_params(key, vocab_size, max_len, E, num_layers, num_heads, ffn_dim):
    dh = E // num_heads
    scale = 1.0 / math.sqrt(dh)
    keys = jax.random.split(key, 1 + num_layers)
    params = {
        "embedding": 0.02 * jax.random.normal(keys[0], (vocab_size, E), jnp.float32),
        "pe": make_positional_encoding(max_len, E),
    }
    per_layer = []
    for li in range(num_layers):
        lk = jax.random.split(keys[1 + li], 8)
        s = 0.05
        # attention scale 1/sqrt(dh) folded into the Q projection (bias is zero so no
        # bias rescale needed)
        wq = s * jax.random.normal(lk[0], (E, E), jnp.float32) * scale
        wk = s * jax.random.normal(lk[1], (E, E), jnp.float32)
        wv = s * jax.random.normal(lk[2], (E, E), jnp.float32)
        wo = s * jax.random.normal(lk[3], (E, E), jnp.float32)
        lp = {
            # fused Wq|Wk|Wv, stored bf16 (MXU operand dtype, half the DMA bytes)
            "wqkv": jnp.concatenate([wq, wk, wv], axis=1).astype(jnp.bfloat16),
            "bqkv": jnp.zeros((1, 3 * E), jnp.float32),
            # head-merge folded into output projection: (H, dh, E)
            "wo": wo.reshape(num_heads, dh, E).astype(jnp.bfloat16),
            "bo": jnp.zeros((1, E), jnp.float32),
            "ln1w": jnp.ones((1, E), jnp.float32),
            "ln1b": jnp.zeros((1, E), jnp.float32),
            "w1": (s * jax.random.normal(lk[4], (E, ffn_dim), jnp.float32)).astype(jnp.bfloat16),
            "b1": jnp.zeros((1, ffn_dim), jnp.float32),
            "w2": (s * jax.random.normal(lk[5], (ffn_dim, E), jnp.float32)).astype(jnp.bfloat16),
            "b2": jnp.zeros((1, E), jnp.float32),
            "ln2w": jnp.ones((1, E), jnp.float32),
            "ln2b": jnp.zeros((1, E), jnp.float32),
        }
        per_layer.append(lp)
    # stack per-layer weights along a leading layer axis -> one fused kernel
    params["stacked"] = {k: jnp.stack([lp[k] for lp in per_layer], axis=0)
                         for k in per_layer[0]}
    return params


# ---------------------------------------------------------------------------
# Full Encoder forward: embedding + PE in JAX, all encoder layers in one kernel.
# ---------------------------------------------------------------------------
def encoder_forward(params, token_ids, num_heads):
    """token_ids: (B, S) int32 -> (B, S, E) float32."""
    B, S = token_ids.shape
    E = params["embedding"].shape[1]

    # TODO(synk): embedding gather (data-dependent row lookup) kept in plain JAX; at
    # larger shapes fuse it via PrefetchScalarGridSpec + pl.Element row-gather.
    x = jnp.take(params["embedding"], token_ids, axis=0) + params["pe"][:, :S, :]
    # encoder-level dropout == identity in eval mode
    x = x.astype(jnp.float32)                            # (B, S, E)

    st = params["stacked"]
    weight_order = ["wqkv", "bqkv", "wo", "bo", "ln1w", "ln1b",
                    "w1", "b1", "w2", "b2", "ln2w", "ln2b"]
    weights = [st[n] for n in weight_order]
    num_layers = st["wqkv"].shape[0]

    def resident_spec(w):
        # whole stacked weight array, constant block index across the batch grid
        return pl.BlockSpec(w.shape, lambda b, _nd=w.ndim: (0,) * _nd)

    in_specs = ([pl.BlockSpec((None, S, E), lambda b: (b, 0, 0))]
                + [resident_spec(w) for w in weights])
    out_spec = pl.BlockSpec((None, S, E), lambda b: (b, 0, 0))

    out = pl.pallas_call(
        functools.partial(encoder_stack_kernel,
                          num_layers=num_layers, num_heads=num_heads),
        out_shape=jax.ShapeDtypeStruct((B, S, E), jnp.float32),
        grid=(B,),
        in_specs=in_specs,
        out_specs=out_spec,
        compiler_params=pltpu.CompilerParams(dimension_semantics=("parallel",)),
    )(x, *weights)
    return out


if __name__ == "__main__":
    vocab_size, max_len = 50, 16
    embedding_dim, num_layers, num_heads, ffn_dim, dropout = 32, 2, 4, 64, 0.1
    batch, seq = 2, 8

    key = jax.random.PRNGKey(0)
    pkey, dkey = jax.random.split(key)
    params = init_encoder_params(pkey, vocab_size, max_len, embedding_dim,
                                 num_layers, num_heads, ffn_dim)
    token_ids = jax.random.randint(dkey, (batch, seq), 0, vocab_size, dtype=jnp.int32)

    out = encoder_forward(params, token_ids, num_heads)
    out = jax.block_until_ready(out)
    assert out.shape == (batch, seq, embedding_dim)
    assert bool(jnp.all(jnp.isfinite(out)))
    print("KERNEL_OK")
</pallas_src>

<mosaic_0001>
module attributes {stable_mosaic.version = 11 : i64} {
  func.func @encoder_stack_kernel(%arg0: i32, %arg1: memref<1x8x32xf32, #tpu.memory_space<vmem>>, %arg2: memref<2x32x96xbf16, #tpu.memory_space<vmem>>, %arg3: memref<2x1x96xf32, #tpu.memory_space<vmem>>, %arg4: memref<2x4x8x32xbf16, #tpu.memory_space<vmem>>, %arg5: memref<2x1x32xf32, #tpu.memory_space<vmem>>, %arg6: memref<2x1x32xf32, #tpu.memory_space<vmem>>, %arg7: memref<2x1x32xf32, #tpu.memory_space<vmem>>, %arg8: memref<2x32x64xbf16, #tpu.memory_space<vmem>>, %arg9: memref<2x1x64xf32, #tpu.memory_space<vmem>>, %arg10: memref<2x64x32xbf16, #tpu.memory_space<vmem>>, %arg11: memref<2x1x32xf32, #tpu.memory_space<vmem>>, %arg12: memref<2x1x32xf32, #tpu.memory_space<vmem>>, %arg13: memref<2x1x32xf32, #tpu.memory_space<vmem>>, %arg14: memref<1x8x32xf32, #tpu.memory_space<vmem>>) attributes {dimension_semantics = [#tpu.dimension_semantics<parallel>], iteration_bounds = array<i64: 2>, scalar_prefetch = 0 : i64, scratch_operands = 0 : i64, tpu.core_type = #tpu.core_type<tc>, window_params = [{transform_indices = @transform_0, window_bounds = array<i64: 1, 8, 32>}, {pipeline_mode = #tpu.pipeline_mode<synchronous>, transform_indices = @transform_1, window_bounds = array<i64: 2, 32, 96>}, {pipeline_mode = #tpu.pipeline_mode<synchronous>, transform_indices = @transform_2, window_bounds = array<i64: 2, 1, 96>}, {pipeline_mode = #tpu.pipeline_mode<synchronous>, transform_indices = @transform_3, window_bounds = array<i64: 2, 4, 8, 32>}, {pipeline_mode = #tpu.pipeline_mode<synchronous>, transform_indices = @transform_4, window_bounds = array<i64: 2, 1, 32>}, {pipeline_mode = #tpu.pipeline_mode<synchronous>, transform_indices = @transform_5, window_bounds = array<i64: 2, 1, 32>}, {pipeline_mode = #tpu.pipeline_mode<synchronous>, transform_indices = @transform_6, window_bounds = array<i64: 2, 1, 32>}, {pipeline_mode = #tpu.pipeline_mode<synchronous>, transform_indices = @transform_7, window_bounds = array<i64: 2, 32, 64>}, {pipeline_mode = #tpu.pipeline_mode<synchronous>, transform_indices = @transform_8, window_bounds = array<i64: 2, 1, 64>}, {pipeline_mode = #tpu.pipeline_mode<synchronous>, transform_indices = @transform_9, window_bounds = array<i64: 2, 64, 32>}, {pipeline_mode = #tpu.pipeline_mode<synchronous>, transform_indices = @transform_10, window_bounds = array<i64: 2, 1, 32>}, {pipeline_mode = #tpu.pipeline_mode<synchronous>, transform_indices = @transform_11, window_bounds = array<i64: 2, 1, 32>}, {pipeline_mode = #tpu.pipeline_mode<synchronous>, transform_indices = @transform_12, window_bounds = array<i64: 2, 1, 32>}, {transform_indices = @transform_13, window_bounds = array<i64: 1, 8, 32>}]} {
    %c0 = arith.constant 0 : index
    %c0_0 = arith.constant 0 : index
    %c0_1 = arith.constant 0 : index
    %0 = vector.load %arg1[%c0, %c0_0, %c0_1] : memref<1x8x32xf32, #tpu.memory_space<vmem>>, vector<1x8x32xf32>
    %1 = vector.shape_cast %0 : vector<1x8x32xf32> to vector<8x32xf32>
    %2 = arith.truncf %1 : vector<8x32xf32> to vector<8x32xbf16>
    %c0_2 = arith.constant 0 : index
    %c0_3 = arith.constant 0 : index
    %c0_4 = arith.constant 0 : index
    %3 = vector.load %arg2[%c0_2, %c0_3, %c0_4] : memref<2x32x96xbf16, #tpu.memory_space<vmem>>, vector<1x32x96xbf16>
    %4 = vector.shape_cast %3 : vector<1x32x96xbf16> to vector<32x96xbf16>
    %cst = arith.constant dense<0.000000e+00> : vector<8x96xf32>
    %5 = tpu.matmul %2, %4, %cst {dimension_numbers = #tpu.dot_dimension_numbers<[1], [0], [0], [1], [0, 0, 1, 1], [], []>} : vector<8x32xbf16>, vector<32x96xbf16>, vector<8x96xf32> -> vector<8x96xf32>
    %c0_5 = arith.constant 0 : index
    %c0_6 = arith.constant 0 : index
    %c0_7 = arith.constant 0 : index
    %6 = vector.load %arg3[%c0_5, %c0_6, %c0_7] : memref<2x1x96xf32, #tpu.memory_space<vmem>>, vector<1x1x96xf32>
    %7 = vector.shape_cast %6 : vector<1x1x96xf32> to vector<1x96xf32>
    %8 = vector.broadcast %7 : vector<1x96xf32> to vector<8x96xf32>
    %9 = arith.addf %5, %8 : vector<8x96xf32>
    %10 = vector.shape_cast %9 : vector<8x96xf32> to vector<8x12x8xf32>
    %11 = tpu.transpose %10, [1, 0, 2] : vector<8x12x8xf32> -> vector<12x8x8xf32>
    %12 = arith.truncf %11 : vector<12x8x8xf32> to vector<12x8x8xbf16>
    %13 = vector.extract_strided_slice %12 {offsets = [0, 0, 0], sizes = [4, 8, 8], strides = [1, 1, 1]} : vector<12x8x8xbf16> to vector<4x8x8xbf16>
    %14 = vector.extract_strided_slice %12 {offsets = [4, 0, 0], sizes = [4, 8, 8], strides = [1, 1, 1]} : vector<12x8x8xbf16> to vector<4x8x8xbf16>
    %15 = vector.extract_strided_slice %12 {offsets = [8, 0, 0], sizes = [4, 8, 8], strides = [1, 1, 1]} : vector<12x8x8xbf16> to vector<4x8x8xbf16>
    "tpu.trace_start"() <{level = 10 : i32, message = "hqd,hkd->hqk"}> : () -> ()
    %cst_8 = arith.constant dense<0.000000e+00> : vector<4x8x8xf32>
    %16 = tpu.matmul %13, %14, %cst_8 {dimension_numbers = #tpu.dot_dimension_numbers<[2], [2], [1], [1], [0, 0, 0, 1, 1, 1], [0], [0]>} : vector<4x8x8xbf16>, vector<4x8x8xbf16>, vector<4x8x8xf32> -> vector<4x8x8xf32>
    "tpu.trace_stop"() : () -> ()
    %cst_9 = arith.constant dense<0xFF800000> : vector<4x8xf32>
    %17 = vector.multi_reduction <maximumf>, %16, %cst_9 [2] : vector<4x8x8xf32> to vector<4x8xf32>
    %18 = vector.shape_cast %17 : vector<4x8xf32> to vector<4x8x1xf32>
    %19 = vector.broadcast %18 : vector<4x8x1xf32> to vector<4x8x8xf32>
    %20 = arith.subf %16, %19 : vector<4x8x8xf32>
    %21 = math.exp %20 : vector<4x8x8xf32>
    %cst_10 = arith.constant dense<0.000000e+00> : vector<4x8xf32>
    %22 = vector.multi_reduction <add>, %21, %cst_10 [2] : vector<4x8x8xf32> to vector<4x8xf32>
    %23 = vector.shape_cast %22 : vector<4x8xf32> to vector<4x8x1xf32>
    %24 = tpu.reciprocal %23 {approx = true} : vector<4x8x1xf32> -> vector<4x8x1xf32>
    %25 = vector.broadcast %24 : vector<4x8x1xf32> to vector<4x8x8xf32>
    %26 = arith.mulf %21, %25 : vector<4x8x8xf32>
    %27 = arith.truncf %26 : vector<4x8x8xf32> to vector<4x8x8xbf16>
    "tpu.trace_start"() <{level = 10 : i32, message = "hqk,hkd->hqd"}> : () -> ()
    %cst_11 = arith.constant dense<0.000000e+00> : vector<4x8x8xf32>
    %28 = tpu.matmul %27, %15, %cst_11 {dimension_numbers = #tpu.dot_dimension_numbers<[2], [1], [1], [2], [0, 0, 0, 1, 1, 2], [0], [0]>} : vector<4x8x8xbf16>, vector<4x8x8xbf16>, vector<4x8x8xf32> -> vector<4x8x8xf32>
    "tpu.trace_stop"() : () -> ()
    %29 = arith.truncf %28 : vector<4x8x8xf32> to vector<4x8x8xbf16>
    %c0_12 = arith.constant 0 : index
    %c0_13 = arith.constant 0 : index
    %c0_14 = arith.constant 0 : index
    %c0_15 = arith.constant 0 : index
    %30 = vector.load %arg4[%c0_12, %c0_13, %c0_14, %c0_15] : memref<2x4x8x32xbf16, #tpu.memory_space<vmem>>, vector<1x4x8x32xbf16>
    %31 = vector.shape_cast %30 : vector<1x4x8x32xbf16> to vector<4x8x32xbf16>
    "tpu.trace_start"() <{level = 10 : i32, message = "hqd,hde->hqe"}> : () -> ()
    %cst_16 = arith.constant dense<0.000000e+00> : vector<4x8x32xf32>
    %32 = tpu.matmul %29, %31, %cst_16 {dimension_numbers = #tpu.dot_dimension_numbers<[2], [1], [1], [2], [0, 0, 0, 1, 1, 2], [0], [0]>} : vector<4x8x8xbf16>, vector<4x8x32xbf16>, vector<4x8x32xf32> -> vector<4x8x32xf32>
    "tpu.trace_stop"() : () -> ()
    %cst_17 = arith.constant dense<0.000000e+00> : vector<8x32xf32>
    %33 = vector.multi_reduction <add>, %32, %cst_17 [0] : vector<4x8x32xf32> to vector<8x32xf32>
    %c0_18 = arith.constant 0 : index
    %c0_19 = arith.constant 0 : index
    %c0_20 = arith.constant 0 : index
    %34 = vector.load %arg5[%c0_18, %c0_19, %c0_20] : memref<2x1x32xf32, #tpu.memory_space<vmem>>, vector<1x1x32xf32>
    %35 = vector.shape_cast %34 : vector<1x1x32xf32> to vector<1x32xf32>
    %36 = vector.broadcast %35 : vector<1x32xf32> to vector<8x32xf32>
    %37 = arith.addf %33, %36 : vector<8x32xf32>
    %38 = arith.addf %1, %37 : vector<8x32xf32>
    %c0_21 = arith.constant 0 : index
    %c0_22 = arith.constant 0 : index
    %c0_23 = arith.constant 0 : index
    %39 = vector.load %arg6[%c0_21, %c0_22, %c0_23] : memref<2x1x32xf32, #tpu.memory_space<vmem>>, vector<1x1x32xf32>
    %40 = vector.shape_cast %39 : vector<1x1x32xf32> to vector<1x32xf32>
    %c0_24 = arith.constant 0 : index
    %c0_25 = arith.constant 0 : index
    %c0_26 = arith.constant 0 : index
    %41 = vector.load %arg7[%c0_24, %c0_25, %c0_26] : memref<2x1x32xf32, #tpu.memory_space<vmem>>, vector<1x1x32xf32>
    %42 = vector.shape_cast %41 : vector<1x1x32xf32> to vector<1x32xf32>
    %cst_27 = arith.constant dense<0.000000e+00> : vector<8xf32>
    %43 = vector.multi_reduction <add>, %38, %cst_27 [1] : vector<8x32xf32> to vector<8xf32>
    %44 = vector.shape_cast %43 : vector<8xf32> to vector<8x1xf32>
    %cst_28 = arith.constant 3.200000e+01 : f32
    %45 = vector.broadcast %cst_28 : f32 to vector<8x1xf32>
    %46 = arith.divf %44, %45 : vector<8x1xf32>
    %47 = vector.broadcast %46 : vector<8x1xf32> to vector<8x32xf32>
    %48 = arith.subf %38, %47 : vector<8x32xf32>
    %49 = arith.mulf %48, %48 : vector<8x32xf32>
    %cst_29 = arith.constant dense<0.000000e+00> : vector<8xf32>
    %50 = vector.multi_reduction <add>, %49, %cst_29 [1] : vector<8x32xf32> to vector<8xf32>
    %51 = vector.shape_cast %50 : vector<8xf32> to vector<8x1xf32>
    %cst_30 = arith.constant 3.200000e+01 : f32
    %52 = vector.broadcast %cst_30 : f32 to vector<8x1xf32>
    %53 = arith.divf %51, %52 : vector<8x1xf32>
    %54 = vector.broadcast %46 : vector<8x1xf32> to vector<8x32xf32>
    %55 = arith.subf %38, %54 : vector<8x32xf32>
    %cst_31 = arith.constant 9.99999974E-6 : f32
    %56 = vector.broadcast %cst_31 : f32 to vector<8x1xf32>
    %57 = arith.addf %53, %56 : vector<8x1xf32>
    %58 = math.rsqrt %57 : vector<8x1xf32>
    %59 = vector.broadcast %58 : vector<8x1xf32> to vector<8x32xf32>
    %60 = arith.mulf %55, %59 : vector<8x32xf32>
    %61 = vector.broadcast %40 : vector<1x32xf32> to vector<8x32xf32>
    %62 = arith.mulf %60, %61 : vector<8x32xf32>
    %63 = vector.broadcast %42 : vector<1x32xf32> to vector<8x32xf32>
    %64 = arith.addf %62, %63 : vector<8x32xf32>
    %65 = arith.truncf %64 : vector<8x32xf32> to vector<8x32xbf16>
    %c0_32 = arith.constant 0 : index
    %c0_33 = arith.constant 0 : index
    %c0_34 = arith.constant 0 : index
    %66 = vector.load %arg8[%c0_32, %c0_33, %c0_34] : memref<2x32x64xbf16, #tpu.memory_space<vmem>>, vector<1x32x64xbf16>
    %67 = vector.shape_cast %66 : vector<1x32x64xbf16> to vector<32x64xbf16>
    %cst_35 = arith.constant dense<0.000000e+00> : vector<8x64xf32>
    %68 = tpu.matmul %65, %67, %cst_35 {dimension_numbers = #tpu.dot_dimension_numbers<[1], [0], [0], [1], [0, 0, 1, 1], [], []>} : vector<8x32xbf16>, vector<32x64xbf16>, vector<8x64xf32> -> vector<8x64xf32>
    %c0_36 = arith.constant 0 : index
    %c0_37 = arith.constant 0 : index
    %c0_38 = arith.constant 0 : index
    %69 = vector.load %arg9[%c0_36, %c0_37, %c0_38] : memref<2x1x64xf32, #tpu.memory_space<vmem>>, vector<1x1x64xf32>
    %70 = vector.shape_cast %69 : vector<1x1x64xf32> to vector<1x64xf32>
    %71 = vector.broadcast %70 : vector<1x64xf32> to vector<8x64xf32>
    %72 = arith.addf %68, %71 : vector<8x64xf32>
    %cst_39 = arith.constant 0.000000e+00 : f32
    %73 = vector.broadcast %cst_39 : f32 to vector<8x64xf32>
    %74 = arith.maximumf %72, %73 : vector<8x64xf32>
    %75 = arith.truncf %74 : vector<8x64xf32> to vector<8x64xbf16>
    %c0_40 = arith.constant 0 : index
    %c0_41 = arith.constant 0 : index
    %c0_42 = arith.constant 0 : index
    %76 = vector.load %arg10[%c0_40, %c0_41, %c0_42] : memref<2x64x32xbf16, #tpu.memory_space<vmem>>, vector<1x64x32xbf16>
    %77 = vector.shape_cast %76 : vector<1x64x32xbf16> to vector<64x32xbf16>
    %cst_43 = arith.constant dense<0.000000e+00> : vector<8x32xf32>
    %78 = tpu.matmul %75, %77, %cst_43 {dimension_numbers = #tpu.dot_dimension_numbers<[1], [0], [0], [1], [0, 0, 1, 1], [], []>} : vector<8x64xbf16>, vector<64x32xbf16>, vector<8x32xf32> -> vector<8x32xf32>
    %c0_44 = arith.constant 0 : index
    %c0_45 = arith.constant 0 : index
    %c0_46 = arith.constant 0 : index
    %79 = vector.load %arg11[%c0_44, %c0_45, %c0_46] : memref<2x1x32xf32, #tpu.memory_space<vmem>>, vector<1x1x32xf32>
    %80 = vector.shape_cast %79 : vector<1x1x32xf32> to vector<1x32xf32>
    %81 = vector.broadcast %80 : vector<1x32xf32> to vector<8x32xf32>
    %82 = arith.addf %78, %81 : vector<8x32xf32>
    %83 = arith.addf %64, %82 : vector<8x32xf32>
    %c0_47 = arith.constant 0 : index
    %c0_48 = arith.constant 0 : index
    %c0_49 = arith.constant 0 : index
    %84 = vector.load %arg12[%c0_47, %c0_48, %c0_49] : memref<2x1x32xf32, #tpu.memory_space<vmem>>, vector<1x1x32xf32>
    %85 = vector.shape_cast %84 : vector<1x1x32xf32> to vector<1x32xf32>
    %c0_50 = arith.constant 0 : index
    %c0_51 = arith.constant 0 : index
    %c0_52 = arith.constant 0 : index
    %86 = vector.load %arg13[%c0_50, %c0_51, %c0_52] : memref<2x1x32xf32, #tpu.memory_space<vmem>>, vector<1x1x32xf32>
    %87 = vector.shape_cast %86 : vector<1x1x32xf32> to vector<1x32xf32>
    %cst_53 = arith.constant dense<0.000000e+00> : vector<8xf32>
    %88 = vector.multi_reduction <add>, %83, %cst_53 [1] : vector<8x32xf32> to vector<8xf32>
    %89 = vector.shape_cast %88 : vector<8xf32> to vector<8x1xf32>
    %cst_54 = arith.constant 3.200000e+01 : f32
    %90 = vector.broadcast %cst_54 : f32 to vector<8x1xf32>
    %91 = arith.divf %89, %90 : vector<8x1xf32>
    %92 = vector.broadcast %91 : vector<8x1xf32> to vector<8x32xf32>
    %93 = arith.subf %83, %92 : vector<8x32xf32>
    %94 = arith.mulf %93, %93 : vector<8x32xf32>
    %cst_55 = arith.constant dense<0.000000e+00> : vector<8xf32>
    %95 = vector.multi_reduction <add>, %94, %cst_55 [1] : vector<8x32xf32> to vector<8xf32>
    %96 = vector.shape_cast %95 : vector<8xf32> to vector<8x1xf32>
    %cst_56 = arith.constant 3.200000e+01 : f32
    %97 = vector.broadcast %cst_56 : f32 to vector<8x1xf32>
    %98 = arith.divf %96, %97 : vector<8x1xf32>
    %99 = vector.broadcast %91 : vector<8x1xf32> to vector<8x32xf32>
    %100 = arith.subf %83, %99 : vector<8x32xf32>
    %cst_57 = arith.constant 9.99999974E-6 : f32
    %101 = vector.broadcast %cst_57 : f32 to vector<8x1xf32>
    %102 = arith.addf %98, %101 : vector<8x1xf32>
    %103 = math.rsqrt %102 : vector<8x1xf32>
    %104 = vector.broadcast %103 : vector<8x1xf32> to vector<8x32xf32>
    %105 = arith.mulf %100, %104 : vector<8x32xf32>
    %106 = vector.broadcast %85 : vector<1x32xf32> to vector<8x32xf32>
    %107 = arith.mulf %105, %106 : vector<8x32xf32>
    %108 = vector.broadcast %87 : vector<1x32xf32> to vector<8x32xf32>
    %109 = arith.addf %107, %108 : vector<8x32xf32>
    %110 = arith.truncf %109 : vector<8x32xf32> to vector<8x32xbf16>
    %c1 = arith.constant 1 : index
    %c0_58 = arith.constant 0 : index
    %c0_59 = arith.constant 0 : index
    %111 = vector.load %arg2[%c1, %c0_58, %c0_59] : memref<2x32x96xbf16, #tpu.memory_space<vmem>>, vector<1x32x96xbf16>
    %112 = vector.shape_cast %111 : vector<1x32x96xbf16> to vector<32x96xbf16>
    %cst_60 = arith.constant dense<0.000000e+00> : vector<8x96xf32>
    %113 = tpu.matmul %110, %112, %cst_60 {dimension_numbers = #tpu.dot_dimension_numbers<[1], [0], [0], [1], [0, 0, 1, 1], [], []>} : vector<8x32xbf16>, vector<32x96xbf16>, vector<8x96xf32> -> vector<8x96xf32>
    %c1_61 = arith.constant 1 : index
    %c0_62 = arith.constant 0 : index
    %c0_63 = arith.constant 0 : index
    %114 = vector.load %arg3[%c1_61, %c0_62, %c0_63] : memref<2x1x96xf32, #tpu.memory_space<vmem>>, vector<1x1x96xf32>
    %115 = vector.shape_cast %114 : vector<1x1x96xf32> to vector<1x96xf32>
    %116 = vector.broadcast %115 : vector<1x96xf32> to vector<8x96xf32>
    %117 = arith.addf %113, %116 : vector<8x96xf32>
    %118 = vector.shape_cast %117 : vector<8x96xf32> to vector<8x12x8xf32>
    %119 = tpu.transpose %118, [1, 0, 2] : vector<8x12x8xf32> -> vector<12x8x8xf32>
    %120 = arith.truncf %119 : vector<12x8x8xf32> to vector<12x8x8xbf16>
    %121 = vector.extract_strided_slice %120 {offsets = [0, 0, 0], sizes = [4, 8, 8], strides = [1, 1, 1]} : vector<12x8x8xbf16> to vector<4x8x8xbf16>
    %122 = vector.extract_strided_slice %120 {offsets = [4, 0, 0], sizes = [4, 8, 8], strides = [1, 1, 1]} : vector<12x8x8xbf16> to vector<4x8x8xbf16>
    %123 = vector.extract_strided_slice %120 {offsets = [8, 0, 0], sizes = [4, 8, 8], strides = [1, 1, 1]} : vector<12x8x8xbf16> to vector<4x8x8xbf16>
    "tpu.trace_start"() <{level = 10 : i32, message = "hqd,hkd->hqk"}> : () -> ()
    %cst_64 = arith.constant dense<0.000000e+00> : vector<4x8x8xf32>
    %124 = tpu.matmul %121, %122, %cst_64 {dimension_numbers = #tpu.dot_dimension_numbers<[2], [2], [1], [1], [0, 0, 0, 1, 1, 1], [0], [0]>} : vector<4x8x8xbf16>, vector<4x8x8xbf16>, vector<4x8x8xf32> -> vector<4x8x8xf32>
    "tpu.trace_stop"() : () -> ()
    %cst_65 = arith.constant dense<0xFF800000> : vector<4x8xf32>
    %125 = vector.multi_reduction <maximumf>, %124, %cst_65 [2] : vector<4x8x8xf32> to vector<4x8xf32>
    %126 = vector.shape_cast %125 : vector<4x8xf32> to vector<4x8x1xf32>
    %127 = vector.broadcast %126 : vector<4x8x1xf32> to vector<4x8x8xf32>
    %128 = arith.subf %124, %127 : vector<4x8x8xf32>
    %129 = math.exp %128 : vector<4x8x8xf32>
    %cst_66 = arith.constant dense<0.000000e+00> : vector<4x8xf32>
    %130 = vector.multi_reduction <add>, %129, %cst_66 [2] : vector<4x8x8xf32> to vector<4x8xf32>
    %131 = vector.shape_cast %130 : vector<4x8xf32> to vector<4x8x1xf32>
    %132 = tpu.reciprocal %131 {approx = true} : vector<4x8x1xf32> -> vector<4x8x1xf32>
    %133 = vector.broadcast %132 : vector<4x8x1xf32> to vector<4x8x8xf32>
    %134 = arith.mulf %129, %133 : vector<4x8x8xf32>
    %135 = arith.truncf %134 : vector<4x8x8xf32> to vector<4x8x8xbf16>
    "tpu.trace_start"() <{level = 10 : i32, message = "hqk,hkd->hqd"}> : () -> ()
    %cst_67 = arith.constant dense<0.000000e+00> : vector<4x8x8xf32>
    %136 = tpu.matmul %135, %123, %cst_67 {dimension_numbers = #tpu.dot_dimension_numbers<[2], [1], [1], [2], [0, 0, 0, 1, 1, 2], [0], [0]>} : vector<4x8x8xbf16>, vector<4x8x8xbf16>, vector<4x8x8xf32> -> vector<4x8x8xf32>
    "tpu.trace_stop"() : () -> ()
    %137 = arith.truncf %136 : vector<4x8x8xf32> to vector<4x8x8xbf16>
    %c1_68 = arith.constant 1 : index
    %c0_69 = arith.constant 0 : index
    %c0_70 = arith.constant 0 : index
    %c0_71 = arith.constant 0 : index
    %138 = vector.load %arg4[%c1_68, %c0_69, %c0_70, %c0_71] : memref<2x4x8x32xbf16, #tpu.memory_space<vmem>>, vector<1x4x8x32xbf16>
    %139 = vector.shape_cast %138 : vector<1x4x8x32xbf16> to vector<4x8x32xbf16>
    "tpu.trace_start"() <{level = 10 : i32, message = "hqd,hde->hqe"}> : () -> ()
    %cst_72 = arith.constant dense<0.000000e+00> : vector<4x8x32xf32>
    %140 = tpu.matmul %137, %139, %cst_72 {dimension_numbers = #tpu.dot_dimension_numbers<[2], [1], [1], [2], [0, 0, 0, 1, 1, 2], [0], [0]>} : vector<4x8x8xbf16>, vector<4x8x32xbf16>, vector<4x8x32xf32> -> vector<4x8x32xf32>
    "tpu.trace_stop"() : () -> ()
    %cst_73 = arith.constant dense<0.000000e+00> : vector<8x32xf32>
    %141 = vector.multi_reduction <add>, %140, %cst_73 [0] : vector<4x8x32xf32> to vector<8x32xf32>
    %c1_74 = arith.constant 1 : index
    %c0_75 = arith.constant 0 : index
    %c0_76 = arith.constant 0 : index
    %142 = vector.load %arg5[%c1_74, %c0_75, %c0_76] : memref<2x1x32xf32, #tpu.memory_space<vmem>>, vector<1x1x32xf32>
    %143 = vector.shape_cast %142 : vector<1x1x32xf32> to vector<1x32xf32>
    %144 = vector.broadcast %143 : vector<1x32xf32> to vector<8x32xf32>
    %145 = arith.addf %141, %144 : vector<8x32xf32>
    %146 = arith.addf %109, %145 : vector<8x32xf32>
    %c1_77 = arith.constant 1 : index
    %c0_78 = arith.constant 0 : index
    %c0_79 = arith.constant 0 : index
    %147 = vector.load %arg6[%c1_77, %c0_78, %c0_79] : memref<2x1x32xf32, #tpu.memory_space<vmem>>, vector<1x1x32xf32>
    %148 = vector.shape_cast %147 : vector<1x1x32xf32> to vector<1x32xf32>
    %c1_80 = arith.constant 1 : index
    %c0_81 = arith.constant 0 : index
    %c0_82 = arith.constant 0 : index
    %149 = vector.load %arg7[%c1_80, %c0_81, %c0_82] : memref<2x1x32xf32, #tpu.memory_space<vmem>>, vector<1x1x32xf32>
    %150 = vector.shape_cast %149 : vector<1x1x32xf32> to vector<1x32xf32>
    %cst_83 = arith.constant dense<0.000000e+00> : vector<8xf32>
    %151 = vector.multi_reduction <add>, %146, %cst_83 [1] : vector<8x32xf32> to vector<8xf32>
    %152 = vector.shape_cast %151 : vector<8xf32> to vector<8x1xf32>
    %cst_84 = arith.constant 3.200000e+01 : f32
    %153 = vector.broadcast %cst_84 : f32 to vector<8x1xf32>
    %154 = arith.divf %152, %153 : vector<8x1xf32>
    %155 = vector.broadcast %154 : vector<8x1xf32> to vector<8x32xf32>
    %156 = arith.subf %146, %155 : vector<8x32xf32>
    %157 = arith.mulf %156, %156 : vector<8x32xf32>
    %cst_85 = arith.constant dense<0.000000e+00> : vector<8xf32>
    %158 = vector.multi_reduction <add>, %157, %cst_85 [1] : vector<8x32xf32> to vector<8xf32>
    %159 = vector.shape_cast %158 : vector<8xf32> to vector<8x1xf32>
    %cst_86 = arith.constant 3.200000e+01 : f32
    %160 = vector.broadcast %cst_86 : f32 to vector<8x1xf32>
    %161 = arith.divf %159, %160 : vector<8x1xf32>
    %162 = vector.broadcast %154 : vector<8x1xf32> to vector<8x32xf32>
    %163 = arith.subf %146, %162 : vector<8x32xf32>
    %cst_87 = arith.constant 9.99999974E-6 : f32
    %164 = vector.broadcast %cst_87 : f32 to vector<8x1xf32>
    %165 = arith.addf %161, %164 : vector<8x1xf32>
    %166 = math.rsqrt %165 : vector<8x1xf32>
    %167 = vector.broadcast %166 : vector<8x1xf32> to vector<8x32xf32>
    %168 = arith.mulf %163, %167 : vector<8x32xf32>
    %169 = vector.broadcast %148 : vector<1x32xf32> to vector<8x32xf32>
    %170 = arith.mulf %168, %169 : vector<8x32xf32>
    %171 = vector.broadcast %150 : vector<1x32xf32> to vector<8x32xf32>
    %172 = arith.addf %170, %171 : vector<8x32xf32>
    %173 = arith.truncf %172 : vector<8x32xf32> to vector<8x32xbf16>
    %c1_88 = arith.constant 1 : index
    %c0_89 = arith.constant 0 : index
    %c0_90 = arith.constant 0 : index
    %174 = vector.load %arg8[%c1_88, %c0_89, %c0_90] : memref<2x32x64xbf16, #tpu.memory_space<vmem>>, vector<1x32x64xbf16>
    %175 = vector.shape_cast %174 : vector<1x32x64xbf16> to vector<32x64xbf16>
    %cst_91 = arith.constant dense<0.000000e+00> : vector<8x64xf32>
    %176 = tpu.matmul %173, %175, %cst_91 {dimension_numbers = #tpu.dot_dimension_numbers<[1], [0], [0], [1], [0, 0, 1, 1], [], []>} : vector<8x32xbf16>, vector<32x64xbf16>, vector<8x64xf32> -> vector<8x64xf32>
    %c1_92 = arith.constant 1 : index
    %c0_93 = arith.constant 0 : index
    %c0_94 = arith.constant 0 : index
    %177 = vector.load %arg9[%c1_92, %c0_93, %c0_94] : memref<2x1x64xf32, #tpu.memory_space<vmem>>, vector<1x1x64xf32>
    %178 = vector.shape_cast %177 : vector<1x1x64xf32> to vector<1x64xf32>
    %179 = vector.broadcast %178 : vector<1x64xf32> to vector<8x64xf32>
    %180 = arith.addf %176, %179 : vector<8x64xf32>
    %cst_95 = arith.constant 0.000000e+00 : f32
    %181 = vector.broadcast %cst_95 : f32 to vector<8x64xf32>
    %182 = arith.maximumf %180, %181 : vector<8x64xf32>
    %183 = arith.truncf %182 : vector<8x64xf32> to vector<8x64xbf16>
    %c1_96 = arith.constant 1 : index
    %c0_97 = arith.constant 0 : index
    %c0_98 = arith.constant 0 : index
    %184 = vector.load %arg10[%c1_96, %c0_97, %c0_98] : memref<2x64x32xbf16, #tpu.memory_space<vmem>>, vector<1x64x32xbf16>
    %185 = vector.shape_cast %184 : vector<1x64x32xbf16> to vector<64x32xbf16>
    %cst_99 = arith.constant dense<0.000000e+00> : vector<8x32xf32>
    %186 = tpu.matmul %183, %185, %cst_99 {dimension_numbers = #tpu.dot_dimension_numbers<[1], [0], [0], [1], [0, 0, 1, 1], [], []>} : vector<8x64xbf16>, vector<64x32xbf16>, vector<8x32xf32> -> vector<8x32xf32>
    %c1_100 = arith.constant 1 : index
    %c0_101 = arith.constant 0 : index
    %c0_102 = arith.constant 0 : index
    %187 = vector.load %arg11[%c1_100, %c0_101, %c0_102] : memref<2x1x32xf32, #tpu.memory_space<vmem>>, vector<1x1x32xf32>
    %188 = vector.shape_cast %187 : vector<1x1x32xf32> to vector<1x32xf32>
    %189 = vector.broadcast %188 : vector<1x32xf32> to vector<8x32xf32>
    %190 = arith.addf %186, %189 : vector<8x32xf32>
    %191 = arith.addf %172, %190 : vector<8x32xf32>
    %c1_103 = arith.constant 1 : index
    %c0_104 = arith.constant 0 : index
    %c0_105 = arith.constant 0 : index
    %192 = vector.load %arg12[%c1_103, %c0_104, %c0_105] : memref<2x1x32xf32, #tpu.memory_space<vmem>>, vector<1x1x32xf32>
    %193 = vector.shape_cast %192 : vector<1x1x32xf32> to vector<1x32xf32>
    %c1_106 = arith.constant 1 : index
    %c0_107 = arith.constant 0 : index
    %c0_108 = arith.constant 0 : index
    %194 = vector.load %arg13[%c1_106, %c0_107, %c0_108] : memref<2x1x32xf32, #tpu.memory_space<vmem>>, vector<1x1x32xf32>
    %195 = vector.shape_cast %194 : vector<1x1x32xf32> to vector<1x32xf32>
    %cst_109 = arith.constant dense<0.000000e+00> : vector<8xf32>
    %196 = vector.multi_reduction <add>, %191, %cst_109 [1] : vector<8x32xf32> to vector<8xf32>
    %197 = vector.shape_cast %196 : vector<8xf32> to vector<8x1xf32>
    %cst_110 = arith.constant 3.200000e+01 : f32
    %198 = vector.broadcast %cst_110 : f32 to vector<8x1xf32>
    %199 = arith.divf %197, %198 : vector<8x1xf32>
    %200 = vector.broadcast %199 : vector<8x1xf32> to vector<8x32xf32>
    %201 = arith.subf %191, %200 : vector<8x32xf32>
    %202 = arith.mulf %201, %201 : vector<8x32xf32>
    %cst_111 = arith.constant dense<0.000000e+00> : vector<8xf32>
    %203 = vector.multi_reduction <add>, %202, %cst_111 [1] : vector<8x32xf32> to vector<8xf32>
    %204 = vector.shape_cast %203 : vector<8xf32> to vector<8x1xf32>
    %cst_112 = arith.constant 3.200000e+01 : f32
    %205 = vector.broadcast %cst_112 : f32 to vector<8x1xf32>
    %206 = arith.divf %204, %205 : vector<8x1xf32>
    %207 = vector.broadcast %199 : vector<8x1xf32> to vector<8x32xf32>
    %208 = arith.subf %191, %207 : vector<8x32xf32>
    %cst_113 = arith.constant 9.99999974E-6 : f32
    %209 = vector.broadcast %cst_113 : f32 to vector<8x1xf32>
    %210 = arith.addf %206, %209 : vector<8x1xf32>
    %211 = math.rsqrt %210 : vector<8x1xf32>
    %212 = vector.broadcast %211 : vector<8x1xf32> to vector<8x32xf32>
    %213 = arith.mulf %208, %212 : vector<8x32xf32>
    %214 = vector.broadcast %193 : vector<1x32xf32> to vector<8x32xf32>
    %215 = arith.mulf %213, %214 : vector<8x32xf32>
    %216 = vector.broadcast %195 : vector<1x32xf32> to vector<8x32xf32>
    %217 = arith.addf %215, %216 : vector<8x32xf32>
    %c0_114 = arith.constant 0 : index
    %c0_115 = arith.constant 0 : index
    %c0_116 = arith.constant 0 : index
    %218 = vector.load %arg14[%c0_114, %c0_115, %c0_116] : memref<1x8x32xf32, #tpu.memory_space<vmem>>, vector<1x8x32xf32>
    %219 = vector.shape_cast %218 : vector<1x8x32xf32> to vector<8x32xf32>
    %220 = vector.shape_cast %217 : vector<8x32xf32> to vector<1x8x32xf32>
    tpu.vector_store %arg14[%c0_114, %c0_115, %c0_116], %220 {strides = array<i32>} : memref<1x8x32xf32, #tpu.memory_space<vmem>>, vector<1x8x32xf32>,
    return
  }
  func.func @transform_0(%arg0: i32) -> (i32, i32, i32) {
    %c0_i32 = arith.constant 0 : i32
    %c0_i32_0 = arith.constant 0 : i32
    %c0_i32_1 = arith.constant 0 : i32
    return %arg0, %c0_i32, %c0_i32_0 : i32, i32, i32
  }
  func.func @transform_1(%arg0: i32) -> (i32, i32, i32) {
    %c0_i32 = arith.constant 0 : i32
    %c0_i32_0 = arith.constant 0 : i32
    %c0_i32_1 = arith.constant 0 : i32
    %c0_i32_2 = arith.constant 0 : i32
    return %c0_i32, %c0_i32_0, %c0_i32_1 : i32, i32, i32
  }
  func.func @transform_2(%arg0: i32) -> (i32, i32, i32) {
    %c0_i32 = arith.constant 0 : i32
    %c0_i32_0 = arith.constant 0 : i32
    %c0_i32_1 = arith.constant 0 : i32
    %c0_i32_2 = arith.constant 0 : i32
    return %c0_i32, %c0_i32_0, %c0_i32_1 : i32, i32, i32
  }
  func.func @transform_3(%arg0: i32) -> (i32, i32, i32, i32) {
    %c0_i32 = arith.constant 0 : i32
    %c0_i32_0 = arith.constant 0 : i32
    %c0_i32_1 = arith.constant 0 : i32
    %c0_i32_2 = arith.constant 0 : i32
    %c0_i32_3 = arith.constant 0 : i32
    return %c0_i32, %c0_i32_0, %c0_i32_1, %c0_i32_2 : i32, i32, i32, i32
  }
  func.func @transform_4(%arg0: i32) -> (i32, i32, i32) {
    %c0_i32 = arith.constant 0 : i32
    %c0_i32_0 = arith.constant 0 : i32
    %c0_i32_1 = arith.constant 0 : i32
    %c0_i32_2 = arith.constant 0 : i32
    return %c0_i32, %c0_i32_0, %c0_i32_1 : i32, i32, i32
  }
  func.func @transform_5(%arg0: i32) -> (i32, i32, i32) {
    %c0_i32 = arith.constant 0 : i32
    %c0_i32_0 = arith.constant 0 : i32
    %c0_i32_1 = arith.constant 0 : i32
    %c0_i32_2 = arith.constant 0 : i32
    return %c0_i32, %c0_i32_0, %c0_i32_1 : i32, i32, i32
  }
  func.func @transform_6(%arg0: i32) -> (i32, i32, i32) {
    %c0_i32 = arith.constant 0 : i32
    %c0_i32_0 = arith.constant 0 : i32
    %c0_i32_1 = arith.constant 0 : i32
    %c0_i32_2 = arith.constant 0 : i32
    return %c0_i32, %c0_i32_0, %c0_i32_1 : i32, i32, i32
  }
  func.func @transform_7(%arg0: i32) -> (i32, i32, i32) {
    %c0_i32 = arith.constant 0 : i32
    %c0_i32_0 = arith.constant 0 : i32
    %c0_i32_1 = arith.constant 0 : i32
    %c0_i32_2 = arith.constant 0 : i32
    return %c0_i32, %c0_i32_0, %c0_i32_1 : i32, i32, i32
  }
  func.func @transform_8(%arg0: i32) -> (i32, i32, i32) {
    %c0_i32 = arith.constant 0 : i32
    %c0_i32_0 = arith.constant 0 : i32
    %c0_i32_1 = arith.constant 0 : i32
    %c0_i32_2 = arith.constant 0 : i32
    return %c0_i32, %c0_i32_0, %c0_i32_1 : i32, i32, i32
  }
  func.func @transform_9(%arg0: i32) -> (i32, i32, i32) {
    %c0_i32 = arith.constant 0 : i32
    %c0_i32_0 = arith.constant 0 : i32
    %c0_i32_1 = arith.constant 0 : i32
    %c0_i32_2 = arith.constant 0 : i32
    return %c0_i32, %c0_i32_0, %c0_i32_1 : i32, i32, i32
  }
  func.func @transform_10(%arg0: i32) -> (i32, i32, i32) {
    %c0_i32 = arith.constant 0 : i32
    %c0_i32_0 = arith.constant 0 : i32
    %c0_i32_1 = arith.constant 0 : i32
    %c0_i32_2 = arith.constant 0 : i32
    return %c0_i32, %c0_i32_0, %c0_i32_1 : i32, i32, i32
  }
  func.func @transform_11(%arg0: i32) -> (i32, i32, i32) {
    %c0_i32 = arith.constant 0 : i32
    %c0_i32_0 = arith.constant 0 : i32
    %c0_i32_1 = arith.constant 0 : i32
    %c0_i32_2 = arith.constant 0 : i32
    return %c0_i32, %c0_i32_0, %c0_i32_1 : i32, i32, i32
  }
  func.func @transform_12(%arg0: i32) -> (i32, i32, i32) {
    %c0_i32 = arith.constant 0 : i32
    %c0_i32_0 = arith.constant 0 : i32
    %c0_i32_1 = arith.constant 0 : i32
    %c0_i32_2 = arith.constant 0 : i32
    return %c0_i32, %c0_i32_0, %c0_i32_1 : i32, i32, i32
  }
  func.func @transform_13(%arg0: i32) -> (i32, i32, i32) {
    %c0_i32 = arith.constant 0 : i32
    %c0_i32_0 = arith.constant 0 : i32
    %c0_i32_1 = arith.constant 0 : i32
    return %arg0, %c0_i32, %c0_i32_0 : i32, i32, i32
  }
}

</mosaic_0001>

<llo_original>
// kernel: tpu_custom_call.1
$region0: #{tpu_custom_call.1}
  #allocation0 [shape = 'u32[]', space=smem, size = 0x4, offset = 0x4, fixed_abs, tag = 'smem constant byte address 0x4 - core index']
  #allocation1 [shape = 'u32[144,128]{1,0:T(1,128)}', space=vmem, size = 0x12000, scoped, tag = 'internal scratch']
  %s0 = inlined_call_operand.hbm [shape: f32[2,8,32], index: 0, kind: input, shape index: {}]
  %s1 = inlined_call_operand.vmem [shape: bf16[2,32,96], index: 1, kind: input, shape index: {}]
  %s2 = inlined_call_operand.vmem [shape: f32[2,1,96], index: 2, kind: input, shape index: {}]
  %s3 = inlined_call_operand.vmem [shape: bf16[2,4,8,32], index: 3, kind: input, shape index: {}]
  %s4 = inlined_call_operand.vmem [shape: f32[2,1,32], index: 4, kind: input, shape index: {}]
  %s5 = inlined_call_operand.vmem [shape: f32[2,1,32], index: 5, kind: input, shape index: {}]
  %s6 = inlined_call_operand.vmem [shape: f32[2,1,32], index: 6, kind: input, shape index: {}]
  %s7 = inlined_call_operand.vmem [shape: bf16[2,32,64], index: 7, kind: input, shape index: {}]
  %s8 = inlined_call_operand.vmem [shape: f32[2,1,64], index: 8, kind: input, shape index: {}]
  %s9 = inlined_call_operand.vmem [shape: bf16[2,64,32], index: 9, kind: input, shape index: {}]
  %s10 = inlined_call_operand.vmem [shape: f32[2,1,32], index: 10, kind: input, shape index: {}]
  %s11 = inlined_call_operand.vmem [shape: f32[2,1,32], index: 11, kind: input, shape index: {}]
  %s12 = inlined_call_operand.vmem [shape: f32[2,1,32], index: 12, kind: input, shape index: {}]
  %s13 = inlined_call_operand.hbm [shape: f32[2,8,32], index: 13, kind: output, shape index: {}]
  %s14 = sld [smem:[#allocation0]]
  $region89: #{tpu_custom_call.1} parent=0
    _
  %s16 = ssub.s32 1, %s14
  %s17 = scalar_select 0, %s16, %s14
  $region1: #{tpu_custom_call.1} parent=0
    #allocation2 [shape = 'u8[8192]{0}', space=vmem, size = 0x2000, scoped, tag = 'input window, operand 0']
    #allocation3 [shape = 's32[2]{0}', space=sflag, size = 0x8, scoped, tag = 'scoped memory for tpu_custom_call.1']
    #allocation4 [shape = 's32[2]{0}', space=sflag, size = 0x8, scoped, tag = 'scoped memory for tpu_custom_call.1']
    #allocation5 [shape = 'u8[8192]{0}', space=vmem, size = 0x2000, scoped, tag = 'output window, operand 0']
    %18 = vsyncpa [#allocation3], 0
    %s19 = scalar_lea.sflag [#allocation3], 1
    %20 = vsyncpa %s19, 0
    %21 = vsyncpa [#allocation4], 0
    %s22 = scalar_lea.sflag [#allocation4], 1
    %23 = vsyncpa %s22, 0
    loop: start=0, step=1, limit=4
    $region2: #{tpu_custom_call.1} parent=1 // loop_pre_header
      _
    $region3: #{tpu_custom_call.1} parent=1 // loop_header
      %s25 = sphi 0, %s29
      %p26 = scmp.ge.s32.totalorder %s25, 4
      %s35 = sphi 0, %s37
      %s38 = sphi 0, %s35
      %s39 = sphi 0, %s38
      %s55 = sphi 0, %s39
      %s59 = sphi 0, %s59
      %s61 = sphi 0, %s59
      %s62 = sphi 0, %s61
      %s76 = sphi 0, %s62
      %s80 = sphi 0, %s80
      %s82 = sphi 0, %s80
      %s83 = sphi 0, %s82
      %s97 = sphi 0, %s83
      %s101 = sphi 0, %s101
      %s103 = sphi 0, %s101
      %s104 = sphi 0, %s103
      %s118 = sphi 0, %s104
      %s122 = sphi 0, %s122
      %s124 = sphi 0, %s122
      %s125 = sphi 0, %s124
      %s139 = sphi 0, %s125
      %s143 = sphi 0, %s143
      %s145 = sphi 0, %s143
      %s146 = sphi 0, %s145
      %s160 = sphi 0, %s146
      %s164 = sphi 0, %s164
      %s166 = sphi 0, %s164
      %s167 = sphi 0, %s166
      %s181 = sphi 0, %s167
      %s185 = sphi 0, %s185
      %s187 = sphi 0, %s185
      %s188 = sphi 0, %s187
      %s202 = sphi 0, %s188
      %s206 = sphi 0, %s206
      %s208 = sphi 0, %s206
      %s209 = sphi 0, %s208
      %s223 = sphi 0, %s209
      %s227 = sphi 0, %s227
      %s229 = sphi 0, %s227
      %s230 = sphi 0, %s229
      %s244 = sphi 0, %s230
      %s248 = sphi 0, %s248
      %s250 = sphi 0, %s248
      %s251 = sphi 0, %s250
      %s265 = sphi 0, %s251
      %s269 = sphi 0, %s269
      %s271 = sphi 0, %s269
      %s272 = sphi 0, %s271
      %s286 = sphi 0, %s272
      %s290 = sphi 0, %s290
      %s292 = sphi 0, %s290
      %s293 = sphi 0, %s292
      %s307 = sphi 0, %s293
      %s313 = sphi 0, %s315
      %s316 = sphi 0, %s313
      %s317 = sphi 0, %s316
      %s333 = sphi 0, %s317
    $region4: #{tpu_custom_call.1} parent=1 // loop_header_branch
      %28 = sbr.rel (%p26) target = $region8
    $region5: #{tpu_custom_call.1} parent=1 // loop_body
      %s30 = ssub.s32 %s25, 1
      %s31 = ssub.s32 %s25, 2
      %s32 = sadd.s32 %s25, 1
      %s33 = ssub.s32 %s25, %s32
      %p34 = scmp.eq.s32.totalorder %s33, 0
      %s36 = sadd.s32 %s35, 1
      %s37 = scalar_select %p34, %s35, %s36
      %p40 = pneg %p34
      %p41 = scmp.eq.s32.totalorder %s25, 1
      %p42 = por %p40, %p41
      %p43 = scmp.ne.s32.totalorder %s35, %s38
      %p44 = scmp.eq.s32.totalorder %s25, 0
      %p45 = por %p43, %p44
      %p46 = scmp.ne.s32.totalorder %s35, %s38
      %p47 = scmp.eq.s32.totalorder %s30, 1
      %p48 = por %p46, %p47
      %p49 = scmp.ne.s32.totalorder %s38, %s39
      %p50 = scmp.eq.s32.totalorder %s30, 0
      %p51 = por %p49, %p50
      %p52 = scmp.ne.s32.totalorder %s38, %s39
      %p53 = scmp.eq.s32.totalorder %s31, 1
      %p54 = por %p52, %p53
      %p56 = scmp.ne.s32.totalorder %s39, %s55
      %p57 = scmp.eq.s32.totalorder %s31, 0
      %p58 = por %p56, %p57
      %s60 = sadd.s32 %s59, 1
      %p63 = scmp.eq.s32.totalorder %s25, 1
      %p64 = scmp.ne.s32.totalorder %s59, %s61
      %p65 = scmp.eq.s32.totalorder %s25, 0
      %p66 = por %p64, %p65
      %p67 = scmp.ne.s32.totalorder %s59, %s61
      %p68 = scmp.eq.s32.totalorder %s30, 1
      %p69 = por %p67, %p68
      %p70 = scmp.ne.s32.totalorder %s61, %s62
      %p71 = scmp.eq.s32.totalorder %s30, 0
      %p72 = por %p70, %p71
      %p73 = scmp.ne.s32.totalorder %s61, %s62
      %p74 = scmp.eq.s32.totalorder %s31, 1
      %p75 = por %p73, %p74
      %p77 = scmp.ne.s32.totalorder %s62, %s76
      %p78 = scmp.eq.s32.totalorder %s31, 0
      %p79 = por %p77, %p78
      %s81 = sadd.s32 %s80, 1
      %p84 = scmp.eq.s32.totalorder %s25, 1
      %p85 = scmp.ne.s32.totalorder %s80, %s82
      %p86 = scmp.eq.s32.totalorder %s25, 0
      %p87 = por %p85, %p86
      %p88 = scmp.ne.s32.totalorder %s80, %s82
      %p89 = scmp.eq.s32.totalorder %s30, 1
      %p90 = por %p88, %p89
      %p91 = scmp.ne.s32.totalorder %s82, %s83
      %p92 = scmp.eq.s32.totalorder %s30, 0
      %p93 = por %p91, %p92
      %p94 = scmp.ne.s32.totalorder %s82, %s83
      %p95 = scmp.eq.s32.totalorder %s31, 1
      %p96 = por %p94, %p95
      %p98 = scmp.ne.s32.totalorder %s83, %s97
      %p99 = scmp.eq.s32.totalorder %s31, 0
      %p100 = por %p98, %p99
      %s102 = sadd.s32 %s101, 1
      %p105 = scmp.eq.s32.totalorder %s25, 1
      %p106 = scmp.ne.s32.totalorder %s101, %s103
      %p107 = scmp.eq.s32.totalorder %s25, 0
      %p108 = por %p106, %p107
      %p109 = scmp.ne.s32.totalorder %s101, %s103
      %p110 = scmp.eq.s32.totalorder %s30, 1
      %p111 = por %p109, %p110
      %p112 = scmp.ne.s32.totalorder %s103, %s104
      %p113 = scmp.eq.s32.totalorder %s30, 0
      %p114 = por %p112, %p113
      %p115 = scmp.ne.s32.totalorder %s103, %s104
      %p116 = scmp.eq.s32.totalorder %s31, 1
      %p117 = por %p115, %p116
      %p119 = scmp.ne.s32.totalorder %s104, %s118
      %p120 = scmp.eq.s32.totalorder %s31, 0
      %p121 = por %p119, %p120
      %s123 = sadd.s32 %s122, 1
      %p126 = scmp.eq.s32.totalorder %s25, 1
      %p127 = scmp.ne.s32.totalorder %s122, %s124
      %p128 = scmp.eq.s32.totalorder %s25, 0
      %p129 = por %p127, %p128
      %p130 = scmp.ne.s32.totalorder %s122, %s124
      %p131 = scmp.eq.s32.totalorder %s30, 1
      %p132 = por %p130, %p131
      %p133 = scmp.ne.s32.totalorder %s124, %s125
      %p134 = scmp.eq.s32.totalorder %s30, 0
      %p135 = por %p133, %p134
      %p136 = scmp.ne.s32.totalorder %s124, %s125
      %p137 = scmp.eq.s32.totalorder %s31, 1
      %p138 = por %p136, %p137
      %p140 = scmp.ne.s32.totalorder %s125, %s139
      %p141 = scmp.eq.s32.totalorder %s31, 0
      %p142 = por %p140, %p141
      %s144 = sadd.s32 %s143, 1
      %p147 = scmp.eq.s32.totalorder %s25, 1
      %p148 = scmp.ne.s32.totalorder %s143, %s145
      %p149 = scmp.eq.s32.totalorder %s25, 0
      %p150 = por %p148, %p149
      %p151 = scmp.ne.s32.totalorder %s143, %s145
      %p152 = scmp.eq.s32.totalorder %s30, 1
      %p153 = por %p151, %p152
      %p154 = scmp.ne.s32.totalorder %s145, %s146
      %p155 = scmp.eq.s32.totalorder %s30, 0
      %p156 = por %p154, %p155
      %p157 = scmp.ne.s32.totalorder %s145, %s146
      %p158 = scmp.eq.s32.totalorder %s31, 1
      %p159 = por %p157, %p158
      %p161 = scmp.ne.s32.totalorder %s146, %s160
      %p162 = scmp.eq.s32.totalorder %s31, 0
      %p163 = por %p161, %p162
      %s165 = sadd.s32 %s164, 1
      %p168 = scmp.eq.s32.totalorder %s25, 1
      %p169 = scmp.ne.s32.totalorder %s164, %s166
      %p170 = scmp.eq.s32.totalorder %s25, 0
      %p171 = por %p169, %p170
      %p172 = scmp.ne.s32.totalorder %s164, %s166
      %p173 = scmp.eq.s32.totalorder %s30, 1
      %p174 = por %p172, %p173
      %p175 = scmp.ne.s32.totalorder %s166, %s167
      %p176 = scmp.eq.s32.totalorder %s30, 0
      %p177 = por %p175, %p176
      %p178 = scmp.ne.s32.totalorder %s166, %s167
      %p179 = scmp.eq.s32.totalorder %s31, 1
      %p180 = por %p178, %p179
      %p182 = scmp.ne.s32.totalorder %s167, %s181
      %p183 = scmp.eq.s32.totalorder %s31, 0
      %p184 = por %p182, %p183
      %s186 = sadd.s32 %s185, 1
      %p189 = scmp.eq.s32.totalorder %s25, 1
      %p190 = scmp.ne.s32.totalorder %s185, %s187
      %p191 = scmp.eq.s32.totalorder %s25, 0
      %p192 = por %p190, %p191
      %p193 = scmp.ne.s32.totalorder %s185, %s187
      %p194 = scmp.eq.s32.totalorder %s30, 1
      %p195 = por %p193, %p194
      %p196 = scmp.ne.s32.totalorder %s187, %s188
      %p197 = scmp.eq.s32.totalorder %s30, 0
      %p198 = por %p196, %p197
      %p199 = scmp.ne.s32.totalorder %s187, %s188
      %p200 = scmp.eq.s32.totalorder %s31, 1
      %p201 = por %p199, %p200
      %p203 = scmp.ne.s32.totalorder %s188, %s202
      %p204 = scmp.eq.s32.totalorder %s31, 0
      %p205 = por %p203, %p204
      %s207 = sadd.s32 %s206, 1
      %p210 = scmp.eq.s32.totalorder %s25, 1
      %p211 = scmp.ne.s32.totalorder %s206, %s208
      %p212 = scmp.eq.s32.totalorder %s25, 0
      %p213 = por %p211, %p212
      %p214 = scmp.ne.s32.totalorder %s206, %s208
      %p215 = scmp.eq.s32.totalorder %s30, 1
      %p216 = por %p214, %p215
      %p217 = scmp.ne.s32.totalorder %s208, %s209
      %p218 = scmp.eq.s32.totalorder %s30, 0
      %p219 = por %p217, %p218
      %p220 = scmp.ne.s32.totalorder %s208, %s209
      %p221 = scmp.eq.s32.totalorder %s31, 1
      %p222 = por %p220, %p221
      %p224 = scmp.ne.s32.totalorder %s209, %s223
      %p225 = scmp.eq.s32.totalorder %s31, 0
      %p226 = por %p224, %p225
      %s228 = sadd.s32 %s227, 1
      %p231 = scmp.eq.s32.totalorder %s25, 1
      %p232 = scmp.ne.s32.totalorder %s227, %s229
      %p233 = scmp.eq.s32.totalorder %s25, 0
      %p234 = por %p232, %p233
      %p235 = scmp.ne.s32.totalorder %s227, %s229
      %p236 = scmp.eq.s32.totalorder %s30, 1
      %p237 = por %p235, %p236
      %p238 = scmp.ne.s32.totalorder %s229, %s230
      %p239 = scmp.eq.s32.totalorder %s30, 0
      %p240 = por %p238, %p239
      %p241 = scmp.ne.s32.totalorder %s229, %s230
      %p242 = scmp.eq.s32.totalorder %s31, 1
      %p243 = por %p241, %p242
      %p245 = scmp.ne.s32.totalorder %s230, %s244
      %p246 = scmp.eq.s32.totalorder %s31, 0
      %p247 = por %p245, %p246
      %s249 = sadd.s32 %s248, 1
      %p252 = scmp.eq.s32.totalorder %s25, 1
      %p253 = scmp.ne.s32.totalorder %s248, %s250
      %p254 = scmp.eq.s32.totalorder %s25, 0
      %p255 = por %p253, %p254
      %p256 = scmp.ne.s32.totalorder %s248, %s250
      %p257 = scmp.eq.s32.totalorder %s30, 1
      %p258 = por %p256, %p257
      %p259 = scmp.ne.s32.totalorder %s250, %s251
      %p260 = scmp.eq.s32.totalorder %s30, 0
      %p261 = por %p259, %p260
      %p262 = scmp.ne.s32.totalorder %s250, %s251
      %p263 = scmp.eq.s32.totalorder %s31, 1
      %p264 = por %p262, %p263
      %p266 = scmp.ne.s32.totalorder %s251, %s265
      %p267 = scmp.eq.s32.totalorder %s31, 0
      %p268 = por %p266, %p267
      %s270 = sadd.s32 %s269, 1
      %p273 = scmp.eq.s32.totalorder %s25, 1
      %p274 = scmp.ne.s32.totalorder %s269, %s271
      %p275 = scmp.eq.s32.totalorder %s25, 0
      %p276 = por %p274, %p275
      %p277 = scmp.ne.s32.totalorder %s269, %s271
      %p278 = scmp.eq.s32.totalorder %s30, 1
      %p279 = por %p277, %p278
      %p280 = scmp.ne.s32.totalorder %s271, %s272
      %p281 = scmp.eq.s32.totalorder %s30, 0
      %p282 = por %p280, %p281
      %p283 = scmp.ne.s32.totalorder %s271, %s272
      %p284 = scmp.eq.s32.totalorder %s31, 1
      %p285 = por %p283, %p284
      %p287 = scmp.ne.s32.totalorder %s272, %s286
      %p288 = scmp.eq.s32.totalorder %s31, 0
      %p289 = por %p287, %p288
      %s291 = sadd.s32 %s290, 1
      %p294 = scmp.eq.s32.totalorder %s25, 1
      %p295 = scmp.ne.s32.totalorder %s290, %s292
      %p296 = scmp.eq.s32.totalorder %s25, 0
      %p297 = por %p295, %p296
      %p298 = scmp.ne.s32.totalorder %s290, %s292
      %p299 = scmp.eq.s32.totalorder %s30, 1
      %p300 = por %p298, %p299
      %p301 = scmp.ne.s32.totalorder %s292, %s293
      %p302 = scmp.eq.s32.totalorder %s30, 0
      %p303 = por %p301, %p302
      %p304 = scmp.ne.s32.totalorder %s292, %s293
      %p305 = scmp.eq.s32.totalorder %s31, 1
      %p306 = por %p304, %p305
      %p308 = scmp.ne.s32.totalorder %s293, %s307
      %p309 = scmp.eq.s32.totalorder %s31, 0
      %p310 = por %p308, %p309
      %s311 = ssub.s32 %s25, %s32
      %p312 = scmp.eq.s32.totalorder %s311, 0
      %s314 = sadd.s32 %s313, 1
      %s315 = scalar_select %p312, %s313, %s314
      %p318 = pneg %p312
      %p319 = scmp.eq.s32.totalorder %s25, 1
      %p320 = por %p318, %p319
      %p321 = scmp.ne.s32.totalorder %s313, %s316
      %p322 = scmp.eq.s32.totalorder %s25, 0
      %p323 = por %p321, %p322
      %p324 = scmp.ne.s32.totalorder %s313, %s316
      %p325 = scmp.eq.s32.totalorder %s30, 1
      %p326 = por %p324, %p325
      %p327 = scmp.ne.s32.totalorder %s316, %s317
      %p328 = scmp.eq.s32.totalorder %s30, 0
      %p329 = por %p327, %p328
      %p330 = scmp.ne.s32.totalorder %s316, %s317
      %p331 = scmp.eq.s32.totalorder %s31, 1
      %p332 = por %p330, %p331
      %p334 = scmp.ne.s32.totalorder %s317, %s333
      %p335 = scmp.eq.s32.totalorder %s31, 0
      %p336 = por %p334, %p335
      %p337 = scmp.le.s32.totalorder 1, %s25
      %p338 = scmp.lt.s32.totalorder %s25, 3
      %p339 = pnand %p337, %p338
      %p340 = pneg %p339
      // Predicated region
      $region9: #{tpu_custom_call.1} parent=5 // pred_check
        _
      $region10: #{tpu_custom_call.1} parent=5 // pred_check_branch
        %342 = sbr.rel (%p339) target = $region12
      $region11: #{tpu_custom_call.1} parent=5 // pred_region
        %s343 = ssub.s32 %s25, 1
        // Predicated region
        $region13: #{tpu_custom_call.1} parent=11 // pred_check
          %p344 = pneg %p72
        $region14: #{tpu_custom_call.1} parent=11 // pred_check_branch
          %346 = sbr.rel (%p344) target = $region16
        $region15: #{tpu_custom_call.1} parent=11 // pred_region
          _
        $region16: #{tpu_custom_call.1} parent=11 // pred_fallthru
          _
        // Predicated region
        $region17: #{tpu_custom_call.1} parent=11 // pred_check
          %p347 = pneg %p93
        $region18: #{tpu_custom_call.1} parent=11 // pred_check_branch
          %349 = sbr.rel (%p347) target = $region20
        $region19: #{tpu_custom_call.1} parent=11 // pred_region
          _
        $region20: #{tpu_custom_call.1} parent=11 // pred_fallthru
          _
        // Predicated region
        $region21: #{tpu_custom_call.1} parent=11 // pred_check
          %p350 = pneg %p114
        $region22: #{tpu_custom_call.1} parent=11 // pred_check_branch
          %352 = sbr.rel (%p350) target = $region24
        $region23: #{tpu_custom_call.1} parent=11 // pred_region
          _
        $region24: #{tpu_custom_call.1} parent=11 // pred_fallthru
          _
        // Predicated region
        $region25: #{tpu_custom_call.1} parent=11 // pred_check
          %p353 = pneg %p135
        $region26: #{tpu_custom_call.1} parent=11 // pred_check_branch
          %355 = sbr.rel (%p353) target = $region28
        $region27: #{tpu_custom_call.1} parent=11 // pred_region
          _
        $region28: #{tpu_custom_call.1} parent=11 // pred_fallthru
          _
        // Predicated region
        $region29: #{tpu_custom_call.1} parent=11 // pred_check
          %p356 = pneg %p156
        $region30: #{tpu_custom_call.1} parent=11 // pred_check_branch
          %358 = sbr.rel (%p356) target = $region32
        $region31: #{tpu_custom_call.1} parent=11 // pred_region
          _
        $region32: #{tpu_custom_call.1} parent=11 // pred_fallthru
          _
        // Predicated region
        $region33: #{tpu_custom_call.1} parent=11 // pred_check
          %p359 = pneg %p177
        $region34: #{tpu_custom_call.1} parent=11 // pred_check_branch
          %361 = sbr.rel (%p359) target = $region36
        $region35: #{tpu_custom_call.1} parent=11 // pred_region
          _
        $region36: #{tpu_custom_call.1} parent=11 // pred_fallthru
          _
        // Predicated region
        $region37: #{tpu_custom_call.1} parent=11 // pred_check
          %p362 = pneg %p198
        $region38: #{tpu_custom_call.1} parent=11 // pred_check_branch
          %364 = sbr.rel (%p362) target = $region40
        $region39: #{tpu_custom_call.1} parent=11 // pred_region
          _
        $region40: #{tpu_custom_call.1} parent=11 // pred_fallthru
          _
        // Predicated region
        $region41: #{tpu_custom_call.1} parent=11 // pred_check
          %p365 = pneg %p219
        $region42: #{tpu_custom_call.1} parent=11 // pred_check_branch
          %367 = sbr.rel (%p365) target = $region44
        $region43: #{tpu_custom_call.1} parent=11 // pred_region
          _
        $region44: #{tpu_custom_call.1} parent=11 // pred_fallthru
          _
        // Predicated region
        $region45: #{tpu_custom_call.1} parent=11 // pred_check
          %p368 = pneg %p240
        $region46: #{tpu_custom_call.1} parent=11 // pred_check_branch
          %370 = sbr.rel (%p368) target = $region48
        $region47: #{tpu_custom_call.1} parent=11 // pred_region
          _
        $region48: #{tpu_custom_call.1} parent=11 // pred_fallthru
          _
        // Predicated region
        $region49: #{tpu_custom_call.1} parent=11 // pred_check
          %p371 = pneg %p261
        $region50: #{tpu_custom_call.1} parent=11 // pred_check_branch
          %373 = sbr.rel (%p371) target = $region52
        $region51: #{tpu_custom_call.1} parent=11 // pred_region
          _
        $region52: #{tpu_custom_call.1} parent=11 // pred_fallthru
          _
        // Predicated region
        $region53: #{tpu_custom_call.1} parent=11 // pred_check
          %p374 = pneg %p282
        $region54: #{tpu_custom_call.1} parent=11 // pred_check_branch
          %376 = sbr.rel (%p374) target = $region56
        $region55: #{tpu_custom_call.1} parent=11 // pred_region
          _
        $region56: #{tpu_custom_call.1} parent=11 // pred_fallthru
          _
        // Predicated region
        $region57: #{tpu_custom_call.1} parent=11 // pred_check
          %p377 = pneg %p303
        $region58: #{tpu_custom_call.1} parent=11 // pred_check_branch
          %379 = sbr.rel (%p377) target = $region60
        $region59: #{tpu_custom_call.1} parent=11 // pred_region
          _
        $region60: #{tpu_custom_call.1} parent=11 // pred_fallthru
          _
      $region12: #{tpu_custom_call.1} parent=5 // pred_fallthru
        _
      %p380 = scmp.lt.s32.totalorder %s25, 2
      // Predicated region
      $region61: #{tpu_custom_call.1} parent=5 // pred_check
        %p381 = pneg %p380
      $region62: #{tpu_custom_call.1} parent=5 // pred_check_branch
        %383 = sbr.rel (%p381) target = $region64
      $region63: #{tpu_custom_call.1} parent=5 // pred_region
        // Predicated region
        $region65: #{tpu_custom_call.1} parent=63 // pred_check
          %p384 = pneg %p45
        $region66: #{tpu_custom_call.1} parent=63 // pred_check_branch
          %386 = sbr.rel (%p384) target = $region68
        $region67: #{tpu_custom_call.1} parent=63 // pred_region
          %s387 = sand.u32 %s35, 1
          %s388 = scalar_lea.sflag [#allocation3], %s387
          %s389 = sand.u32 %s35, 1
          %s390 = smul.addr %s389, 8
          %s391 = scalar_lea.vmem [#allocation2], %s390
          %s393 = ssub.s32 128, 128
          %394 = vsyncadd %s388, %s393
          %s395 = smul.addr %s25, 128
          %s396 = scalar_lea.hbm %s0, %s395
          %s398 = sshll.u32 %s391, 4
          %s399 = int_to_ptr.vmem [resolvable:$true] %s398
          %401 = dma.hbm_to_vmem [thread:$0]  %s396, 128, %s399, %s388
        $region68: #{tpu_custom_call.1} parent=63 // pred_fallthru
          _
      $region64: #{tpu_custom_call.1} parent=5 // pred_fallthru
        _
      %p402 = scmp.le.s32.totalorder 1, %s25
      %p403 = scmp.lt.s32.totalorder %s25, 3
      %p404 = pnand %p402, %p403
      %p405 = pneg %p404
      // Predicated region
      $region69: #{tpu_custom_call.1} parent=5 // pred_check
        _
      $region70: #{tpu_custom_call.1} parent=5 // pred_check_branch
        %407 = sbr.rel (%p404) target = $region72
      $region71: #{tpu_custom_call.1} parent=5 // pred_region
        %s408 = ssub.s32 %s25, 1
        %s409 = sand.u32 %s38, 1
        %s410 = scalar_lea.sflag [#allocation3], %s409
        %s411 = sand.u32 %s38, 1
        %s412 = smul.addr %s411, 8
        %s413 = scalar_lea.vmem [#allocation2], %s412
        // Predicated region
        $region73: #{tpu_custom_call.1} parent=71 // pred_check
          %p414 = pneg %p51
        $region74: #{tpu_custom_call.1} parent=71 // pred_check_branch
          %416 = sbr.rel (%p414) target = $region76
        $region75: #{tpu_custom_call.1} parent=71 // pred_region
          %417 = dma.done %s410, 128
        $region76: #{tpu_custom_call.1} parent=71 // pred_fallthru
          _
        %s418 = sand.u32 %s38, 1
        %s419 = scalar_lea.sflag [#allocation3], %s418
        %s420 = sand.u32 %s38, 1
        %s421 = smul.addr %s420, 8
        %s422 = scalar_lea.vmem [#allocation2], %s421
        %p423 = pneg %p51
        %p424 = pneg %p48
        %p425 = pneg %p72
        %p426 = pneg %p69
        %p427 = pneg %p93
        %p428 = pneg %p90
        %p429 = pneg %p114
        %p430 = pneg %p111
        %p431 = pneg %p135
        %p432 = pneg %p132
        %p433 = pneg %p156
        %p434 = pneg %p153
        %p435 = pneg %p177
        %p436 = pneg %p174
        %p437 = pneg %p198
        %p438 = pneg %p195
        %p439 = pneg %p219
        %p440 = pneg %p216
        %p441 = pneg %p240
        %p442 = pneg %p237
        %p443 = pneg %p261
        %p444 = pneg %p258
        %p445 = pneg %p282
        %p446 = pneg %p279
        %p447 = pneg %p303
        %p448 = pneg %p300
        %p449 = pneg %p329
        %p450 = pneg %p326
        %s451 = sand.u32 %s316, 1
        %s452 = scalar_lea.sflag [#allocation4], %s451
        %s453 = sand.u32 %s316, 1
        %s454 = smul.addr %s453, 8
        %s455 = scalar_lea.vmem [#allocation5], %s454
        %v457 = vld [vmem:[%s413] sm:$0xff]
        %v458 = vpack.c.bf16 %v457, %v457
        %v459 = vld [vmem:[%s1] sm:$0xf]
        %v460 = vld [vmem:[%s1 + $0x4] sm:$0xf]
        %v461 = vld [vmem:[%s1 + $0x8] sm:$0xf]
        %v462 = vld [vmem:[%s1 + $0xc] sm:$0xf]
        %v463 = vld [vmem:[%s2] sm:$0x1]
        %v465 = vlaneseq
        %v466 = vshrl.u32 %v465, 7
        %v467 = vsub.s32 0, %v466
        %v468 = vrot.slane %v463, %v467
        %v474 = vunpack.c.l.b16 %v459
        %v475 = vunpack.c.l.b16 %v460
        %v476 = vunpack.c.l.b16 %v461
        %v477 = vunpack.c.l.b16 %v462
        %v478 = vpack.c.b16 %v475, %v474
        %v479 = vpack.c.b16 %v477, %v476
        %vm482 = vcmask 261120
        %v484 = vsel %vm482, %v458, 0
        %486 = vmatprep.subr.bf16.mxu0 0
        %487 = vmatpush1.bf16.msra.mxu0 0
        %488 = vmatprep.subr.bf16.mxu0 0
        %489 = vmatpush1.bf16.msra.mxu0 0
        %490 = vmatprep.subr.bf16.mxu0 0
        %491 = vmatpush1.bf16.msra.mxu0 0
        %492 = vmatprep.subr.bf16.mxu0 0
        %493 = vmatpush1.bf16.msra.mxu0 0
        %494 = vmatprep.subr.bf16.mxu0 0
        %495 = vmatpush1.bf16.msra.mxu0 0
        %496 = vmatprep.subr.bf16.mxu0 0
        %497 = vmatpush1.bf16.msra.mxu0 0
        %498 = vmatprep.subr.bf16.mxu0 0
        %499 = vmatpush1.bf16.msra.mxu0 %v479
        %500 = vmatprep.subr.bf16.mxu0 0
        %501 = vmatpush1.bf16.msra.mxu0 %v478
        %502 = vmatprep.subr.bf16.mxu0 0
        %503 = vmatpush2.bf16.msra.mxu0 0
        %504 = vmatprep.subr.bf16.mxu0 0
        %505 = vmatpush2.bf16.msra.mxu0 0
        %506 = vmatprep.subr.bf16.mxu0 0
        %507 = vmatpush2.bf16.msra.mxu0 0
        %508 = vmatprep.subr.bf16.mxu0 0
        %509 = vmatpush2.bf16.msra.mxu0 0
        %510 = vmatprep.subr.bf16.mxu0 0
        %511 = vmatpush2.bf16.msra.mxu0 0
        %512 = vmatprep.subr.bf16.mxu0 0
        %513 = vmatpush2.bf16.msra.mxu0 0
        %514 = vmatprep.subr.bf16.mxu0 0
        %515 = vmatpush2.bf16.msra.mxu0 0
        %516 = vmatprep.subr.bf16.mxu0 0
        %517 = vmatpush2.bf16.msra.mxu0 0
        %518 = vmatprep.mubr.bf16.mxu0 0
        %519 = vmatmul.mubr.bf16.gmra.mxu0 %v484
        %v520 = vpop.f32.mrf.mxu0
        %v521 = vadd.f32 %v468, %v520
        %v522 = vpop.f32.mrf.mxu0
        %v523 = vpop.f32.mrf.mxu0
        %v524 = vpop.f32.mrf.mxu0
        %525 = vdwg.mxu0
        %527 = vrot.lane.b32.xlu0 %v521, 120
        %v528 = vpop.permute.xlu0 %527
        %530 = vrot.lane.b32.xlu0 %v521, 112
        %v531 = vpop.permute.xlu0 %530
        %533 = vrot.lane.b32.xlu0 %v521, 104
        %v534 = vpop.permute.xlu0 %533
        %536 = vrot.lane.b32.xlu0 %v521, 96
        %v537 = vpop.permute.xlu0 %536
        %539 = vrot.lane.b32.xlu0 %v521, 88
        %v540 = vpop.permute.xlu0 %539
        %542 = vrot.lane.b32.xlu0 %v521, 80
        %v543 = vpop.permute.xlu0 %542
        %545 = vrot.lane.b32.xlu0 %v521, 72
        %v546 = vpop.permute.xlu0 %545
        %548 = vrot.lane.b32.xlu0 %v521, 64
        %v549 = vpop.permute.xlu0 %548
        %551 = vrot.lane.b32.xlu0 %v521, 56
        %v552 = vpop.permute.xlu0 %551
        %554 = vrot.lane.b32.xlu0 %v521, 48
        %v555 = vpop.permute.xlu0 %554
        %557 = vrot.lane.b32.xlu0 %v521, 40
        %v558 = vpop.permute.xlu0 %557
        %v560 = vcombine.low %v521, %v531
        %v561 = vcombine.high %v521, %v531
        %v563 = vunpack.c.l.s4 1983009808
        %v564 = vunpack.c.0.s8 %v563
        %v565 = vlaneseq
        %v566 = vshrl.u32 %v565, 7
        %v567 = vsub.s32 %v564, %v566
        %v568 = vrot.slane %v560, %v567
        %v570 = vunpack.c.l.s4 1983009808
        %v571 = vunpack.c.0.s8 %v570
        %v572 = vlaneseq
        %v573 = vshrl.u32 %v572, 7
        %v574 = vsub.s32 %v571, %v573
        %v575 = vrot.slane %v561, %v574
        %v576 = vcombine.low %v528, %v534
        %v577 = vcombine.high %v528, %v534
        %v579 = vunpack.c.l.s4 1983009808
        %v580 = vunpack.c.0.s8 %v579
        %v581 = vlaneseq
        %v582 = vshrl.u32 %v581, 7
        %v583 = vsub.s32 %v580, %v582
        %v584 = vrot.slane %v576, %v583
        %v586 = vunpack.c.l.s4 1983009808
        %v587 = vunpack.c.0.s8 %v586
        %v588 = vlaneseq
        %v589 = vshrl.u32 %v588, 7
        %v590 = vsub.s32 %v587, %v589
        %v591 = vrot.slane %v577, %v590
        %v592 = vcombine.low %v537, %v543
        %v593 = vcombine.high %v537, %v543
        %v595 = vunpack.c.l.s4 1983009808
        %v596 = vunpack.c.0.s8 %v595
        %v597 = vlaneseq
        %v598 = vshrl.u32 %v597, 7
        %v599 = vsub.s32 %v596, %v598
        %v600 = vrot.slane %v592, %v599
        %v602 = vunpack.c.l.s4 1983009808
        %v603 = vunpack.c.0.s8 %v602
        %v604 = vlaneseq
        %v605 = vshrl.u32 %v604, 7
        %v606 = vsub.s32 %v603, %v605
        %v607 = vrot.slane %v593, %v606
        %v608 = vcombine.low %v540, %v546
        %v609 = vcombine.high %v540, %v546
        %v611 = vunpack.c.l.s4 1983009808
        %v612 = vunpack.c.0.s8 %v611
        %v613 = vlaneseq
        %v614 = vshrl.u32 %v613, 7
        %v615 = vsub.s32 %v612, %v614
        %v616 = vrot.slane %v608, %v615
        %v618 = vunpack.c.l.s4 1983009808
        %v619 = vunpack.c.0.s8 %v618
        %v620 = vlaneseq
        %v621 = vshrl.u32 %v620, 7
        %v622 = vsub.s32 %v619, %v621
        %v623 = vrot.slane %v609, %v622
        %v624 = vcombine.low %v568, %v584
        %v625 = vcombine.high %v568, %v584
        %v627 = vunpack.c.l.s4 1934713408
        %v628 = vunpack.c.0.s8 %v627
        %v629 = vlaneseq
        %v630 = vshrl.u32 %v629, 7
        %v631 = vsub.s32 %v628, %v630
        %v632 = vrot.slane %v624, %v631
        %v634 = vunpack.c.l.s4 1934713408
        %v635 = vunpack.c.0.s8 %v634
        %v636 = vlaneseq
        %v637 = vshrl.u32 %v636, 7
        %v638 = vsub.s32 %v635, %v637
        %v639 = vrot.slane %v625, %v638
        %v640 = vcombine.low %v575, %v591
        %v641 = vcombine.high %v575, %v591
        %v643 = vunpack.c.l.s4 1934713408
        %v644 = vunpack.c.0.s8 %v643
        %v645 = vlaneseq
        %v646 = vshrl.u32 %v645, 7
        %v647 = vsub.s32 %v644, %v646
        %v648 = vrot.slane %v640, %v647
        %v650 = vunpack.c.l.s4 1934713408
        %v651 = vunpack.c.0.s8 %v650
        %v652 = vlaneseq
        %v653 = vshrl.u32 %v652, 7
        %v654 = vsub.s32 %v651, %v653
        %v655 = vrot.slane %v641, %v654
        %v656 = vcombine.low %v600, %v616
        %v657 = vcombine.high %v600, %v616
        %v659 = vunpack.c.l.s4 1934713408
        %v660 = vunpack.c.0.s8 %v659
        %v661 = vlaneseq
        %v662 = vshrl.u32 %v661, 7
        %v663 = vsub.s32 %v660, %v662
        %v664 = vrot.slane %v656, %v663
        %v666 = vunpack.c.l.s4 1934713408
        %v667 = vunpack.c.0.s8 %v666
        %v668 = vlaneseq
        %v669 = vshrl.u32 %v668, 7
        %v670 = vsub.s32 %v667, %v669
        %v671 = vrot.slane %v657, %v670
        %v672 = vcombine.low %v607, %v623
        %v673 = vcombine.high %v607, %v623
        %v675 = vunpack.c.l.s4 1934713408
        %v676 = vunpack.c.0.s8 %v675
        %v677 = vlaneseq
        %v678 = vshrl.u32 %v677, 7
        %v679 = vsub.s32 %v676, %v678
        %v680 = vrot.slane %v672, %v679
        %v682 = vunpack.c.l.s4 1934713408
        %v683 = vunpack.c.0.s8 %v682
        %v684 = vlaneseq
        %v685 = vshrl.u32 %v684, 7
        %v686 = vsub.s32 %v683, %v685
        %v687 = vrot.slane %v673, %v686
        %v688 = vcombine.low %v632, %v664
        %v689 = vcombine.high %v632, %v664
        %v690 = vcombine.low %v639, %v671
        %v691 = vcombine.high %v639, %v671
        %v692 = vcombine.low %v648, %v680
        %v693 = vcombine.high %v648, %v680
        %v694 = vcombine.low %v655, %v687
        %v695 = vcombine.high %v655, %v687
        %v696 = vcombine.low %v549, %v555
        %v697 = vcombine.high %v549, %v555
        %v699 = vunpack.c.l.s4 1983009808
        %v700 = vunpack.c.0.s8 %v699
        %v701 = vlaneseq
        %v702 = vshrl.u32 %v701, 7
        %v703 = vsub.s32 %v700, %v702
        %v704 = vrot.slane %v696, %v703
        %v706 = vunpack.c.l.s4 1983009808
        %v707 = vunpack.c.0.s8 %v706
        %v708 = vlaneseq
        %v709 = vshrl.u32 %v708, 7
        %v710 = vsub.s32 %v707, %v709
        %v711 = vrot.slane %v697, %v710
        %v712 = vcombine.low %v552, %v558
        %v713 = vcombine.high %v552, %v558
        %v715 = vunpack.c.l.s4 1983009808
        %v716 = vunpack.c.0.s8 %v715
        %v717 = vlaneseq
        %v718 = vshrl.u32 %v717, 7
        %v719 = vsub.s32 %v716, %v718
        %v720 = vrot.slane %v712, %v719
        %v722 = vunpack.c.l.s4 1983009808
        %v723 = vunpack.c.0.s8 %v722
        %v724 = vlaneseq
        %v725 = vshrl.u32 %v724, 7
        %v726 = vsub.s32 %v723, %v725
        %v727 = vrot.slane %v713, %v726
        %v728 = vcombine.low %v704, %v720
        %v729 = vcombine.high %v704, %v720
        %v731 = vunpack.c.l.s4 1934713408
        %v732 = vunpack.c.0.s8 %v731
        %v733 = vlaneseq
        %v734 = vshrl.u32 %v733, 7
        %v735 = vsub.s32 %v732, %v734
        %v736 = vrot.slane %v728, %v735
        %v738 = vunpack.c.l.s4 1934713408
        %v739 = vunpack.c.0.s8 %v738
        %v740 = vlaneseq
        %v741 = vshrl.u32 %v740, 7
        %v742 = vsub.s32 %v739, %v741
        %v743 = vrot.slane %v729, %v742
        %v744 = vcombine.low %v711, %v727
        %v745 = vcombine.high %v711, %v727
        %v747 = vunpack.c.l.s4 1934713408
        %v748 = vunpack.c.0.s8 %v747
        %v749 = vlaneseq
        %v750 = vshrl.u32 %v749, 7
        %v751 = vsub.s32 %v748, %v750
        %v752 = vrot.slane %v744, %v751
        %v754 = vunpack.c.l.s4 1934713408
        %v755 = vunpack.c.0.s8 %v754
        %v756 = vlaneseq
        %v757 = vshrl.u32 %v756, 7
        %v758 = vsub.s32 %v755, %v757
        %v759 = vrot.slane %v745, %v758
        %v760 = vcombine.high %v736, 0.0
        %v761 = vcombine.high %v743, 0.0
        %v762 = vcombine.high %v752, 0.0
        %v763 = vcombine.high %v759, 0.0
        %v764 = vcombine.low %v688, %v690
        %v765 = vcombine.high %v688, %v690
        %v767 = vunpack.c.l.s4 1983009808
        %v768 = vunpack.c.0.s8 %v767
        %v769 = vlaneseq
        %v770 = vshrl.u32 %v769, 7
        %v771 = vsub.s32 %v768, %v770
        %v772 = vrot.slane %v764, %v771
        %v774 = vunpack.c.l.s4 1983009808
        %v775 = vunpack.c.0.s8 %v774
        %v776 = vlaneseq
        %v777 = vshrl.u32 %v776, 7
        %v778 = vsub.s32 %v775, %v777
        %v779 = vrot.slane %v765, %v778
        %v780 = vcombine.low %v689, %v691
        %v781 = vcombine.high %v689, %v691
        %v783 = vunpack.c.l.s4 1983009808
        %v784 = vunpack.c.0.s8 %v783
        %v785 = vlaneseq
        %v786 = vshrl.u32 %v785, 7
        %v787 = vsub.s32 %v784, %v786
        %v788 = vrot.slane %v780, %v787
        %v790 = vunpack.c.l.s4 1983009808
        %v791 = vunpack.c.0.s8 %v790
        %v792 = vlaneseq
        %v793 = vshrl.u32 %v792, 7
        %v794 = vsub.s32 %v791, %v793
        %v795 = vrot.slane %v781, %v794
        %v796 = vcombine.low %v692, %v694
        %v797 = vcombine.high %v692, %v694
        %v799 = vunpack.c.l.s4 1983009808
        %v800 = vunpack.c.0.s8 %v799
        %v801 = vlaneseq
        %v802 = vshrl.u32 %v801, 7
        %v803 = vsub.s32 %v800, %v802
        %v804 = vrot.slane %v796, %v803
        %v806 = vunpack.c.l.s4 1983009808
        %v807 = vunpack.c.0.s8 %v806
        %v808 = vlaneseq
        %v809 = vshrl.u32 %v808, 7
        %v810 = vsub.s32 %v807, %v809
        %v811 = vrot.slane %v797, %v810
        %v812 = vcombine.low %v693, %v695
        %v813 = vcombine.high %v693, %v695
        %v815 = vunpack.c.l.s4 1983009808
        %v816 = vunpack.c.0.s8 %v815
        %v817 = vlaneseq
        %v818 = vshrl.u32 %v817, 7
        %v819 = vsub.s32 %v816, %v818
        %v820 = vrot.slane %v812, %v819
        %v822 = vunpack.c.l.s4 1983009808
        %v823 = vunpack.c.0.s8 %v822
        %v824 = vlaneseq
        %v825 = vshrl.u32 %v824, 7
        %v826 = vsub.s32 %v823, %v825
        %v827 = vrot.slane %v813, %v826
        %v828 = vcombine.low %v772, %v788
        %v829 = vcombine.high %v772, %v788
        %v831 = vunpack.c.l.s4 1934713408
        %v832 = vunpack.c.0.s8 %v831
        %v833 = vlaneseq
        %v834 = vshrl.u32 %v833, 7
        %v835 = vsub.s32 %v832, %v834
        %v836 = vrot.slane %v828, %v835
        %v838 = vunpack.c.l.s4 1934713408
        %v839 = vunpack.c.0.s8 %v838
        %v840 = vlaneseq
        %v841 = vshrl.u32 %v840, 7
        %v842 = vsub.s32 %v839, %v841
        %v843 = vrot.slane %v829, %v842
        %v844 = vcombine.low %v779, %v795
        %v845 = vcombine.high %v779, %v795
        %v847 = vunpack.c.l.s4 1934713408
        %v848 = vunpack.c.0.s8 %v847
        %v849 = vlaneseq
        %v850 = vshrl.u32 %v849, 7
        %v851 = vsub.s32 %v848, %v850
        %v852 = vrot.slane %v844, %v851
        %v854 = vunpack.c.l.s4 1934713408
        %v855 = vunpack.c.0.s8 %v854
        %v856 = vlaneseq
        %v857 = vshrl.u32 %v856, 7
        %v858 = vsub.s32 %v855, %v857
        %v859 = vrot.slane %v845, %v858
        %v860 = vcombine.low %v804, %v820
        %v861 = vcombine.high %v804, %v820
        %v863 = vunpack.c.l.s4 1934713408
        %v864 = vunpack.c.0.s8 %v863
        %v865 = vlaneseq
        %v866 = vshrl.u32 %v865, 7
        %v867 = vsub.s32 %v864, %v866
        %v868 = vrot.slane %v860, %v867
        %v870 = vunpack.c.l.s4 1934713408
        %v871 = vunpack.c.0.s8 %v870
        %v872 = vlaneseq
        %v873 = vshrl.u32 %v872, 7
        %v874 = vsub.s32 %v871, %v873
        %v875 = vrot.slane %v861, %v874
        %v876 = vcombine.low %v811, %v827
        %v877 = vcombine.high %v811, %v827
        %v879 = vunpack.c.l.s4 1934713408
        %v880 = vunpack.c.0.s8 %v879
        %v881 = vlaneseq
        %v882 = vshrl.u32 %v881, 7
        %v883 = vsub.s32 %v880, %v882
        %v884 = vrot.slane %v876, %v883
        %v886 = vunpack.c.l.s4 1934713408
        %v887 = vunpack.c.0.s8 %v886
        %v888 = vlaneseq
        %v889 = vshrl.u32 %v888, 7
        %v890 = vsub.s32 %v887, %v889
        %v891 = vrot.slane %v877, %v890
        %v892 = vcombine.low %v836, %v868
        %v893 = vcombine.high %v836, %v868
        %v894 = vcombine.low %v843, %v875
        %v895 = vcombine.high %v843, %v875
        %v896 = vcombine.low %v852, %v884
        %v897 = vcombine.high %v852, %v884
        %v898 = vcombine.low %v859, %v891
        %v899 = vcombine.high %v859, %v891
        %v900 = vcombine.low %v736, %v743
        %v902 = vunpack.c.l.s4 1983009808
        %v903 = vunpack.c.0.s8 %v902
        %v904 = vlaneseq
        %v905 = vshrl.u32 %v904, 7
        %v906 = vsub.s32 %v903, %v905
        %v907 = vrot.slane %v900, %v906
        %v908 = vcombine.low %v760, %v761
        %v910 = vunpack.c.l.s4 1983009808
        %v911 = vunpack.c.0.s8 %v910
        %v912 = vlaneseq
        %v913 = vshrl.u32 %v912, 7
        %v914 = vsub.s32 %v911, %v913
        %v915 = vrot.slane %v908, %v914
        %v916 = vcombine.low %v752, %v759
        %v918 = vunpack.c.l.s4 1983009808
        %v919 = vunpack.c.0.s8 %v918
        %v920 = vlaneseq
        %v921 = vshrl.u32 %v920, 7
        %v922 = vsub.s32 %v919, %v921
        %v923 = vrot.slane %v916, %v922
        %v924 = vcombine.low %v762, %v763
        %v926 = vunpack.c.l.s4 1983009808
        %v927 = vunpack.c.0.s8 %v926
        %v928 = vlaneseq
        %v929 = vshrl.u32 %v928, 7
        %v930 = vsub.s32 %v927, %v929
        %v931 = vrot.slane %v924, %v930
        %v932 = vcombine.low %v907, %v915
        %v933 = vcombine.high %v907, %v915
        %v935 = vunpack.c.l.s4 1934713408
        %v936 = vunpack.c.0.s8 %v935
        %v937 = vlaneseq
        %v938 = vshrl.u32 %v937, 7
        %v939 = vsub.s32 %v936, %v938
        %v940 = vrot.slane %v932, %v939
        %v942 = vunpack.c.l.s4 1934713408
        %v943 = vunpack.c.0.s8 %v942
        %v944 = vlaneseq
        %v945 = vshrl.u32 %v944, 7
        %v946 = vsub.s32 %v943, %v945
        %v947 = vrot.slane %v933, %v946
        %v948 = vcombine.low %v923, %v931
        %v949 = vcombine.high %v923, %v931
        %v951 = vunpack.c.l.s4 1934713408
        %v952 = vunpack.c.0.s8 %v951
        %v953 = vlaneseq
        %v954 = vshrl.u32 %v953, 7
        %v955 = vsub.s32 %v952, %v954
        %v956 = vrot.slane %v948, %v955
        %v958 = vunpack.c.l.s4 1934713408
        %v959 = vunpack.c.0.s8 %v958
        %v960 = vlaneseq
        %v961 = vshrl.u32 %v960, 7
        %v962 = vsub.s32 %v959, %v961
        %v963 = vrot.slane %v949, %v962
        %v964 = vcombine.low %v940, %v956
        %v965 = vcombine.high %v940, %v956
        %v966 = vcombine.low %v947, %v963
        %v967 = vcombine.high %v947, %v963
        %v968 = vpack.c.bf16 %v892, %v892
        %v969 = vpack.c.bf16 %v893, %v893
        %v970 = vpack.c.bf16 %v894, %v894
        %v971 = vpack.c.bf16 %v895, %v895
        %v972 = vpack.c.bf16 %v896, %v896
        %v973 = vpack.c.bf16 %v897, %v897
        %v974 = vpack.c.bf16 %v898, %v898
        %v975 = vpack.c.bf16 %v899, %v899
        %v976 = vpack.c.bf16 %v964, %v964
        %v977 = vpack.c.bf16 %v965, %v965
        %v978 = vpack.c.bf16 %v966, %v966
        %v979 = vpack.c.bf16 %v967, %v967
        %vm980 = vcmask 64512
        %v982 = vsel %vm980, %v968, 0
        %v985 = vsel %vm980, %v972, 0
        %987 = vmatprep.subr.bf16.mxu0 0
        %988 = vmatpush1.bf16.xpose.msra.mxu0 0
        %989 = vmatprep.subr.bf16.mxu0 0
        %990 = vmatpush1.bf16.xpose.msra.mxu0 0
        %991 = vmatprep.subr.bf16.mxu0 0
        %992 = vmatpush1.bf16.xpose.msra.mxu0 0
        %993 = vmatprep.subr.bf16.mxu0 0
        %994 = vmatpush1.bf16.xpose.msra.mxu0 0
        %995 = vmatprep.subr.bf16.mxu0 0
        %996 = vmatpush1.bf16.xpose.msra.mxu0 0
        %997 = vmatprep.subr.bf16.mxu0 0
        %998 = vmatpush1.bf16.xpose.msra.mxu0 0
        %999 = vmatprep.subr.bf16.mxu0 0
        %1000 = vmatpush1.bf16.xpose.msra.mxu0 0
        %1001 = vmatprep.subr.bf16.mxu0 0
        %1002 = vmatpush1.bf16.xpose.msra.mxu0 %v985
        %1003 = vmatprep.subr.bf16.mxu0 0
        %1004 = vmatpush2.bf16.xpose.msra.mxu0 0
        %1005 = vmatprep.subr.bf16.mxu0 0
        %1006 = vmatpush2.bf16.xpose.msra.mxu0 0
        %1007 = vmatprep.subr.bf16.mxu0 0
        %1008 = vmatpush2.bf16.xpose.msra.mxu0 0
        %1009 = vmatprep.subr.bf16.mxu0 0
        %1010 = vmatpush2.bf16.xpose.msra.mxu0 0
        %1011 = vmatprep.subr.bf16.mxu0 0
        %1012 = vmatpush2.bf16.xpose.msra.mxu0 0
        %1013 = vmatprep.subr.bf16.mxu0 0
        %1014 = vmatpush2.bf16.xpose.msra.mxu0 0
        %1015 = vmatprep.subr.bf16.mxu0 0
        %1016 = vmatpush2.bf16.xpose.msra.mxu0 0
        %1017 = vmatprep.subr.bf16.mxu0 0
        %1018 = vmatpush2.bf16.xpose.msra.mxu0 0
        %1019 = vmatprep.mubr.bf16.mxu0 0
        %1020 = vmatmul.mubr.bf16.gmra.mxu0 %v982
        %v1021 = vpop.f32.mrf.mxu0
        %v1022 = vadd.f32 0.0, %v1021
        %v1023 = vpop.f32.mrf.mxu0
        %v1024 = vpop.f32.mrf.mxu0
        %v1025 = vpop.f32.mrf.mxu0
        %1026 = vdwg.mxu0
        %v1028 = vsel %vm980, %v969, 0
        %v1031 = vsel %vm980, %v973, 0
        %1033 = vmatprep.subr.bf16.mxu0 0
        %1034 = vmatpush1.bf16.xpose.msra.mxu0 0
        %1035 = vmatprep.subr.bf16.mxu0 0
        %1036 = vmatpush1.bf16.xpose.msra.mxu0 0
        %1037 = vmatprep.subr.bf16.mxu0 0
        %1038 = vmatpush1.bf16.xpose.msra.mxu0 0
        %1039 = vmatprep.subr.bf16.mxu0 0
        %1040 = vmatpush1.bf16.xpose.msra.mxu0 0
        %1041 = vmatprep.subr.bf16.mxu0 0
        %1042 = vmatpush1.bf16.xpose.msra.mxu0 0
        %1043 = vmatprep.subr.bf16.mxu0 0
        %1044 = vmatpush1.bf16.xpose.msra.mxu0 0
        %1045 = vmatprep.subr.bf16.mxu0 0
        %1046 = vmatpush1.bf16.xpose.msra.mxu0 0
        %1047 = vmatprep.subr.bf16.mxu0 0
        %1048 = vmatpush1.bf16.xpose.msra.mxu0 %v1031
        %1049 = vmatprep.subr.bf16.mxu0 0
        %1050 = vmatpush2.bf16.xpose.msra.mxu0 0
        %1051 = vmatprep.subr.bf16.mxu0 0
        %1052 = vmatpush2.bf16.xpose.msra.mxu0 0
        %1053 = vmatprep.subr.bf16.mxu0 0
        %1054 = vmatpush2.bf16.xpose.msra.mxu0 0
        %1055 = vmatprep.subr.bf16.mxu0 0
        %1056 = vmatpush2.bf16.xpose.msra.mxu0 0
        %1057 = vmatprep.subr.bf16.mxu0 0
        %1058 = vmatpush2.bf16.xpose.msra.mxu0 0
        %1059 = vmatprep.subr.bf16.mxu0 0
        %1060 = vmatpush2.bf16.xpose.msra.mxu0 0
        %1061 = vmatprep.subr.bf16.mxu0 0
        %1062 = vmatpush2.bf16.xpose.msra.mxu0 0
        %1063 = vmatprep.subr.bf16.mxu0 0
        %1064 = vmatpush2.bf16.xpose.msra.mxu0 0
        %1065 = vmatprep.mubr.bf16.mxu0 0
        %1066 = vmatmul.mubr.bf16.gmra.mxu0 %v1028
        %v1067 = vpop.f32.mrf.mxu0
        %v1068 = vadd.f32 0.0, %v1067
        %v1069 = vpop.f32.mrf.mxu0
        %v1070 = vpop.f32.mrf.mxu0
        %v1071 = vpop.f32.mrf.mxu0
        %1072 = vdwg.mxu0
        %v1074 = vsel %vm980, %v970, 0
        %v1077 = vsel %vm980, %v974, 0
        %1079 = vmatprep.subr.bf16.mxu0 0
        %1080 = vmatpush1.bf16.xpose.msra.mxu0 0
        %1081 = vmatprep.subr.bf16.mxu0 0
        %1082 = vmatpush1.bf16.xpose.msra.mxu0 0
        %1083 = vmatprep.subr.bf16.mxu0 0
        %1084 = vmatpush1.bf16.xpose.msra.mxu0 0
        %1085 = vmatprep.subr.bf16.mxu0 0
        %1086 = vmatpush1.bf16.xpose.msra.mxu0 0
        %1087 = vmatprep.subr.bf16.mxu0 0
        %1088 = vmatpush1.bf16.xpose.msra.mxu0 0
        %1089 = vmatprep.subr.bf16.mxu0 0
        %1090 = vmatpush1.bf16.xpose.msra.mxu0 0
        %1091 = vmatprep.subr.bf16.mxu0 0
        %1092 = vmatpush1.bf16.xpose.msra.mxu0 0
        %1093 = vmatprep.subr.bf16.mxu0 0
        %1094 = vmatpush1.bf16.xpose.msra.mxu0 %v1077
        %1095 = vmatprep.subr.bf16.mxu0 0
        %1096 = vmatpush2.bf16.xpose.msra.mxu0 0
        %1097 = vmatprep.subr.bf16.mxu0 0
        %1098 = vmatpush2.bf16.xpose.msra.mxu0 0
        %1099 = vmatprep.subr.bf16.mxu0 0
        %1100 = vmatpush2.bf16.xpose.msra.mxu0 0
        %1101 = vmatprep.subr.bf16.mxu0 0
        %1102 = vmatpush2.bf16.xpose.msra.mxu0 0
        %1103 = vmatprep.subr.bf16.mxu0 0
        %1104 = vmatpush2.bf16.xpose.msra.mxu0 0
        %1105 = vmatprep.subr.bf16.mxu0 0
        %1106 = vmatpush2.bf16.xpose.msra.mxu0 0
        %1107 = vmatprep.subr.bf16.mxu0 0
        %1108 = vmatpush2.bf16.xpose.msra.mxu0 0
        %1109 = vmatprep.subr.bf16.mxu0 0
        %1110 = vmatpush2.bf16.xpose.msra.mxu0 0
        %1111 = vmatprep.mubr.bf16.mxu0 0
        %1112 = vmatmul.mubr.bf16.gmra.mxu0 %v1074
        %v1113 = vpop.f32.mrf.mxu0
        %v1114 = vadd.f32 0.0, %v1113
        %v1115 = vpop.f32.mrf.mxu0
        %v1116 = vpop.f32.mrf.mxu0
        %v1117 = vpop.f32.mrf.mxu0
        %1118 = vdwg.mxu0
        %v1120 = vsel %vm980, %v971, 0
        %v1123 = vsel %vm980, %v975, 0
        %1125 = vmatprep.subr.bf16.mxu0 0
        %1126 = vmatpush1.bf16.xpose.msra.mxu0 0
        %1127 = vmatprep.subr.bf16.mxu0 0
        %1128 = vmatpush1.bf16.xpose.msra.mxu0 0
        %1129 = vmatprep.subr.bf16.mxu0 0
        %1130 = vmatpush1.bf16.xpose.msra.mxu0 0
        %1131 = vmatprep.subr.bf16.mxu0 0
        %1132 = vmatpush1.bf16.xpose.msra.mxu0 0
        %1133 = vmatprep.subr.bf16.mxu0 0
        %1134 = vmatpush1.bf16.xpose.msra.mxu0 0
        %1135 = vmatprep.subr.bf16.mxu0 0
        %1136 = vmatpush1.bf16.xpose.msra.mxu0 0
        %1137 = vmatprep.subr.bf16.mxu0 0
        %1138 = vmatpush1.bf16.xpose.msra.mxu0 0
        %1139 = vmatprep.subr.bf16.mxu0 0
        %1140 = vmatpush1.bf16.xpose.msra.mxu0 %v1123
        %1141 = vmatprep.subr.bf16.mxu0 0
        %1142 = vmatpush2.bf16.xpose.msra.mxu0 0
        %1143 = vmatprep.subr.bf16.mxu0 0
        %1144 = vmatpush2.bf16.xpose.msra.mxu0 0
        %1145 = vmatprep.subr.bf16.mxu0 0
        %1146 = vmatpush2.bf16.xpose.msra.mxu0 0
        %1147 = vmatprep.subr.bf16.mxu0 0
        %1148 = vmatpush2.bf16.xpose.msra.mxu0 0
        %1149 = vmatprep.subr.bf16.mxu0 0
        %1150 = vmatpush2.bf16.xpose.msra.mxu0 0
        %1151 = vmatprep.subr.bf16.mxu0 0
        %1152 = vmatpush2.bf16.xpose.msra.mxu0 0
        %1153 = vmatprep.subr.bf16.mxu0 0
        %1154 = vmatpush2.bf16.xpose.msra.mxu0 0
        %1155 = vmatprep.subr.bf16.mxu0 0
        %1156 = vmatpush2.bf16.xpose.msra.mxu0 0
        %1157 = vmatprep.mubr.bf16.mxu0 0
        %1158 = vmatmul.mubr.bf16.gmra.mxu0 %v1120
        %v1159 = vpop.f32.mrf.mxu0
        %v1160 = vadd.f32 0.0, %v1159
        %v1161 = vpop.f32.mrf.mxu0
        %v1162 = vpop.f32.mrf.mxu0
        %v1163 = vpop.f32.mrf.mxu0
        %1164 = vdwg.mxu0
        %v1165 = vsel %vm980, %v1022, -inf
        %1166 = vmax.xlane.f32.xlu0 %v1165
        %v1167 = vpop.xlane.xlu0 %1166
        %v1168 = vsel %vm980, %v1068, -inf
        %1169 = vmax.xlane.f32.xlu0 %v1168
        %v1170 = vpop.xlane.xlu0 %1169
        %v1171 = vsel %vm980, %v1114, -inf
        %1172 = vmax.xlane.f32.xlu0 %v1171
        %v1173 = vpop.xlane.xlu0 %1172
        %v1174 = vsel %vm980, %v1160, -inf
        %1175 = vmax.xlane.f32.xlu0 %v1174
        %v1176 = vpop.xlane.xlu0 %1175
        %v1177 = vsub.f32 %v1022, %v1167
        %v1178 = vsub.f32 %v1068, %v1170
        %v1179 = vsub.f32 %v1114, %v1173
        %v1180 = vsub.f32 %v1160, %v1176
        %v1181 = vmul.f32 %v1177, 1.442695
        %v1182 = vpow.pop %v1181
        %v1183 = vmul.f32 %v1178, 1.442695
        %v1184 = vpow.pop %v1183
        %v1185 = vmul.f32 %v1179, 1.442695
        %v1186 = vpow.pop %v1185
        %v1187 = vmul.f32 %v1180, 1.442695
        %v1188 = vpow.pop %v1187
        %v1189 = vsel %vm980, %v1182, 0.0
        %1190 = vadd.xlane.f32.xlu0 %v1189
        %v1191 = vpop.xlane.xlu0 %1190
        %v1192 = vsel %vm980, %v1184, 0.0
        %1193 = vadd.xlane.f32.xlu0 %v1192
        %v1194 = vpop.xlane.xlu0 %1193
        %v1195 = vsel %vm980, %v1186, 0.0
        %1196 = vadd.xlane.f32.xlu0 %v1195
        %v1197 = vpop.xlane.xlu0 %1196
        %v1198 = vsel %vm980, %v1188, 0.0
        %1199 = vadd.xlane.f32.xlu0 %v1198
        %v1200 = vpop.xlane.xlu0 %1199
        %v1201 = vrcp.pop %v1191
        %v1202 = vrcp.pop %v1194
        %v1203 = vrcp.pop %v1197
        %v1204 = vrcp.pop %v1200
        %v1205 = vmul.f32 %v1182, %v1201
        %v1206 = vmul.f32 %v1184, %v1202
        %v1207 = vmul.f32 %v1186, %v1203
        %v1208 = vmul.f32 %v1188, %v1204
        %v1209 = vpack.c.bf16 %v1205, %v1205
        %v1210 = vpack.c.bf16 %v1206, %v1206
        %v1211 = vpack.c.bf16 %v1207, %v1207
        %v1212 = vpack.c.bf16 %v1208, %v1208
        %v1214 = vsel %vm980, %v1209, 0
        %vm1216 = vcmask 1043456
        %v1218 = vsel %vm1216, %v976, 0
        %1220 = vmatprep.subr.bf16.mxu0 0
        %1221 = vmatpush1.bf16.msra.mxu0 0
        %1222 = vmatprep.subr.bf16.mxu0 0
        %1223 = vmatpush1.bf16.msra.mxu0 0
        %1224 = vmatprep.subr.bf16.mxu0 0
        %1225 = vmatpush1.bf16.msra.mxu0 0
        %1226 = vmatprep.subr.bf16.mxu0 0
        %1227 = vmatpush1.bf16.msra.mxu0 0
        %1228 = vmatprep.subr.bf16.mxu0 0
        %1229 = vmatpush1.bf16.msra.mxu0 0
        %1230 = vmatprep.subr.bf16.mxu0 0
        %1231 = vmatpush1.bf16.msra.mxu0 0
        %1232 = vmatprep.subr.bf16.mxu0 0
        %1233 = vmatpush1.bf16.msra.mxu0 0
        %1234 = vmatprep.subr.bf16.mxu0 0
        %1235 = vmatpush1.bf16.msra.mxu0 %v1218
        %1236 = vmatprep.subr.bf16.mxu0 0
        %1237 = vmatpush2.bf16.msra.mxu0 0
        %1238 = vmatprep.subr.bf16.mxu0 0
        %1239 = vmatpush2.bf16.msra.mxu0 0
        %1240 = vmatprep.subr.bf16.mxu0 0
        %1241 = vmatpush2.bf16.msra.mxu0 0
        %1242 = vmatprep.subr.bf16.mxu0 0
        %1243 = vmatpush2.bf16.msra.mxu0 0
        %1244 = vmatprep.subr.bf16.mxu0 0
        %1245 = vmatpush2.bf16.msra.mxu0 0
        %1246 = vmatprep.subr.bf16.mxu0 0
        %1247 = vmatpush2.bf16.msra.mxu0 0
        %1248 = vmatprep.subr.bf16.mxu0 0
        %1249 = vmatpush2.bf16.msra.mxu0 0
        %1250 = vmatprep.subr.bf16.mxu0 0
        %1251 = vmatpush2.bf16.msra.mxu0 0
        %1252 = vmatprep.mubr.bf16.mxu0 0
        %1253 = vmatmul.mubr.bf16.gmra.mxu0 %v1214
        %v1254 = vpop.f32.mrf.mxu0
        %v1255 = vadd.f32 0.0, %v1254
        %v1256 = vpop.f32.mrf.mxu0
        %v1257 = vpop.f32.mrf.mxu0
        %v1258 = vpop.f32.mrf.mxu0
        %1259 = vdwg.mxu0
        %v1261 = vsel %vm980, %v1210, 0
        %v1264 = vsel %vm1216, %v977, 0
        %1266 = vmatprep.subr.bf16.mxu0 0
        %1267 = vmatpush1.bf16.msra.mxu0 0
        %1268 = vmatprep.subr.bf16.mxu0 0
        %1269 = vmatpush1.bf16.msra.mxu0 0
        %1270 = vmatprep.subr.bf16.mxu0 0
        %1271 = vmatpush1.bf16.msra.mxu0 0
        %1272 = vmatprep.subr.bf16.mxu0 0
        %1273 = vmatpush1.bf16.msra.mxu0 0
        %1274 = vmatprep.subr.bf16.mxu0 0
        %1275 = vmatpush1.bf16.msra.mxu0 0
        %1276 = vmatprep.subr.bf16.mxu0 0
        %1277 = vmatpush1.bf16.msra.mxu0 0
        %1278 = vmatprep.subr.bf16.mxu0 0
        %1279 = vmatpush1.bf16.msra.mxu0 0
        %1280 = vmatprep.subr.bf16.mxu0 0
        %1281 = vmatpush1.bf16.msra.mxu0 %v1264
        %1282 = vmatprep.subr.bf16.mxu0 0
        %1283 = vmatpush2.bf16.msra.mxu0 0
        %1284 = vmatprep.subr.bf16.mxu0 0
        %1285 = vmatpush2.bf16.msra.mxu0 0
        %1286 = vmatprep.subr.bf16.mxu0 0
        %1287 = vmatpush2.bf16.msra.mxu0 0
        %1288 = vmatprep.subr.bf16.mxu0 0
        %1289 = vmatpush2.bf16.msra.mxu0 0
        %1290 = vmatprep.subr.bf16.mxu0 0
        %1291 = vmatpush2.bf16.msra.mxu0 0
        %1292 = vmatprep.subr.bf16.mxu0 0
        %1293 = vmatpush2.bf16.msra.mxu0 0
        %1294 = vmatprep.subr.bf16.mxu0 0
        %1295 = vmatpush2.bf16.msra.mxu0 0
        %1296 = vmatprep.subr.bf16.mxu0 0
        %1297 = vmatpush2.bf16.msra.mxu0 0
        %1298 = vmatprep.mubr.bf16.mxu0 0
        %1299 = vmatmul.mubr.bf16.gmra.mxu0 %v1261
        %v1300 = vpop.f32.mrf.mxu0
        %v1301 = vadd.f32 0.0, %v1300
        %v1302 = vpop.f32.mrf.mxu0
        %v1303 = vpop.f32.mrf.mxu0
        %v1304 = vpop.f32.mrf.mxu0
        %1305 = vdwg.mxu0
        %v1307 = vsel %vm980, %v1211, 0
        %v1310 = vsel %vm1216, %v978, 0
        %1312 = vmatprep.subr.bf16.mxu0 0
        %1313 = vmatpush1.bf16.msra.mxu0 0
        %1314 = vmatprep.subr.bf16.mxu0 0
        %1315 = vmatpush1.bf16.msra.mxu0 0
        %1316 = vmatprep.subr.bf16.mxu0 0
        %1317 = vmatpush1.bf16.msra.mxu0 0
        %1318 = vmatprep.subr.bf16.mxu0 0
        %1319 = vmatpush1.bf16.msra.mxu0 0
        %1320 = vmatprep.subr.bf16.mxu0 0
        %1321 = vmatpush1.bf16.msra.mxu0 0
        %1322 = vmatprep.subr.bf16.mxu0 0
        %1323 = vmatpush1.bf16.msra.mxu0 0
        %1324 = vmatprep.subr.bf16.mxu0 0
        %1325 = vmatpush1.bf16.msra.mxu0 0
        %1326 = vmatprep.subr.bf16.mxu0 0
        %1327 = vmatpush1.bf16.msra.mxu0 %v1310
        %1328 = vmatprep.subr.bf16.mxu0 0
        %1329 = vmatpush2.bf16.msra.mxu0 0
        %1330 = vmatprep.subr.bf16.mxu0 0
        %1331 = vmatpush2.bf16.msra.mxu0 0
        %1332 = vmatprep.subr.bf16.mxu0 0
        %1333 = vmatpush2.bf16.msra.mxu0 0
        %1334 = vmatprep.subr.bf16.mxu0 0
        %1335 = vmatpush2.bf16.msra.mxu0 0
        %1336 = vmatprep.subr.bf16.mxu0 0
        %1337 = vmatpush2.bf16.msra.mxu0 0
        %1338 = vmatprep.subr.bf16.mxu0 0
        %1339 = vmatpush2.bf16.msra.mxu0 0
        %1340 = vmatprep.subr.bf16.mxu0 0
        %1341 = vmatpush2.bf16.msra.mxu0 0
        %1342 = vmatprep.subr.bf16.mxu0 0
        %1343 = vmatpush2.bf16.msra.mxu0 0
        %1344 = vmatprep.mubr.bf16.mxu0 0
        %1345 = vmatmul.mubr.bf16.gmra.mxu0 %v1307
        %v1346 = vpop.f32.mrf.mxu0
        %v1347 = vadd.f32 0.0, %v1346
        %v1348 = vpop.f32.mrf.mxu0
        %v1349 = vpop.f32.mrf.mxu0
        %v1350 = vpop.f32.mrf.mxu0
        %1351 = vdwg.mxu0
        %v1353 = vsel %vm980, %v1212, 0
        %v1356 = vsel %vm1216, %v979, 0
        %1358 = vmatprep.subr.bf16.mxu0 0
        %1359 = vmatpush1.bf16.msra.mxu0 0
        %1360 = vmatprep.subr.bf16.mxu0 0
        %1361 = vmatpush1.bf16.msra.mxu0 0
        %1362 = vmatprep.subr.bf16.mxu0 0
        %1363 = vmatpush1.bf16.msra.mxu0 0
        %1364 = vmatprep.subr.bf16.mxu0 0
        %1365 = vmatpush1.bf16.msra.mxu0 0
        %1366 = vmatprep.subr.bf16.mxu0 0
        %1367 = vmatpush1.bf16.msra.mxu0 0
        %1368 = vmatprep.subr.bf16.mxu0 0
        %1369 = vmatpush1.bf16.msra.mxu0 0
        %1370 = vmatprep.subr.bf16.mxu0 0
        %1371 = vmatpush1.bf16.msra.mxu0 0
        %1372 = vmatprep.subr.bf16.mxu0 0
        %1373 = vmatpush1.bf16.msra.mxu0 %v1356
        %1374 = vmatprep.subr.bf16.mxu0 0
        %1375 = vmatpush2.bf16.msra.mxu0 0
        %1376 = vmatprep.subr.bf16.mxu0 0
        %1377 = vmatpush2.bf16.msra.mxu0 0
        %1378 = vmatprep.subr.bf16.mxu0 0
        %1379 = vmatpush2.bf16.msra.mxu0 0
        %1380 = vmatprep.subr.bf16.mxu0 0
        %1381 = vmatpush2.bf16.msra.mxu0 0
        %1382 = vmatprep.subr.bf16.mxu0 0
        %1383 = vmatpush2.bf16.msra.mxu0 0
        %1384 = vmatprep.subr.bf16.mxu0 0
        %1385 = vmatpush2.bf16.msra.mxu0 0
        %1386 = vmatprep.subr.bf16.mxu0 0
        %1387 = vmatpush2.bf16.msra.mxu0 0
        %1388 = vmatprep.subr.bf16.mxu0 0
        %1389 = vmatpush2.bf16.msra.mxu0 0
        %1390 = vmatprep.mubr.bf16.mxu0 0
        %1391 = vmatmul.mubr.bf16.gmra.mxu0 %v1353
        %v1392 = vpop.f32.mrf.mxu0
        %v1393 = vadd.f32 0.0, %v1392
        %v1394 = vpop.f32.mrf.mxu0
        %v1395 = vpop.f32.mrf.mxu0
        %v1396 = vpop.f32.mrf.mxu0
        %1397 = vdwg.mxu0
        %v1398 = vpack.c.bf16 %v1255, %v1255
        %v1399 = vpack.c.bf16 %v1301, %v1301
        %v1400 = vpack.c.bf16 %v1347, %v1347
        %v1401 = vpack.c.bf16 %v1393, %v1393
        %v1402 = vld [vmem:[%s3] sm:$0xf]
        %v1403 = vld [vmem:[%s3 + $0x4] sm:$0xf]
        %v1404 = vld [vmem:[%s3 + $0x8] sm:$0xf]
        %v1405 = vld [vmem:[%s3 + $0xc] sm:$0xf]
        %v1407 = vsel %vm980, %v1398, 0
        %v1410 = vsel %vm1216, %v1402, 0
        %1412 = vmatprep.subr.bf16.mxu0 0
        %1413 = vmatpush1.bf16.msra.mxu0 0
        %1414 = vmatprep.subr.bf16.mxu0 0
        %1415 = vmatpush1.bf16.msra.mxu0 0
        %1416 = vmatprep.subr.bf16.mxu0 0
        %1417 = vmatpush1.bf16.msra.mxu0 0
        %1418 = vmatprep.subr.bf16.mxu0 0
        %1419 = vmatpush1.bf16.msra.mxu0 0
        %1420 = vmatprep.subr.bf16.mxu0 0
        %1421 = vmatpush1.bf16.msra.mxu0 0
        %1422 = vmatprep.subr.bf16.mxu0 0
        %1423 = vmatpush1.bf16.msra.mxu0 0
        %1424 = vmatprep.subr.bf16.mxu0 0
        %1425 = vmatpush1.bf16.msra.mxu0 0
        %1426 = vmatprep.subr.bf16.mxu0 0
        %1427 = vmatpush1.bf16.msra.mxu0 %v1410
        %1428 = vmatprep.subr.bf16.mxu0 0
        %1429 = vmatpush2.bf16.msra.mxu0 0
        %1430 = vmatprep.subr.bf16.mxu0 0
        %1431 = vmatpush2.bf16.msra.mxu0 0
        %1432 = vmatprep.subr.bf16.mxu0 0
        %1433 = vmatpush2.bf16.msra.mxu0 0
        %1434 = vmatprep.subr.bf16.mxu0 0
        %1435 = vmatpush2.bf16.msra.mxu0 0
        %1436 = vmatprep.subr.bf16.mxu0 0
        %1437 = vmatpush2.bf16.msra.mxu0 0
        %1438 = vmatprep.subr.bf16.mxu0 0
        %1439 = vmatpush2.bf16.msra.mxu0 0
        %1440 = vmatprep.subr.bf16.mxu0 0
        %1441 = vmatpush2.bf16.msra.mxu0 0
        %1442 = vmatprep.subr.bf16.mxu0 0
        %1443 = vmatpush2.bf16.msra.mxu0 0
        %1444 = vmatprep.mubr.bf16.mxu0 0
        %1445 = vmatmul.mubr.bf16.gmra.mxu0 %v1407
        %v1446 = vpop.f32.mrf.mxu0
        %v1447 = vadd.f32 0.0, %v1446
        %v1448 = vpop.f32.mrf.mxu0
        %v1449 = vpop.f32.mrf.mxu0
        %v1450 = vpop.f32.mrf.mxu0
        %1451 = vdwg.mxu0
        %v1453 = vsel %vm980, %v1399, 0
        %v1456 = vsel %vm1216, %v1403, 0
        %1458 = vmatprep.subr.bf16.mxu0 0
        %1459 = vmatpush1.bf16.msra.mxu0 0
        %1460 = vmatprep.subr.bf16.mxu0 0
        %1461 = vmatpush1.bf16.msra.mxu0 0
        %1462 = vmatprep.subr.bf16.mxu0 0
        %1463 = vmatpush1.bf16.msra.mxu0 0
        %1464 = vmatprep.subr.bf16.mxu0 0
        %1465 = vmatpush1.bf16.msra.mxu0 0
        %1466 = vmatprep.subr.bf16.mxu0 0
        %1467 = vmatpush1.bf16.msra.mxu0 0
        %1468 = vmatprep.subr.bf16.mxu0 0
        %1469 = vmatpush1.bf16.msra.mxu0 0
        %1470 = vmatprep.subr.bf16.mxu0 0
        %1471 = vmatpush1.bf16.msra.mxu0 0
        %1472 = vmatprep.subr.bf16.mxu0 0
        %1473 = vmatpush1.bf16.msra.mxu0 %v1456
        %1474 = vmatprep.subr.bf16.mxu0 0
        %1475 = vmatpush2.bf16.msra.mxu0 0
        %1476 = vmatprep.subr.bf16.mxu0 0
        %1477 = vmatpush2.bf16.msra.mxu0 0
        %1478 = vmatprep.subr.bf16.mxu0 0
        %1479 = vmatpush2.bf16.msra.mxu0 0
        %1480 = vmatprep.subr.bf16.mxu0 0
        %1481 = vmatpush2.bf16.msra.mxu0 0
        %1482 = vmatprep.subr.bf16.mxu0 0
        %1483 = vmatpush2.bf16.msra.mxu0 0
        %1484 = vmatprep.subr.bf16.mxu0 0
        %1485 = vmatpush2.bf16.msra.mxu0 0
        %1486 = vmatprep.subr.bf16.mxu0 0
        %1487 = vmatpush2.bf16.msra.mxu0 0
        %1488 = vmatprep.subr.bf16.mxu0 0
        %1489 = vmatpush2.bf16.msra.mxu0 0
        %1490 = vmatprep.mubr.bf16.mxu0 0
        %1491 = vmatmul.mubr.bf16.gmra.mxu0 %v1453
        %v1492 = vpop.f32.mrf.mxu0
        %v1493 = vadd.f32 0.0, %v1492
        %v1494 = vpop.f32.mrf.mxu0
        %v1495 = vpop.f32.mrf.mxu0
        %v1496 = vpop.f32.mrf.mxu0
        %1497 = vdwg.mxu0
        %v1499 = vsel %vm980, %v1400, 0
        %v1502 = vsel %vm1216, %v1404, 0
        %1504 = vmatprep.subr.bf16.mxu0 0
        %1505 = vmatpush1.bf16.msra.mxu0 0
        %1506 = vmatprep.subr.bf16.mxu0 0
        %1507 = vmatpush1.bf16.msra.mxu0 0
        %1508 = vmatprep.subr.bf16.mxu0 0
        %1509 = vmatpush1.bf16.msra.mxu0 0
        %1510 = vmatprep.subr.bf16.mxu0 0
        %1511 = vmatpush1.bf16.msra.mxu0 0
        %1512 = vmatprep.subr.bf16.mxu0 0
        %1513 = vmatpush1.bf16.msra.mxu0 0
        %1514 = vmatprep.subr.bf16.mxu0 0
        %1515 = vmatpush1.bf16.msra.mxu0 0
        %1516 = vmatprep.subr.bf16.mxu0 0
        %1517 = vmatpush1.bf16.msra.mxu0 0
        %1518 = vmatprep.subr.bf16.mxu0 0
        %1519 = vmatpush1.bf16.msra.mxu0 %v1502
        %1520 = vmatprep.subr.bf16.mxu0 0
        %1521 = vmatpush2.bf16.msra.mxu0 0
        %1522 = vmatprep.subr.bf16.mxu0 0
        %1523 = vmatpush2.bf16.msra.mxu0 0
        %1524 = vmatprep.subr.bf16.mxu0 0
        %1525 = vmatpush2.bf16.msra.mxu0 0
        %1526 = vmatprep.subr.bf16.mxu0 0
        %1527 = vmatpush2.bf16.msra.mxu0 0
        %1528 = vmatprep.subr.bf16.mxu0 0
        %1529 = vmatpush2.bf16.msra.mxu0 0
        %1530 = vmatprep.subr.bf16.mxu0 0
        %1531 = vmatpush2.bf16.msra.mxu0 0
        %1532 = vmatprep.subr.bf16.mxu0 0
        %1533 = vmatpush2.bf16.msra.mxu0 0
        %1534 = vmatprep.subr.bf16.mxu0 0
        %1535 = vmatpush2.bf16.msra.mxu0 0
        %1536 = vmatprep.mubr.bf16.mxu0 0
        %1537 = vmatmul.mubr.bf16.gmra.mxu0 %v1499
        %v1538 = vpop.f32.mrf.mxu0
        %v1539 = vadd.f32 0.0, %v1538
        %v1540 = vpop.f32.mrf.mxu0
        %v1541 = vpop.f32.mrf.mxu0
        %v1542 = vpop.f32.mrf.mxu0
        %1543 = vdwg.mxu0
        %v1545 = vsel %vm980, %v1401, 0
        %v1548 = vsel %vm1216, %v1405, 0
        %1550 = vmatprep.subr.bf16.mxu0 0
        %1551 = vmatpush1.bf16.msra.mxu0 0
        %1552 = vmatprep.subr.bf16.mxu0 0
        %1553 = vmatpush1.bf16.msra.mxu0 0
        %1554 = vmatprep.subr.bf16.mxu0 0
        %1555 = vmatpush1.bf16.msra.mxu0 0
        %1556 = vmatprep.subr.bf16.mxu0 0
        %1557 = vmatpush1.bf16.msra.mxu0 0
        %1558 = vmatprep.subr.bf16.mxu0 0
        %1559 = vmatpush1.bf16.msra.mxu0 0
        %1560 = vmatprep.subr.bf16.mxu0 0
        %1561 = vmatpush1.bf16.msra.mxu0 0
        %1562 = vmatprep.subr.bf16.mxu0 0
        %1563 = vmatpush1.bf16.msra.mxu0 0
        %1564 = vmatprep.subr.bf16.mxu0 0
        %1565 = vmatpush1.bf16.msra.mxu0 %v1548
        %1566 = vmatprep.subr.bf16.mxu0 0
        %1567 = vmatpush2.bf16.msra.mxu0 0
        %1568 = vmatprep.subr.bf16.mxu0 0
        %1569 = vmatpush2.bf16.msra.mxu0 0
        %1570 = vmatprep.subr.bf16.mxu0 0
        %1571 = vmatpush2.bf16.msra.mxu0 0
        %1572 = vmatprep.subr.bf16.mxu0 0
        %1573 = vmatpush2.bf16.msra.mxu0 0
        %1574 = vmatprep.subr.bf16.mxu0 0
        %1575 = vmatpush2.bf16.msra.mxu0 0
        %1576 = vmatprep.subr.bf16.mxu0 0
        %1577 = vmatpush2.bf16.msra.mxu0 0
        %1578 = vmatprep.subr.bf16.mxu0 0
        %1579 = vmatpush2.bf16.msra.mxu0 0
        %1580 = vmatprep.subr.bf16.mxu0 0
        %1581 = vmatpush2.bf16.msra.mxu0 0
        %1582 = vmatprep.mubr.bf16.mxu0 0
        %1583 = vmatmul.mubr.bf16.gmra.mxu0 %v1545
        %v1584 = vpop.f32.mrf.mxu0
        %v1585 = vadd.f32 0.0, %v1584
        %v1586 = vpop.f32.mrf.mxu0
        %v1587 = vpop.f32.mrf.mxu0
        %v1588 = vpop.f32.mrf.mxu0
        %1589 = vdwg.mxu0
        %v1590 = vsel %vm482, %v1447, 0.0
        %v1591 = vsel %vm482, %v1493, 0.0
        %v1592 = vadd.f32 %v1590, %v1591
        %v1593 = vsel %vm482, %v1539, 0.0
        %v1594 = vadd.f32 %v1592, %v1593
        %v1595 = vsel %vm482, %v1585, 0.0
        %v1596 = vadd.f32 %v1594, %v1595
        %v1597 = vld [vmem:[%s4] sm:$0x1]
        %v1599 = vlaneseq
        %v1600 = vshrl.u32 %v1599, 7
        %v1601 = vsub.s32 0, %v1600
        %v1602 = vrot.slane %v1597, %v1601
        %v1604 = vadd.f32 %v1596, %v1602
        %v1605 = vadd.f32 %v457, %v1604
        %v1606 = vld [vmem:[%s5] sm:$0x1]
        %v1607 = vld [vmem:[%s6] sm:$0x1]
        %v1608 = vsel %vm482, %v1605, 0.0
        %1609 = vadd.xlane.f32.xlu0 %v1608
        %v1610 = vpop.xlane.xlu0 %1609
        %v1611 = vrcp.pop 32.0
        %v1612 = vmul.f32 %v1610, %v1611
        %v1613 = vsub.f32 %v1605, %v1612
        %v1614 = vmul.f32 %v1613, %v1613
        %v1615 = vsel %vm482, %v1614, 0.0
        %1616 = vadd.xlane.f32.xlu0 %v1615
        %v1617 = vpop.xlane.xlu0 %1616
        %v1618 = vmul.f32 %v1617, %v1611
        %v1619 = vadd.f32 %v1618, 1e-05
        %v1620 = vrsqrt.pop %v1619
        %v1621 = vmul.f32 %v1613, %v1620
        %v1623 = vlaneseq
        %v1624 = vshrl.u32 %v1623, 7
        %v1625 = vsub.s32 0, %v1624
        %v1626 = vrot.slane %v1606, %v1625
        %v1628 = vmul.f32 %v1621, %v1626
        %v1630 = vlaneseq
        %v1631 = vshrl.u32 %v1630, 7
        %v1632 = vsub.s32 0, %v1631
        %v1633 = vrot.slane %v1607, %v1632
        %v1635 = vadd.f32 %v1628, %v1633
        %v1636 = vpack.c.bf16 %v1635, %v1635
        %v1637 = vld [vmem:[%s7] sm:$0xf]
        %v1638 = vld [vmem:[%s7 + $0x4] sm:$0xf]
        %v1639 = vld [vmem:[%s7 + $0x8] sm:$0xf]
        %v1640 = vld [vmem:[%s7 + $0xc] sm:$0xf]
        %v1641 = vld [vmem:[%s8] sm:$0x1]
        %v1643 = vlaneseq
        %v1644 = vshrl.u32 %v1643, 7
        %v1645 = vsub.s32 0, %v1644
        %v1646 = vrot.slane %v1641, %v1645
        %v1652 = vunpack.c.l.b16 %v1637
        %v1653 = vunpack.c.l.b16 %v1638
        %v1654 = vunpack.c.l.b16 %v1639
        %v1655 = vunpack.c.l.b16 %v1640
        %v1656 = vpack.c.b16 %v1653, %v1652
        %v1657 = vpack.c.b16 %v1655, %v1654
        %v1661 = vsel %vm482, %v1636, 0
        %1663 = vmatprep.subr.bf16.mxu0 0
        %1664 = vmatpush1.bf16.msra.mxu0 0
        %1665 = vmatprep.subr.bf16.mxu0 0
        %1666 = vmatpush1.bf16.msra.mxu0 0
        %1667 = vmatprep.subr.bf16.mxu0 0
        %1668 = vmatpush1.bf16.msra.mxu0 0
        %1669 = vmatprep.subr.bf16.mxu0 0
        %1670 = vmatpush1.bf16.msra.mxu0 0
        %1671 = vmatprep.subr.bf16.mxu0 0
        %1672 = vmatpush1.bf16.msra.mxu0 0
        %1673 = vmatprep.subr.bf16.mxu0 0
        %1674 = vmatpush1.bf16.msra.mxu0 0
        %1675 = vmatprep.subr.bf16.mxu0 0
        %1676 = vmatpush1.bf16.msra.mxu0 %v1657
        %1677 = vmatprep.subr.bf16.mxu0 0
        %1678 = vmatpush1.bf16.msra.mxu0 %v1656
        %1679 = vmatprep.subr.bf16.mxu0 0
        %1680 = vmatpush2.bf16.msra.mxu0 0
        %1681 = vmatprep.subr.bf16.mxu0 0
        %1682 = vmatpush2.bf16.msra.mxu0 0
        %1683 = vmatprep.subr.bf16.mxu0 0
        %1684 = vmatpush2.bf16.msra.mxu0 0
        %1685 = vmatprep.subr.bf16.mxu0 0
        %1686 = vmatpush2.bf16.msra.mxu0 0
        %1687 = vmatprep.subr.bf16.mxu0 0
        %1688 = vmatpush2.bf16.msra.mxu0 0
        %1689 = vmatprep.subr.bf16.mxu0 0
        %1690 = vmatpush2.bf16.msra.mxu0 0
        %1691 = vmatprep.subr.bf16.mxu0 0
        %1692 = vmatpush2.bf16.msra.mxu0 0
        %1693 = vmatprep.subr.bf16.mxu0 0
        %1694 = vmatpush2.bf16.msra.mxu0 0
        %1695 = vmatprep.mubr.bf16.mxu0 0
        %1696 = vmatmul.mubr.bf16.gmra.mxu0 %v1661
        %v1697 = vpop.f32.mrf.mxu0
        %v1698 = vadd.f32 %v1646, %v1697
        %v1699 = vpop.f32.mrf.mxu0
        %v1700 = vpop.f32.mrf.mxu0
        %v1701 = vpop.f32.mrf.mxu0
        %1702 = vdwg.mxu0
        %v1703 = vmax.f32 %v1698, 0.0
        %v1704 = vpack.c.bf16 %v1703, %v1703
        %v1705 = vld [vmem:[%s9] sm:$0xf]
        %v1706 = vld [vmem:[%s9 + $0x4] sm:$0xf]
        %v1707 = vld [vmem:[%s9 + $0x8] sm:$0xf]
        %v1708 = vld [vmem:[%s9 + $0xc] sm:$0xf]
        %v1709 = vld [vmem:[%s9 + $0x10] sm:$0xf]
        %v1710 = vld [vmem:[%s9 + $0x14] sm:$0xf]
        %v1711 = vld [vmem:[%s9 + $0x18] sm:$0xf]
        %v1712 = vld [vmem:[%s9 + $0x1c] sm:$0xf]
        %v1713 = vld [vmem:[%s10] sm:$0x1]
        %v1715 = vlaneseq
        %v1716 = vshrl.u32 %v1715, 7
        %v1717 = vsub.s32 0, %v1716
        %v1718 = vrot.slane %v1713, %v1717
        %v1728 = vunpack.c.l.b16 %v1705
        %v1729 = vunpack.c.l.b16 %v1706
        %v1730 = vunpack.c.l.b16 %v1707
        %v1731 = vunpack.c.l.b16 %v1708
        %v1732 = vunpack.c.l.b16 %v1709
        %v1733 = vunpack.c.l.b16 %v1710
        %v1734 = vunpack.c.l.b16 %v1711
        %v1735 = vunpack.c.l.b16 %v1712
        %v1736 = vpack.c.b16 %v1729, %v1728
        %v1737 = vpack.c.b16 %v1731, %v1730
        %v1738 = vpack.c.b16 %v1733, %v1732
        %v1739 = vpack.c.b16 %v1735, %v1734
        %vm1744 = vcmask 523264
        %v1746 = vsel %vm1744, %v1704, 0
        %1748 = vmatprep.subr.bf16.mxu0 0
        %1749 = vmatpush1.bf16.msra.mxu0 0
        %1750 = vmatprep.subr.bf16.mxu0 0
        %1751 = vmatpush1.bf16.msra.mxu0 0
        %1752 = vmatprep.subr.bf16.mxu0 0
        %1753 = vmatpush1.bf16.msra.mxu0 0
        %1754 = vmatprep.subr.bf16.mxu0 0
        %1755 = vmatpush1.bf16.msra.mxu0 0
        %1756 = vmatprep.subr.bf16.mxu0 0
        %1757 = vmatpush1.bf16.msra.mxu0 %v1739
        %1758 = vmatprep.subr.bf16.mxu0 0
        %1759 = vmatpush1.bf16.msra.mxu0 %v1738
        %1760 = vmatprep.subr.bf16.mxu0 0
        %1761 = vmatpush1.bf16.msra.mxu0 %v1737
        %1762 = vmatprep.subr.bf16.mxu0 0
        %1763 = vmatpush1.bf16.msra.mxu0 %v1736
        %1764 = vmatprep.subr.bf16.mxu0 0
        %1765 = vmatpush2.bf16.msra.mxu0 0
        %1766 = vmatprep.subr.bf16.mxu0 0
        %1767 = vmatpush2.bf16.msra.mxu0 0
        %1768 = vmatprep.subr.bf16.mxu0 0
        %1769 = vmatpush2.bf16.msra.mxu0 0
        %1770 = vmatprep.subr.bf16.mxu0 0
        %1771 = vmatpush2.bf16.msra.mxu0 0
        %1772 = vmatprep.subr.bf16.mxu0 0
        %1773 = vmatpush2.bf16.msra.mxu0 0
        %1774 = vmatprep.subr.bf16.mxu0 0
        %1775 = vmatpush2.bf16.msra.mxu0 0
        %1776 = vmatprep.subr.bf16.mxu0 0
        %1777 = vmatpush2.bf16.msra.mxu0 0
        %1778 = vmatprep.subr.bf16.mxu0 0
        %1779 = vmatpush2.bf16.msra.mxu0 0
        %1780 = vmatprep.mubr.bf16.mxu0 0
        %1781 = vmatmul.mubr.bf16.gmra.mxu0 %v1746
        %v1782 = vpop.f32.mrf.mxu0
        %v1783 = vadd.f32 %v1718, %v1782
        %v1784 = vpop.f32.mrf.mxu0
        %v1785 = vpop.f32.mrf.mxu0
        %v1786 = vpop.f32.mrf.mxu0
        %1787 = vdwg.mxu0
        %v1788 = vadd.f32 %v1635, %v1783
        %v1789 = vld [vmem:[%s11] sm:$0x1]
        %v1790 = vld [vmem:[%s12] sm:$0x1]
        %v1791 = vsel %vm482, %v1788, 0.0
        %1792 = vadd.xlane.f32.xlu0 %v1791
        %v1793 = vpop.xlane.xlu0 %1792
        %v1794 = vmul.f32 %v1793, %v1611
        %v1795 = vsub.f32 %v1788, %v1794
        %v1796 = vmul.f32 %v1795, %v1795
        %v1797 = vsel %vm482, %v1796, 0.0
        %1798 = vadd.xlane.f32.xlu0 %v1797
        %v1799 = vpop.xlane.xlu0 %1798
        %v1800 = vmul.f32 %v1799, %v1611
        %v1801 = vadd.f32 %v1800, 1e-05
        %v1802 = vrsqrt.pop %v1801
        %v1803 = vmul.f32 %v1795, %v1802
        %v1805 = vlaneseq
        %v1806 = vshrl.u32 %v1805, 7
        %v1807 = vsub.s32 0, %v1806
        %v1808 = vrot.slane %v1789, %v1807
        %v1810 = vmul.f32 %v1803, %v1808
        %v1812 = vlaneseq
        %v1813 = vshrl.u32 %v1812, 7
        %v1814 = vsub.s32 0, %v1813
        %v1815 = vrot.slane %v1790, %v1814
        %v1817 = vadd.f32 %v1810, %v1815
        %v1818 = vpack.c.bf16 %v1817, %v1817
        %s1819 = scalar_lea.vmem %s1, 16
        %v1820 = vld [vmem:[%s1819] sm:$0xf]
        %v1821 = vld [vmem:[%s1819 + $0x4] sm:$0xf]
        %v1822 = vld [vmem:[%s1819 + $0x8] sm:$0xf]
        %v1823 = vld [vmem:[%s1819 + $0xc] sm:$0xf]
        %s1824 = scalar_lea.vmem %s2, 1
        %v1825 = vld [vmem:[%s1824] sm:$0x1]
        %v1827 = vlaneseq
        %v1828 = vshrl.u32 %v1827, 7
        %v1829 = vsub.s32 0, %v1828
        %v1830 = vrot.slane %v1825, %v1829
        %v1836 = vunpack.c.l.b16 %v1820
        %v1837 = vunpack.c.l.b16 %v1821
        %v1838 = vunpack.c.l.b16 %v1822
        %v1839 = vunpack.c.l.b16 %v1823
        %v1840 = vpack.c.b16 %v1837, %v1836
        %v1841 = vpack.c.b16 %v1839, %v1838
        %v1845 = vsel %vm482, %v1818, 0
        %1847 = vmatprep.subr.bf16.mxu0 0
        %1848 = vmatpush1.bf16.msra.mxu0 0
        %1849 = vmatprep.subr.bf16.mxu0 0
        %1850 = vmatpush1.bf16.msra.mxu0 0
        %1851 = vmatprep.subr.bf16.mxu0 0
        %1852 = vmatpush1.bf16.msra.mxu0 0
        %1853 = vmatprep.subr.bf16.mxu0 0
        %1854 = vmatpush1.bf16.msra.mxu0 0
        %1855 = vmatprep.subr.bf16.mxu0 0
        %1856 = vmatpush1.bf16.msra.mxu0 0
        %1857 = vmatprep.subr.bf16.mxu0 0
        %1858 = vmatpush1.bf16.msra.mxu0 0
        %1859 = vmatprep.subr.bf16.mxu0 0
        %1860 = vmatpush1.bf16.msra.mxu0 %v1841
        %1861 = vmatprep.subr.bf16.mxu0 0
        %1862 = vmatpush1.bf16.msra.mxu0 %v1840
        %1863 = vmatprep.subr.bf16.mxu0 0
        %1864 = vmatpush2.bf16.msra.mxu0 0
        %1865 = vmatprep.subr.bf16.mxu0 0
        %1866 = vmatpush2.bf16.msra.mxu0 0
        %1867 = vmatprep.subr.bf16.mxu0 0
        %1868 = vmatpush2.bf16.msra.mxu0 0
        %1869 = vmatprep.subr.bf16.mxu0 0
        %1870 = vmatpush2.bf16.msra.mxu0 0
        %1871 = vmatprep.subr.bf16.mxu0 0
        %1872 = vmatpush2.bf16.msra.mxu0 0
        %1873 = vmatprep.subr.bf16.mxu0 0
        %1874 = vmatpush2.bf16.msra.mxu0 0
        %1875 = vmatprep.subr.bf16.mxu0 0
        %1876 = vmatpush2.bf16.msra.mxu0 0
        %1877 = vmatprep.subr.bf16.mxu0 0
        %1878 = vmatpush2.bf16.msra.mxu0 0
        %1879 = vmatprep.mubr.bf16.mxu0 0
        %1880 = vmatmul.mubr.bf16.gmra.mxu0 %v1845
        %v1881 = vpop.f32.mrf.mxu0
        %v1882 = vadd.f32 %v1830, %v1881
        %v1883 = vpop.f32.mrf.mxu0
        %v1884 = vpop.f32.mrf.mxu0
        %v1885 = vpop.f32.mrf.mxu0
        %1886 = vdwg.mxu0
        %1888 = vrot.lane.b32.xlu0 %v1882, 120
        %v1889 = vpop.permute.xlu0 %1888
        %1891 = vrot.lane.b32.xlu0 %v1882, 112
        %v1892 = vpop.permute.xlu0 %1891
        %1894 = vrot.lane.b32.xlu0 %v1882, 104
        %v1895 = vpop.permute.xlu0 %1894
        %1897 = vrot.lane.b32.xlu0 %v1882, 96
        %v1898 = vpop.permute.xlu0 %1897
        %1900 = vrot.lane.b32.xlu0 %v1882, 88
        %v1901 = vpop.permute.xlu0 %1900
        %1903 = vrot.lane.b32.xlu0 %v1882, 80
        %v1904 = vpop.permute.xlu0 %1903
        %1906 = vrot.lane.b32.xlu0 %v1882, 72
        %v1907 = vpop.permute.xlu0 %1906
        %1909 = vrot.lane.b32.xlu0 %v1882, 64
        %v1910 = vpop.permute.xlu0 %1909
        %1912 = vrot.lane.b32.xlu0 %v1882, 56
        %v1913 = vpop.permute.xlu0 %1912
        %1915 = vrot.lane.b32.xlu0 %v1882, 48
        %v1916 = vpop.permute.xlu0 %1915
        %1918 = vrot.lane.b32.xlu0 %v1882, 40
        %v1919 = vpop.permute.xlu0 %1918
        %v1921 = vcombine.low %v1882, %v1892
        %v1922 = vcombine.high %v1882, %v1892
        %v1924 = vunpack.c.l.s4 1983009808
        %v1925 = vunpack.c.0.s8 %v1924
        %v1926 = vlaneseq
        %v1927 = vshrl.u32 %v1926, 7
        %v1928 = vsub.s32 %v1925, %v1927
        %v1929 = vrot.slane %v1921, %v1928
        %v1931 = vunpack.c.l.s4 1983009808
        %v1932 = vunpack.c.0.s8 %v1931
        %v1933 = vlaneseq
        %v1934 = vshrl.u32 %v1933, 7
        %v1935 = vsub.s32 %v1932, %v1934
        %v1936 = vrot.slane %v1922, %v1935
        %v1937 = vcombine.low %v1889, %v1895
        %v1938 = vcombine.high %v1889, %v1895
        %v1940 = vunpack.c.l.s4 1983009808
        %v1941 = vunpack.c.0.s8 %v1940
        %v1942 = vlaneseq
        %v1943 = vshrl.u32 %v1942, 7
        %v1944 = vsub.s32 %v1941, %v1943
        %v1945 = vrot.slane %v1937, %v1944
        %v1947 = vunpack.c.l.s4 1983009808
        %v1948 = vunpack.c.0.s8 %v1947
        %v1949 = vlaneseq
        %v1950 = vshrl.u32 %v1949, 7
        %v1951 = vsub.s32 %v1948, %v1950
        %v1952 = vrot.slane %v1938, %v1951
        %v1953 = vcombine.low %v1898, %v1904
        %v1954 = vcombine.high %v1898, %v1904
        %v1956 = vunpack.c.l.s4 1983009808
        %v1957 = vunpack.c.0.s8 %v1956
        %v1958 = vlaneseq
        %v1959 = vshrl.u32 %v1958, 7
        %v1960 = vsub.s32 %v1957, %v1959
        %v1961 = vrot.slane %v1953, %v1960
        %v1963 = vunpack.c.l.s4 1983009808
        %v1964 = vunpack.c.0.s8 %v1963
        %v1965 = vlaneseq
        %v1966 = vshrl.u32 %v1965, 7
        %v1967 = vsub.s32 %v1964, %v1966
        %v1968 = vrot.slane %v1954, %v1967
        %v1969 = vcombine.low %v1901, %v1907
        %v1970 = vcombine.high %v1901, %v1907
        %v1972 = vunpack.c.l.s4 1983009808
        %v1973 = vunpack.c.0.s8 %v1972
        %v1974 = vlaneseq
        %v1975 = vshrl.u32 %v1974, 7
        %v1976 = vsub.s32 %v1973, %v1975
        %v1977 = vrot.slane %v1969, %v1976
        %v1979 = vunpack.c.l.s4 1983009808
        %v1980 = vunpack.c.0.s8 %v1979
        %v1981 = vlaneseq
        %v1982 = vshrl.u32 %v1981, 7
        %v1983 = vsub.s32 %v1980, %v1982
        %v1984 = vrot.slane %v1970, %v1983
        %v1985 = vcombine.low %v1929, %v1945
        %v1986 = vcombine.high %v1929, %v1945
        %v1988 = vunpack.c.l.s4 1934713408
        %v1989 = vunpack.c.0.s8 %v1988
        %v1990 = vlaneseq
        %v1991 = vshrl.u32 %v1990, 7
        %v1992 = vsub.s32 %v1989, %v1991
        %v1993 = vrot.slane %v1985, %v1992
        %v1995 = vunpack.c.l.s4 1934713408
        %v1996 = vunpack.c.0.s8 %v1995
        %v1997 = vlaneseq
        %v1998 = vshrl.u32 %v1997, 7
        %v1999 = vsub.s32 %v1996, %v1998
        %v2000 = vrot.slane %v1986, %v1999
        %v2001 = vcombine.low %v1936, %v1952
        %v2002 = vcombine.high %v1936, %v1952
        %v2004 = vunpack.c.l.s4 1934713408
        %v2005 = vunpack.c.0.s8 %v2004
        %v2006 = vlaneseq
        %v2007 = vshrl.u32 %v2006, 7
        %v2008 = vsub.s32 %v2005, %v2007
        %v2009 = vrot.slane %v2001, %v2008
        %v2011 = vunpack.c.l.s4 1934713408
        %v2012 = vunpack.c.0.s8 %v2011
        %v2013 = vlaneseq
        %v2014 = vshrl.u32 %v2013, 7
        %v2015 = vsub.s32 %v2012, %v2014
        %v2016 = vrot.slane %v2002, %v2015
        %v2017 = vcombine.low %v1961, %v1977
        %v2018 = vcombine.high %v1961, %v1977
        %v2020 = vunpack.c.l.s4 1934713408
        %v2021 = vunpack.c.0.s8 %v2020
        %v2022 = vlaneseq
        %v2023 = vshrl.u32 %v2022, 7
        %v2024 = vsub.s32 %v2021, %v2023
        %v2025 = vrot.slane %v2017, %v2024
        %v2027 = vunpack.c.l.s4 1934713408
        %v2028 = vunpack.c.0.s8 %v2027
        %v2029 = vlaneseq
        %v2030 = vshrl.u32 %v2029, 7
        %v2031 = vsub.s32 %v2028, %v2030
        %v2032 = vrot.slane %v2018, %v2031
        %v2033 = vcombine.low %v1968, %v1984
        %v2034 = vcombine.high %v1968, %v1984
        %v2036 = vunpack.c.l.s4 1934713408
        %v2037 = vunpack.c.0.s8 %v2036
        %v2038 = vlaneseq
        %v2039 = vshrl.u32 %v2038, 7
        %v2040 = vsub.s32 %v2037, %v2039
        %v2041 = vrot.slane %v2033, %v2040
        %v2043 = vunpack.c.l.s4 1934713408
        %v2044 = vunpack.c.0.s8 %v2043
        %v2045 = vlaneseq
        %v2046 = vshrl.u32 %v2045, 7
        %v2047 = vsub.s32 %v2044, %v2046
        %v2048 = vrot.slane %v2034, %v2047
        %v2049 = vcombine.low %v1993, %v2025
        %v2050 = vcombine.high %v1993, %v2025
        %v2051 = vcombine.low %v2000, %v2032
        %v2052 = vcombine.high %v2000, %v2032
        %v2053 = vcombine.low %v2009, %v2041
        %v2054 = vcombine.high %v2009, %v2041
        %v2055 = vcombine.low %v2016, %v2048
        %v2056 = vcombine.high %v2016, %v2048
        %v2057 = vcombine.low %v1910, %v1916
        %v2058 = vcombine.high %v1910, %v1916
        %v2060 = vunpack.c.l.s4 1983009808
        %v2061 = vunpack.c.0.s8 %v2060
        %v2062 = vlaneseq
        %v2063 = vshrl.u32 %v2062, 7
        %v2064 = vsub.s32 %v2061, %v2063
        %v2065 = vrot.slane %v2057, %v2064
        %v2067 = vunpack.c.l.s4 1983009808
        %v2068 = vunpack.c.0.s8 %v2067
        %v2069 = vlaneseq
        %v2070 = vshrl.u32 %v2069, 7
        %v2071 = vsub.s32 %v2068, %v2070
        %v2072 = vrot.slane %v2058, %v2071
        %v2073 = vcombine.low %v1913, %v1919
        %v2074 = vcombine.high %v1913, %v1919
        %v2076 = vunpack.c.l.s4 1983009808
        %v2077 = vunpack.c.0.s8 %v2076
        %v2078 = vlaneseq
        %v2079 = vshrl.u32 %v2078, 7
        %v2080 = vsub.s32 %v2077, %v2079
        %v2081 = vrot.slane %v2073, %v2080
        %v2083 = vunpack.c.l.s4 1983009808
        %v2084 = vunpack.c.0.s8 %v2083
        %v2085 = vlaneseq
        %v2086 = vshrl.u32 %v2085, 7
        %v2087 = vsub.s32 %v2084, %v2086
        %v2088 = vrot.slane %v2074, %v2087
        %v2089 = vcombine.low %v2065, %v2081
        %v2090 = vcombine.high %v2065, %v2081
        %v2092 = vunpack.c.l.s4 1934713408
        %v2093 = vunpack.c.0.s8 %v2092
        %v2094 = vlaneseq
        %v2095 = vshrl.u32 %v2094, 7
        %v2096 = vsub.s32 %v2093, %v2095
        %v2097 = vrot.slane %v2089, %v2096
        %v2099 = vunpack.c.l.s4 1934713408
        %v2100 = vunpack.c.0.s8 %v2099
        %v2101 = vlaneseq
        %v2102 = vshrl.u32 %v2101, 7
        %v2103 = vsub.s32 %v2100, %v2102
        %v2104 = vrot.slane %v2090, %v2103
        %v2105 = vcombine.low %v2072, %v2088
        %v2106 = vcombine.high %v2072, %v2088
        %v2108 = vunpack.c.l.s4 1934713408
        %v2109 = vunpack.c.0.s8 %v2108
        %v2110 = vlaneseq
        %v2111 = vshrl.u32 %v2110, 7
        %v2112 = vsub.s32 %v2109, %v2111
        %v2113 = vrot.slane %v2105, %v2112
        %v2115 = vunpack.c.l.s4 1934713408
        %v2116 = vunpack.c.0.s8 %v2115
        %v2117 = vlaneseq
        %v2118 = vshrl.u32 %v2117, 7
        %v2119 = vsub.s32 %v2116, %v2118
        %v2120 = vrot.slane %v2106, %v2119
        %v2121 = vcombine.high %v2097, 0.0
        %v2122 = vcombine.high %v2104, 0.0
        %v2123 = vcombine.high %v2113, 0.0
        %v2124 = vcombine.high %v2120, 0.0
        %v2125 = vcombine.low %v2049, %v2051
        %v2126 = vcombine.high %v2049, %v2051
        %v2128 = vunpack.c.l.s4 1983009808
        %v2129 = vunpack.c.0.s8 %v2128
        %v2130 = vlaneseq
        %v2131 = vshrl.u32 %v2130, 7
        %v2132 = vsub.s32 %v2129, %v2131
        %v2133 = vrot.slane %v2125, %v2132
        %v2135 = vunpack.c.l.s4 1983009808
        %v2136 = vunpack.c.0.s8 %v2135
        %v2137 = vlaneseq
        %v2138 = vshrl.u32 %v2137, 7
        %v2139 = vsub.s32 %v2136, %v2138
        %v2140 = vrot.slane %v2126, %v2139
        %v2141 = vcombine.low %v2050, %v2052
        %v2142 = vcombine.high %v2050, %v2052
        %v2144 = vunpack.c.l.s4 1983009808
        %v2145 = vunpack.c.0.s8 %v2144
        %v2146 = vlaneseq
        %v2147 = vshrl.u32 %v2146, 7
        %v2148 = vsub.s32 %v2145, %v2147
        %v2149 = vrot.slane %v2141, %v2148
        %v2151 = vunpack.c.l.s4 1983009808
        %v2152 = vunpack.c.0.s8 %v2151
        %v2153 = vlaneseq
        %v2154 = vshrl.u32 %v2153, 7
        %v2155 = vsub.s32 %v2152, %v2154
        %v2156 = vrot.slane %v2142, %v2155
        %v2157 = vcombine.low %v2053, %v2055
        %v2158 = vcombine.high %v2053, %v2055
        %v2160 = vunpack.c.l.s4 1983009808
        %v2161 = vunpack.c.0.s8 %v2160
        %v2162 = vlaneseq
        %v2163 = vshrl.u32 %v2162, 7
        %v2164 = vsub.s32 %v2161, %v2163
        %v2165 = vrot.slane %v2157, %v2164
        %v2167 = vunpack.c.l.s4 1983009808
        %v2168 = vunpack.c.0.s8 %v2167
        %v2169 = vlaneseq
        %v2170 = vshrl.u32 %v2169, 7
        %v2171 = vsub.s32 %v2168, %v2170
        %v2172 = vrot.slane %v2158, %v2171
        %v2173 = vcombine.low %v2054, %v2056
        %v2174 = vcombine.high %v2054, %v2056
        %v2176 = vunpack.c.l.s4 1983009808
        %v2177 = vunpack.c.0.s8 %v2176
        %v2178 = vlaneseq
        %v2179 = vshrl.u32 %v2178, 7
        %v2180 = vsub.s32 %v2177, %v2179
        %v2181 = vrot.slane %v2173, %v2180
        %v2183 = vunpack.c.l.s4 1983009808
        %v2184 = vunpack.c.0.s8 %v2183
        %v2185 = vlaneseq
        %v2186 = vshrl.u32 %v2185, 7
        %v2187 = vsub.s32 %v2184, %v2186
        %v2188 = vrot.slane %v2174, %v2187
        %v2189 = vcombine.low %v2133, %v2149
        %v2190 = vcombine.high %v2133, %v2149
        %v2192 = vunpack.c.l.s4 1934713408
        %v2193 = vunpack.c.0.s8 %v2192
        %v2194 = vlaneseq
        %v2195 = vshrl.u32 %v2194, 7
        %v2196 = vsub.s32 %v2193, %v2195
        %v2197 = vrot.slane %v2189, %v2196
        %v2199 = vunpack.c.l.s4 1934713408
        %v2200 = vunpack.c.0.s8 %v2199
        %v2201 = vlaneseq
        %v2202 = vshrl.u32 %v2201, 7
        %v2203 = vsub.s32 %v2200, %v2202
        %v2204 = vrot.slane %v2190, %v2203
        %v2205 = vcombine.low %v2140, %v2156
        %v2206 = vcombine.high %v2140, %v2156
        %v2208 = vunpack.c.l.s4 1934713408
        %v2209 = vunpack.c.0.s8 %v2208
        %v2210 = vlaneseq
        %v2211 = vshrl.u32 %v2210, 7
        %v2212 = vsub.s32 %v2209, %v2211
        %v2213 = vrot.slane %v2205, %v2212
        %v2215 = vunpack.c.l.s4 1934713408
        %v2216 = vunpack.c.0.s8 %v2215
        %v2217 = vlaneseq
        %v2218 = vshrl.u32 %v2217, 7
        %v2219 = vsub.s32 %v2216, %v2218
        %v2220 = vrot.slane %v2206, %v2219
        %v2221 = vcombine.low %v2165, %v2181
        %v2222 = vcombine.high %v2165, %v2181
        %v2224 = vunpack.c.l.s4 1934713408
        %v2225 = vunpack.c.0.s8 %v2224
        %v2226 = vlaneseq
        %v2227 = vshrl.u32 %v2226, 7
        %v2228 = vsub.s32 %v2225, %v2227
        %v2229 = vrot.slane %v2221, %v2228
        %v2231 = vunpack.c.l.s4 1934713408
        %v2232 = vunpack.c.0.s8 %v2231
        %v2233 = vlaneseq
        %v2234 = vshrl.u32 %v2233, 7
        %v2235 = vsub.s32 %v2232, %v2234
        %v2236 = vrot.slane %v2222, %v2235
        %v2237 = vcombine.low %v2172, %v2188
        %v2238 = vcombine.high %v2172, %v2188
        %v2240 = vunpack.c.l.s4 1934713408
        %v2241 = vunpack.c.0.s8 %v2240
        %v2242 = vlaneseq
        %v2243 = vshrl.u32 %v2242, 7
        %v2244 = vsub.s32 %v2241, %v2243
        %v2245 = vrot.slane %v2237, %v2244
        %v2247 = vunpack.c.l.s4 1934713408
        %v2248 = vunpack.c.0.s8 %v2247
        %v2249 = vlaneseq
        %v2250 = vshrl.u32 %v2249, 7
        %v2251 = vsub.s32 %v2248, %v2250
        %v2252 = vrot.slane %v2238, %v2251
        %v2253 = vcombine.low %v2197, %v2229
        %v2254 = vcombine.high %v2197, %v2229
        %v2255 = vcombine.low %v2204, %v2236
        %v2256 = vcombine.high %v2204, %v2236
        %v2257 = vcombine.low %v2213, %v2245
        %v2258 = vcombine.high %v2213, %v2245
        %v2259 = vcombine.low %v2220, %v2252
        %v2260 = vcombine.high %v2220, %v2252
        %v2261 = vcombine.low %v2097, %v2104
        %v2263 = vunpack.c.l.s4 1983009808
        %v2264 = vunpack.c.0.s8 %v2263
        %v2265 = vlaneseq
        %v2266 = vshrl.u32 %v2265, 7
        %v2267 = vsub.s32 %v2264, %v2266
        %v2268 = vrot.slane %v2261, %v2267
        %v2269 = vcombine.low %v2121, %v2122
        %v2271 = vunpack.c.l.s4 1983009808
        %v2272 = vunpack.c.0.s8 %v2271
        %v2273 = vlaneseq
        %v2274 = vshrl.u32 %v2273, 7
        %v2275 = vsub.s32 %v2272, %v2274
        %v2276 = vrot.slane %v2269, %v2275
        %v2277 = vcombine.low %v2113, %v2120
        %v2279 = vunpack.c.l.s4 1983009808
        %v2280 = vunpack.c.0.s8 %v2279
        %v2281 = vlaneseq
        %v2282 = vshrl.u32 %v2281, 7
        %v2283 = vsub.s32 %v2280, %v2282
        %v2284 = vrot.slane %v2277, %v2283
        %v2285 = vcombine.low %v2123, %v2124
        %v2287 = vunpack.c.l.s4 1983009808
        %v2288 = vunpack.c.0.s8 %v2287
        %v2289 = vlaneseq
        %v2290 = vshrl.u32 %v2289, 7
        %v2291 = vsub.s32 %v2288, %v2290
        %v2292 = vrot.slane %v2285, %v2291
        %v2293 = vcombine.low %v2268, %v2276
        %v2294 = vcombine.high %v2268, %v2276
        %v2296 = vunpack.c.l.s4 1934713408
        %v2297 = vunpack.c.0.s8 %v2296
        %v2298 = vlaneseq
        %v2299 = vshrl.u32 %v2298, 7
        %v2300 = vsub.s32 %v2297, %v2299
        %v2301 = vrot.slane %v2293, %v2300
        %v2303 = vunpack.c.l.s4 1934713408
        %v2304 = vunpack.c.0.s8 %v2303
        %v2305 = vlaneseq
        %v2306 = vshrl.u32 %v2305, 7
        %v2307 = vsub.s32 %v2304, %v2306
        %v2308 = vrot.slane %v2294, %v2307
        %v2309 = vcombine.low %v2284, %v2292
        %v2310 = vcombine.high %v2284, %v2292
        %v2312 = vunpack.c.l.s4 1934713408
        %v2313 = vunpack.c.0.s8 %v2312
        %v2314 = vlaneseq
        %v2315 = vshrl.u32 %v2314, 7
        %v2316 = vsub.s32 %v2313, %v2315
        %v2317 = vrot.slane %v2309, %v2316
        %v2319 = vunpack.c.l.s4 1934713408
        %v2320 = vunpack.c.0.s8 %v2319
        %v2321 = vlaneseq
        %v2322 = vshrl.u32 %v2321, 7
        %v2323 = vsub.s32 %v2320, %v2322
        %v2324 = vrot.slane %v2310, %v2323
        %v2325 = vcombine.low %v2301, %v2317
        %v2326 = vcombine.high %v2301, %v2317
        %v2327 = vcombine.low %v2308, %v2324
        %v2328 = vcombine.high %v2308, %v2324
        %v2329 = vpack.c.bf16 %v2253, %v2253
        %v2330 = vpack.c.bf16 %v2254, %v2254
        %v2331 = vpack.c.bf16 %v2255, %v2255
        %v2332 = vpack.c.bf16 %v2256, %v2256
        %v2333 = vpack.c.bf16 %v2257, %v2257
        %v2334 = vpack.c.bf16 %v2258, %v2258
        %v2335 = vpack.c.bf16 %v2259, %v2259
        %v2336 = vpack.c.bf16 %v2260, %v2260
        %v2337 = vpack.c.bf16 %v2325, %v2325
        %v2338 = vpack.c.bf16 %v2326, %v2326
        %v2339 = vpack.c.bf16 %v2327, %v2327
        %v2340 = vpack.c.bf16 %v2328, %v2328
        %v2342 = vsel %vm980, %v2329, 0
        %v2345 = vsel %vm980, %v2333, 0
        %2347 = vmatprep.subr.bf16.mxu0 0
        %2348 = vmatpush1.bf16.xpose.msra.mxu0 0
        %2349 = vmatprep.subr.bf16.mxu0 0
        %2350 = vmatpush1.bf16.xpose.msra.mxu0 0
        %2351 = vmatprep.subr.bf16.mxu0 0
        %2352 = vmatpush1.bf16.xpose.msra.mxu0 0
        %2353 = vmatprep.subr.bf16.mxu0 0
        %2354 = vmatpush1.bf16.xpose.msra.mxu0 0
        %2355 = vmatprep.subr.bf16.mxu0 0
        %2356 = vmatpush1.bf16.xpose.msra.mxu0 0
        %2357 = vmatprep.subr.bf16.mxu0 0
        %2358 = vmatpush1.bf16.xpose.msra.mxu0 0
        %2359 = vmatprep.subr.bf16.mxu0 0
        %2360 = vmatpush1.bf16.xpose.msra.mxu0 0
        %2361 = vmatprep.subr.bf16.mxu0 0
        %2362 = vmatpush1.bf16.xpose.msra.mxu0 %v2345
        %2363 = vmatprep.subr.bf16.mxu0 0
        %2364 = vmatpush2.bf16.xpose.msra.mxu0 0
        %2365 = vmatprep.subr.bf16.mxu0 0
        %2366 = vmatpush2.bf16.xpose.msra.mxu0 0
        %2367 = vmatprep.subr.bf16.mxu0 0
        %2368 = vmatpush2.bf16.xpose.msra.mxu0 0
        %2369 = vmatprep.subr.bf16.mxu0 0
        %2370 = vmatpush2.bf16.xpose.msra.mxu0 0
        %2371 = vmatprep.subr.bf16.mxu0 0
        %2372 = vmatpush2.bf16.xpose.msra.mxu0 0
        %2373 = vmatprep.subr.bf16.mxu0 0
        %2374 = vmatpush2.bf16.xpose.msra.mxu0 0
        %2375 = vmatprep.subr.bf16.mxu0 0
        %2376 = vmatpush2.bf16.xpose.msra.mxu0 0
        %2377 = vmatprep.subr.bf16.mxu0 0
        %2378 = vmatpush2.bf16.xpose.msra.mxu0 0
        %2379 = vmatprep.mubr.bf16.mxu0 0
        %2380 = vmatmul.mubr.bf16.gmra.mxu0 %v2342
        %v2381 = vpop.f32.mrf.mxu0
        %v2382 = vadd.f32 0.0, %v2381
        %v2383 = vpop.f32.mrf.mxu0
        %v2384 = vpop.f32.mrf.mxu0
        %v2385 = vpop.f32.mrf.mxu0
        %2386 = vdwg.mxu0
        %v2388 = vsel %vm980, %v2330, 0
        %v2391 = vsel %vm980, %v2334, 0
        %2393 = vmatprep.subr.bf16.mxu0 0
        %2394 = vmatpush1.bf16.xpose.msra.mxu0 0
        %2395 = vmatprep.subr.bf16.mxu0 0
        %2396 = vmatpush1.bf16.xpose.msra.mxu0 0
        %2397 = vmatprep.subr.bf16.mxu0 0
        %2398 = vmatpush1.bf16.xpose.msra.mxu0 0
        %2399 = vmatprep.subr.bf16.mxu0 0
        %2400 = vmatpush1.bf16.xpose.msra.mxu0 0
        %2401 = vmatprep.subr.bf16.mxu0 0
        %2402 = vmatpush1.bf16.xpose.msra.mxu0 0
        %2403 = vmatprep.subr.bf16.mxu0 0
        %2404 = vmatpush1.bf16.xpose.msra.mxu0 0
        %2405 = vmatprep.subr.bf16.mxu0 0
        %2406 = vmatpush1.bf16.xpose.msra.mxu0 0
        %2407 = vmatprep.subr.bf16.mxu0 0
        %2408 = vmatpush1.bf16.xpose.msra.mxu0 %v2391
        %2409 = vmatprep.subr.bf16.mxu0 0
        %2410 = vmatpush2.bf16.xpose.msra.mxu0 0
        %2411 = vmatprep.subr.bf16.mxu0 0
        %2412 = vmatpush2.bf16.xpose.msra.mxu0 0
        %2413 = vmatprep.subr.bf16.mxu0 0
        %2414 = vmatpush2.bf16.xpose.msra.mxu0 0
        %2415 = vmatprep.subr.bf16.mxu0 0
        %2416 = vmatpush2.bf16.xpose.msra.mxu0 0
        %2417 = vmatprep.subr.bf16.mxu0 0
        %2418 = vmatpush2.bf16.xpose.msra.mxu0 0
        %2419 = vmatprep.subr.bf16.mxu0 0
        %2420 = vmatpush2.bf16.xpose.msra.mxu0 0
        %2421 = vmatprep.subr.bf16.mxu0 0
        %2422 = vmatpush2.bf16.xpose.msra.mxu0 0
        %2423 = vmatprep.subr.bf16.mxu0 0
        %2424 = vmatpush2.bf16.xpose.msra.mxu0 0
        %2425 = vmatprep.mubr.bf16.mxu0 0
        %2426 = vmatmul.mubr.bf16.gmra.mxu0 %v2388
        %v2427 = vpop.f32.mrf.mxu0
        %v2428 = vadd.f32 0.0, %v2427
        %v2429 = vpop.f32.mrf.mxu0
        %v2430 = vpop.f32.mrf.mxu0
        %v2431 = vpop.f32.mrf.mxu0
        %2432 = vdwg.mxu0
        %v2434 = vsel %vm980, %v2331, 0
        %v2437 = vsel %vm980, %v2335, 0
        %2439 = vmatprep.subr.bf16.mxu0 0
        %2440 = vmatpush1.bf16.xpose.msra.mxu0 0
        %2441 = vmatprep.subr.bf16.mxu0 0
        %2442 = vmatpush1.bf16.xpose.msra.mxu0 0
        %2443 = vmatprep.subr.bf16.mxu0 0
        %2444 = vmatpush1.bf16.xpose.msra.mxu0 0
        %2445 = vmatprep.subr.bf16.mxu0 0
        %2446 = vmatpush1.bf16.xpose.msra.mxu0 0
        %2447 = vmatprep.subr.bf16.mxu0 0
        %2448 = vmatpush1.bf16.xpose.msra.mxu0 0
        %2449 = vmatprep.subr.bf16.mxu0 0
        %2450 = vmatpush1.bf16.xpose.msra.mxu0 0
        %2451 = vmatprep.subr.bf16.mxu0 0
        %2452 = vmatpush1.bf16.xpose.msra.mxu0 0
        %2453 = vmatprep.subr.bf16.mxu0 0
        %2454 = vmatpush1.bf16.xpose.msra.mxu0 %v2437
        %2455 = vmatprep.subr.bf16.mxu0 0
        %2456 = vmatpush2.bf16.xpose.msra.mxu0 0
        %2457 = vmatprep.subr.bf16.mxu0 0
        %2458 = vmatpush2.bf16.xpose.msra.mxu0 0
        %2459 = vmatprep.subr.bf16.mxu0 0
        %2460 = vmatpush2.bf16.xpose.msra.mxu0 0
        %2461 = vmatprep.subr.bf16.mxu0 0
        %2462 = vmatpush2.bf16.xpose.msra.mxu0 0
        %2463 = vmatprep.subr.bf16.mxu0 0
        %2464 = vmatpush2.bf16.xpose.msra.mxu0 0
        %2465 = vmatprep.subr.bf16.mxu0 0
        %2466 = vmatpush2.bf16.xpose.msra.mxu0 0
        %2467 = vmatprep.subr.bf16.mxu0 0
        %2468 = vmatpush2.bf16.xpose.msra.mxu0 0
        %2469 = vmatprep.subr.bf16.mxu0 0
        %2470 = vmatpush2.bf16.xpose.msra.mxu0 0
        %2471 = vmatprep.mubr.bf16.mxu0 0
        %2472 = vmatmul.mubr.bf16.gmra.mxu0 %v2434
        %v2473 = vpop.f32.mrf.mxu0
        %v2474 = vadd.f32 0.0, %v2473
        %v2475 = vpop.f32.mrf.mxu0
        %v2476 = vpop.f32.mrf.mxu0
        %v2477 = vpop.f32.mrf.mxu0
        %2478 = vdwg.mxu0
        %v2480 = vsel %vm980, %v2332, 0
        %v2483 = vsel %vm980, %v2336, 0
        %2485 = vmatprep.subr.bf16.mxu0 0
        %2486 = vmatpush1.bf16.xpose.msra.mxu0 0
        %2487 = vmatprep.subr.bf16.mxu0 0
        %2488 = vmatpush1.bf16.xpose.msra.mxu0 0
        %2489 = vmatprep.subr.bf16.mxu0 0
        %2490 = vmatpush1.bf16.xpose.msra.mxu0 0
        %2491 = vmatprep.subr.bf16.mxu0 0
        %2492 = vmatpush1.bf16.xpose.msra.mxu0 0
        %2493 = vmatprep.subr.bf16.mxu0 0
        %2494 = vmatpush1.bf16.xpose.msra.mxu0 0
        %2495 = vmatprep.subr.bf16.mxu0 0
        %2496 = vmatpush1.bf16.xpose.msra.mxu0 0
        %2497 = vmatprep.subr.bf16.mxu0 0
        %2498 = vmatpush1.bf16.xpose.msra.mxu0 0
        %2499 = vmatprep.subr.bf16.mxu0 0
        %2500 = vmatpush1.bf16.xpose.msra.mxu0 %v2483
        %2501 = vmatprep.subr.bf16.mxu0 0
        %2502 = vmatpush2.bf16.xpose.msra.mxu0 0
        %2503 = vmatprep.subr.bf16.mxu0 0
        %2504 = vmatpush2.bf16.xpose.msra.mxu0 0
        %2505 = vmatprep.subr.bf16.mxu0 0
        %2506 = vmatpush2.bf16.xpose.msra.mxu0 0
        %2507 = vmatprep.subr.bf16.mxu0 0
        %2508 = vmatpush2.bf16.xpose.msra.mxu0 0
        %2509 = vmatprep.subr.bf16.mxu0 0
        %2510 = vmatpush2.bf16.xpose.msra.mxu0 0
        %2511 = vmatprep.subr.bf16.mxu0 0
        %2512 = vmatpush2.bf16.xpose.msra.mxu0 0
        %2513 = vmatprep.subr.bf16.mxu0 0
        %2514 = vmatpush2.bf16.xpose.msra.mxu0 0
        %2515 = vmatprep.subr.bf16.mxu0 0
        %2516 = vmatpush2.bf16.xpose.msra.mxu0 0
        %2517 = vmatprep.mubr.bf16.mxu0 0
        %2518 = vmatmul.mubr.bf16.gmra.mxu0 %v2480
        %v2519 = vpop.f32.mrf.mxu0
        %v2520 = vadd.f32 0.0, %v2519
        %v2521 = vpop.f32.mrf.mxu0
        %v2522 = vpop.f32.mrf.mxu0
        %v2523 = vpop.f32.mrf.mxu0
        %2524 = vdwg.mxu0
        %v2525 = vsel %vm980, %v2382, -inf
        %2526 = vmax.xlane.f32.xlu0 %v2525
        %v2527 = vpop.xlane.xlu0 %2526
        %v2528 = vsel %vm980, %v2428, -inf
        %2529 = vmax.xlane.f32.xlu0 %v2528
        %v2530 = vpop.xlane.xlu0 %2529
        %v2531 = vsel %vm980, %v2474, -inf
        %2532 = vmax.xlane.f32.xlu0 %v2531
        %v2533 = vpop.xlane.xlu0 %2532
        %v2534 = vsel %vm980, %v2520, -inf
        %2535 = vmax.xlane.f32.xlu0 %v2534
        %v2536 = vpop.xlane.xlu0 %2535
        %v2537 = vsub.f32 %v2382, %v2527
        %v2538 = vsub.f32 %v2428, %v2530
        %v2539 = vsub.f32 %v2474, %v2533
        %v2540 = vsub.f32 %v2520, %v2536
        %v2541 = vmul.f32 %v2537, 1.442695
        %v2542 = vpow.pop %v2541
        %v2543 = vmul.f32 %v2538, 1.442695
        %v2544 = vpow.pop %v2543
        %v2545 = vmul.f32 %v2539, 1.442695
        %v2546 = vpow.pop %v2545
        %v2547 = vmul.f32 %v2540, 1.442695
        %v2548 = vpow.pop %v2547
        %v2549 = vsel %vm980, %v2542, 0.0
        %2550 = vadd.xlane.f32.xlu0 %v2549
        %v2551 = vpop.xlane.xlu0 %2550
        %v2552 = vsel %vm980, %v2544, 0.0
        %2553 = vadd.xlane.f32.xlu0 %v2552
        %v2554 = vpop.xlane.xlu0 %2553
        %v2555 = vsel %vm980, %v2546, 0.0
        %2556 = vadd.xlane.f32.xlu0 %v2555
        %v2557 = vpop.xlane.xlu0 %2556
        %v2558 = vsel %vm980, %v2548, 0.0
        %2559 = vadd.xlane.f32.xlu0 %v2558
        %v2560 = vpop.xlane.xlu0 %2559
        %v2561 = vrcp.pop %v2551
        %v2562 = vrcp.pop %v2554
        %v2563 = vrcp.pop %v2557
        %v2564 = vrcp.pop %v2560
        %v2565 = vmul.f32 %v2542, %v2561
        %v2566 = vmul.f32 %v2544, %v2562
        %v2567 = vmul.f32 %v2546, %v2563
        %v2568 = vmul.f32 %v2548, %v2564
        %v2569 = vpack.c.bf16 %v2565, %v2565
        %v2570 = vpack.c.bf16 %v2566, %v2566
        %v2571 = vpack.c.bf16 %v2567, %v2567
        %v2572 = vpack.c.bf16 %v2568, %v2568
        %v2574 = vsel %vm980, %v2569, 0
        %v2577 = vsel %vm1216, %v2337, 0
        %2579 = vmatprep.subr.bf16.mxu0 0
        %2580 = vmatpush1.bf16.msra.mxu0 0
        %2581 = vmatprep.subr.bf16.mxu0 0
        %2582 = vmatpush1.bf16.msra.mxu0 0
        %2583 = vmatprep.subr.bf16.mxu0 0
        %2584 = vmatpush1.bf16.msra.mxu0 0
        %2585 = vmatprep.subr.bf16.mxu0 0
        %2586 = vmatpush1.bf16.msra.mxu0 0
        %2587 = vmatprep.subr.bf16.mxu0 0
        %2588 = vmatpush1.bf16.msra.mxu0 0
        %2589 = vmatprep.subr.bf16.mxu0 0
        %2590 = vmatpush1.bf16.msra.mxu0 0
        %2591 = vmatprep.subr.bf16.mxu0 0
        %2592 = vmatpush1.bf16.msra.mxu0 0
        %2593 = vmatprep.subr.bf16.mxu0 0
        %2594 = vmatpush1.bf16.msra.mxu0 %v2577
        %2595 = vmatprep.subr.bf16.mxu0 0
        %2596 = vmatpush2.bf16.msra.mxu0 0
        %2597 = vmatprep.subr.bf16.mxu0 0
        %2598 = vmatpush2.bf16.msra.mxu0 0
        %2599 = vmatprep.subr.bf16.mxu0 0
        %2600 = vmatpush2.bf16.msra.mxu0 0
        %2601 = vmatprep.subr.bf16.mxu0 0
        %2602 = vmatpush2.bf16.msra.mxu0 0
        %2603 = vmatprep.subr.bf16.mxu0 0
        %2604 = vmatpush2.bf16.msra.mxu0 0
        %2605 = vmatprep.subr.bf16.mxu0 0
        %2606 = vmatpush2.bf16.msra.mxu0 0
        %2607 = vmatprep.subr.bf16.mxu0 0
        %2608 = vmatpush2.bf16.msra.mxu0 0
        %2609 = vmatprep.subr.bf16.mxu0 0
        %2610 = vmatpush2.bf16.msra.mxu0 0
        %2611 = vmatprep.mubr.bf16.mxu0 0
        %2612 = vmatmul.mubr.bf16.gmra.mxu0 %v2574
        %v2613 = vpop.f32.mrf.mxu0
        %v2614 = vadd.f32 0.0, %v2613
        %v2615 = vpop.f32.mrf.mxu0
        %v2616 = vpop.f32.mrf.mxu0
        %v2617 = vpop.f32.mrf.mxu0
        %2618 = vdwg.mxu0
        %v2620 = vsel %vm980, %v2570, 0
        %v2623 = vsel %vm1216, %v2338, 0
        %2625 = vmatprep.subr.bf16.mxu0 0
        %2626 = vmatpush1.bf16.msra.mxu0 0
        %2627 = vmatprep.subr.bf16.mxu0 0
        %2628 = vmatpush1.bf16.msra.mxu0 0
        %2629 = vmatprep.subr.bf16.mxu0 0
        %2630 = vmatpush1.bf16.msra.mxu0 0
        %2631 = vmatprep.subr.bf16.mxu0 0
        %2632 = vmatpush1.bf16.msra.mxu0 0
        %2633 = vmatprep.subr.bf16.mxu0 0
        %2634 = vmatpush1.bf16.msra.mxu0 0
        %2635 = vmatprep.subr.bf16.mxu0 0
        %2636 = vmatpush1.bf16.msra.mxu0 0
        %2637 = vmatprep.subr.bf16.mxu0 0
        %2638 = vmatpush1.bf16.msra.mxu0 0
        %2639 = vmatprep.subr.bf16.mxu0 0
        %2640 = vmatpush1.bf16.msra.mxu0 %v2623
        %2641 = vmatprep.subr.bf16.mxu0 0
        %2642 = vmatpush2.bf16.msra.mxu0 0
        %2643 = vmatprep.subr.bf16.mxu0 0
        %2644 = vmatpush2.bf16.msra.mxu0 0
        %2645 = vmatprep.subr.bf16.mxu0 0
        %2646 = vmatpush2.bf16.msra.mxu0 0
        %2647 = vmatprep.subr.bf16.mxu0 0
        %2648 = vmatpush2.bf16.msra.mxu0 0
        %2649 = vmatprep.subr.bf16.mxu0 0
        %2650 = vmatpush2.bf16.msra.mxu0 0
        %2651 = vmatprep.subr.bf16.mxu0 0
        %2652 = vmatpush2.bf16.msra.mxu0 0
        %2653 = vmatprep.subr.bf16.mxu0 0
        %2654 = vmatpush2.bf16.msra.mxu0 0
        %2655 = vmatprep.subr.bf16.mxu0 0
        %2656 = vmatpush2.bf16.msra.mxu0 0
        %2657 = vmatprep.mubr.bf16.mxu0 0
        %2658 = vmatmul.mubr.bf16.gmra.mxu0 %v2620
        %v2659 = vpop.f32.mrf.mxu0
        %v2660 = vadd.f32 0.0, %v2659
        %v2661 = vpop.f32.mrf.mxu0
        %v2662 = vpop.f32.mrf.mxu0
        %v2663 = vpop.f32.mrf.mxu0
        %2664 = vdwg.mxu0
        %v2666 = vsel %vm980, %v2571, 0
        %v2669 = vsel %vm1216, %v2339, 0
        %2671 = vmatprep.subr.bf16.mxu0 0
        %2672 = vmatpush1.bf16.msra.mxu0 0
        %2673 = vmatprep.subr.bf16.mxu0 0
        %2674 = vmatpush1.bf16.msra.mxu0 0
        %2675 = vmatprep.subr.bf16.mxu0 0
        %2676 = vmatpush1.bf16.msra.mxu0 0
        %2677 = vmatprep.subr.bf16.mxu0 0
        %2678 = vmatpush1.bf16.msra.mxu0 0
        %2679 = vmatprep.subr.bf16.mxu0 0
        %2680 = vmatpush1.bf16.msra.mxu0 0
        %2681 = vmatprep.subr.bf16.mxu0 0
        %2682 = vmatpush1.bf16.msra.mxu0 0
        %2683 = vmatprep.subr.bf16.mxu0 0
        %2684 = vmatpush1.bf16.msra.mxu0 0
        %2685 = vmatprep.subr.bf16.mxu0 0
        %2686 = vmatpush1.bf16.msra.mxu0 %v2669
        %2687 = vmatprep.subr.bf16.mxu0 0
        %2688 = vmatpush2.bf16.msra.mxu0 0
        %2689 = vmatprep.subr.bf16.mxu0 0
        %2690 = vmatpush2.bf16.msra.mxu0 0
        %2691 = vmatprep.subr.bf16.mxu0 0
        %2692 = vmatpush2.bf16.msra.mxu0 0
        %2693 = vmatprep.subr.bf16.mxu0 0
        %2694 = vmatpush2.bf16.msra.mxu0 0
        %2695 = vmatprep.subr.bf16.mxu0 0
        %2696 = vmatpush2.bf16.msra.mxu0 0
        %2697 = vmatprep.subr.bf16.mxu0 0
        %2698 = vmatpush2.bf16.msra.mxu0 0
        %2699 = vmatprep.subr.bf16.mxu0 0
        %2700 = vmatpush2.bf16.msra.mxu0 0
        %2701 = vmatprep.subr.bf16.mxu0 0
        %2702 = vmatpush2.bf16.msra.mxu0 0
        %2703 = vmatprep.mubr.bf16.mxu0 0
        %2704 = vmatmul.mubr.bf16.gmra.mxu0 %v2666
        %v2705 = vpop.f32.mrf.mxu0
        %v2706 = vadd.f32 0.0, %v2705
        %v2707 = vpop.f32.mrf.mxu0
        %v2708 = vpop.f32.mrf.mxu0
        %v2709 = vpop.f32.mrf.mxu0
        %2710 = vdwg.mxu0
        %v2712 = vsel %vm980, %v2572, 0
        %v2715 = vsel %vm1216, %v2340, 0
        %2717 = vmatprep.subr.bf16.mxu0 0
        %2718 = vmatpush1.bf16.msra.mxu0 0
        %2719 = vmatprep.subr.bf16.mxu0 0
        %2720 = vmatpush1.bf16.msra.mxu0 0
        %2721 = vmatprep.subr.bf16.mxu0 0
        %2722 = vmatpush1.bf16.msra.mxu0 0
        %2723 = vmatprep.subr.bf16.mxu0 0
        %2724 = vmatpush1.bf16.msra.mxu0 0
        %2725 = vmatprep.subr.bf16.mxu0 0
        %2726 = vmatpush1.bf16.msra.mxu0 0
        %2727 = vmatprep.subr.bf16.mxu0 0
        %2728 = vmatpush1.bf16.msra.mxu0 0
        %2729 = vmatprep.subr.bf16.mxu0 0
        %2730 = vmatpush1.bf16.msra.mxu0 0
        %2731 = vmatprep.subr.bf16.mxu0 0
        %2732 = vmatpush1.bf16.msra.mxu0 %v2715
        %2733 = vmatprep.subr.bf16.mxu0 0
        %2734 = vmatpush2.bf16.msra.mxu0 0
        %2735 = vmatprep.subr.bf16.mxu0 0
        %2736 = vmatpush2.bf16.msra.mxu0 0
        %2737 = vmatprep.subr.bf16.mxu0 0
        %2738 = vmatpush2.bf16.msra.mxu0 0
        %2739 = vmatprep.subr.bf16.mxu0 0
        %2740 = vmatpush2.bf16.msra.mxu0 0
        %2741 = vmatprep.subr.bf16.mxu0 0
        %2742 = vmatpush2.bf16.msra.mxu0 0
        %2743 = vmatprep.subr.bf16.mxu0 0
        %2744 = vmatpush2.bf16.msra.mxu0 0
        %2745 = vmatprep.subr.bf16.mxu0 0
        %2746 = vmatpush2.bf16.msra.mxu0 0
        %2747 = vmatprep.subr.bf16.mxu0 0
        %2748 = vmatpush2.bf16.msra.mxu0 0
        %2749 = vmatprep.mubr.bf16.mxu0 0
        %2750 = vmatmul.mubr.bf16.gmra.mxu0 %v2712
        %v2751 = vpop.f32.mrf.mxu0
        %v2752 = vadd.f32 0.0, %v2751
        %v2753 = vpop.f32.mrf.mxu0
        %v2754 = vpop.f32.mrf.mxu0
        %v2755 = vpop.f32.mrf.mxu0
        %2756 = vdwg.mxu0
        %v2757 = vpack.c.bf16 %v2614, %v2614
        %v2758 = vpack.c.bf16 %v2660, %v2660
        %v2759 = vpack.c.bf16 %v2706, %v2706
        %v2760 = vpack.c.bf16 %v2752, %v2752
        %s2761 = scalar_lea.vmem %s3, 16
        %v2762 = vld [vmem:[%s2761] sm:$0xf]
        %v2763 = vld [vmem:[%s2761 + $0x4] sm:$0xf]
        %v2764 = vld [vmem:[%s2761 + $0x8] sm:$0xf]
        %v2765 = vld [vmem:[%s2761 + $0xc] sm:$0xf]
        %v2767 = vsel %vm980, %v2757, 0
        %v2770 = vsel %vm1216, %v2762, 0
        %2772 = vmatprep.subr.bf16.mxu0 0
        %2773 = vmatpush1.bf16.msra.mxu0 0
        %2774 = vmatprep.subr.bf16.mxu0 0
        %2775 = vmatpush1.bf16.msra.mxu0 0
        %2776 = vmatprep.subr.bf16.mxu0 0
        %2777 = vmatpush1.bf16.msra.mxu0 0
        %2778 = vmatprep.subr.bf16.mxu0 0
        %2779 = vmatpush1.bf16.msra.mxu0 0
        %2780 = vmatprep.subr.bf16.mxu0 0
        %2781 = vmatpush1.bf16.msra.mxu0 0
        %2782 = vmatprep.subr.bf16.mxu0 0
        %2783 = vmatpush1.bf16.msra.mxu0 0
        %2784 = vmatprep.subr.bf16.mxu0 0
        %2785 = vmatpush1.bf16.msra.mxu0 0
        %2786 = vmatprep.subr.bf16.mxu0 0
        %2787 = vmatpush1.bf16.msra.mxu0 %v2770
        %2788 = vmatprep.subr.bf16.mxu0 0
        %2789 = vmatpush2.bf16.msra.mxu0 0
        %2790 = vmatprep.subr.bf16.mxu0 0
        %2791 = vmatpush2.bf16.msra.mxu0 0
        %2792 = vmatprep.subr.bf16.mxu0 0
        %2793 = vmatpush2.bf16.msra.mxu0 0
        %2794 = vmatprep.subr.bf16.mxu0 0
        %2795 = vmatpush2.bf16.msra.mxu0 0
        %2796 = vmatprep.subr.bf16.mxu0 0
        %2797 = vmatpush2.bf16.msra.mxu0 0
        %2798 = vmatprep.subr.bf16.mxu0 0
        %2799 = vmatpush2.bf16.msra.mxu0 0
        %2800 = vmatprep.subr.bf16.mxu0 0
        %2801 = vmatpush2.bf16.msra.mxu0 0
        %2802 = vmatprep.subr.bf16.mxu0 0
        %2803 = vmatpush2.bf16.msra.mxu0 0
        %2804 = vmatprep.mubr.bf16.mxu0 0
        %2805 = vmatmul.mubr.bf16.gmra.mxu0 %v2767
        %v2806 = vpop.f32.mrf.mxu0
        %v2807 = vadd.f32 0.0, %v2806
        %v2808 = vpop.f32.mrf.mxu0
        %v2809 = vpop.f32.mrf.mxu0
        %v2810 = vpop.f32.mrf.mxu0
        %2811 = vdwg.mxu0
        %v2813 = vsel %vm980, %v2758, 0
        %v2816 = vsel %vm1216, %v2763, 0
        %2818 = vmatprep.subr.bf16.mxu0 0
        %2819 = vmatpush1.bf16.msra.mxu0 0
        %2820 = vmatprep.subr.bf16.mxu0 0
        %2821 = vmatpush1.bf16.msra.mxu0 0
        %2822 = vmatprep.subr.bf16.mxu0 0
        %2823 = vmatpush1.bf16.msra.mxu0 0
        %2824 = vmatprep.subr.bf16.mxu0 0
        %2825 = vmatpush1.bf16.msra.mxu0 0
        %2826 = vmatprep.subr.bf16.mxu0 0
        %2827 = vmatpush1.bf16.msra.mxu0 0
        %2828 = vmatprep.subr.bf16.mxu0 0
        %2829 = vmatpush1.bf16.msra.mxu0 0
        %2830 = vmatprep.subr.bf16.mxu0 0
        %2831 = vmatpush1.bf16.msra.mxu0 0
        %2832 = vmatprep.subr.bf16.mxu0 0
        %2833 = vmatpush1.bf16.msra.mxu0 %v2816
        %2834 = vmatprep.subr.bf16.mxu0 0
        %2835 = vmatpush2.bf16.msra.mxu0 0
        %2836 = vmatprep.subr.bf16.mxu0 0
        %2837 = vmatpush2.bf16.msra.mxu0 0
        %2838 = vmatprep.subr.bf16.mxu0 0
        %2839 = vmatpush2.bf16.msra.mxu0 0
        %2840 = vmatprep.subr.bf16.mxu0 0
        %2841 = vmatpush2.bf16.msra.mxu0 0
        %2842 = vmatprep.subr.bf16.mxu0 0
        %2843 = vmatpush2.bf16.msra.mxu0 0
        %2844 = vmatprep.subr.bf16.mxu0 0
        %2845 = vmatpush2.bf16.msra.mxu0 0
        %2846 = vmatprep.subr.bf16.mxu0 0
        %2847 = vmatpush2.bf16.msra.mxu0 0
        %2848 = vmatprep.subr.bf16.mxu0 0
        %2849 = vmatpush2.bf16.msra.mxu0 0
        %2850 = vmatprep.mubr.bf16.mxu0 0
        %2851 = vmatmul.mubr.bf16.gmra.mxu0 %v2813
        %v2852 = vpop.f32.mrf.mxu0
        %v2853 = vadd.f32 0.0, %v2852
        %v2854 = vpop.f32.mrf.mxu0
        %v2855 = vpop.f32.mrf.mxu0
        %v2856 = vpop.f32.mrf.mxu0
        %2857 = vdwg.mxu0
        %v2859 = vsel %vm980, %v2759, 0
        %v2862 = vsel %vm1216, %v2764, 0
        %2864 = vmatprep.subr.bf16.mxu0 0
        %2865 = vmatpush1.bf16.msra.mxu0 0
        %2866 = vmatprep.subr.bf16.mxu0 0
        %2867 = vmatpush1.bf16.msra.mxu0 0
        %2868 = vmatprep.subr.bf16.mxu0 0
        %2869 = vmatpush1.bf16.msra.mxu0 0
        %2870 = vmatprep.subr.bf16.mxu0 0
        %2871 = vmatpush1.bf16.msra.mxu0 0
        %2872 = vmatprep.subr.bf16.mxu0 0
        %2873 = vmatpush1.bf16.msra.mxu0 0
        %2874 = vmatprep.subr.bf16.mxu0 0
        %2875 = vmatpush1.bf16.msra.mxu0 0
        %2876 = vmatprep.subr.bf16.mxu0 0
        %2877 = vmatpush1.bf16.msra.mxu0 0
        %2878 = vmatprep.subr.bf16.mxu0 0
        %2879 = vmatpush1.bf16.msra.mxu0 %v2862
        %2880 = vmatprep.subr.bf16.mxu0 0
        %2881 = vmatpush2.bf16.msra.mxu0 0
        %2882 = vmatprep.subr.bf16.mxu0 0
        %2883 = vmatpush2.bf16.msra.mxu0 0
        %2884 = vmatprep.subr.bf16.mxu0 0
        %2885 = vmatpush2.bf16.msra.mxu0 0
        %2886 = vmatprep.subr.bf16.mxu0 0
        %2887 = vmatpush2.bf16.msra.mxu0 0
        %2888 = vmatprep.subr.bf16.mxu0 0
        %2889 = vmatpush2.bf16.msra.mxu0 0
        %2890 = vmatprep.subr.bf16.mxu0 0
        %2891 = vmatpush2.bf16.msra.mxu0 0
        %2892 = vmatprep.subr.bf16.mxu0 0
        %2893 = vmatpush2.bf16.msra.mxu0 0
        %2894 = vmatprep.subr.bf16.mxu0 0
        %2895 = vmatpush2.bf16.msra.mxu0 0
        %2896 = vmatprep.mubr.bf16.mxu0 0
        %2897 = vmatmul.mubr.bf16.gmra.mxu0 %v2859
        %v2898 = vpop.f32.mrf.mxu0
        %v2899 = vadd.f32 0.0, %v2898
        %v2900 = vpop.f32.mrf.mxu0
        %v2901 = vpop.f32.mrf.mxu0
        %v2902 = vpop.f32.mrf.mxu0
        %2903 = vdwg.mxu0
        %v2905 = vsel %vm980, %v2760, 0
        %v2908 = vsel %vm1216, %v2765, 0
        %2910 = vmatprep.subr.bf16.mxu0 0
        %2911 = vmatpush1.bf16.msra.mxu0 0
        %2912 = vmatprep.subr.bf16.mxu0 0
        %2913 = vmatpush1.bf16.msra.mxu0 0
        %2914 = vmatprep.subr.bf16.mxu0 0
        %2915 = vmatpush1.bf16.msra.mxu0 0
        %2916 = vmatprep.subr.bf16.mxu0 0
        %2917 = vmatpush1.bf16.msra.mxu0 0
        %2918 = vmatprep.subr.bf16.mxu0 0
        %2919 = vmatpush1.bf16.msra.mxu0 0
        %2920 = vmatprep.subr.bf16.mxu0 0
        %2921 = vmatpush1.bf16.msra.mxu0 0
        %2922 = vmatprep.subr.bf16.mxu0 0
        %2923 = vmatpush1.bf16.msra.mxu0 0
        %2924 = vmatprep.subr.bf16.mxu0 0
        %2925 = vmatpush1.bf16.msra.mxu0 %v2908
        %2926 = vmatprep.subr.bf16.mxu0 0
        %2927 = vmatpush2.bf16.msra.mxu0 0
        %2928 = vmatprep.subr.bf16.mxu0 0
        %2929 = vmatpush2.bf16.msra.mxu0 0
        %2930 = vmatprep.subr.bf16.mxu0 0
        %2931 = vmatpush2.bf16.msra.mxu0 0
        %2932 = vmatprep.subr.bf16.mxu0 0
        %2933 = vmatpush2.bf16.msra.mxu0 0
        %2934 = vmatprep.subr.bf16.mxu0 0
        %2935 = vmatpush2.bf16.msra.mxu0 0
        %2936 = vmatprep.subr.bf16.mxu0 0
        %2937 = vmatpush2.bf16.msra.mxu0 0
        %2938 = vmatprep.subr.bf16.mxu0 0
        %2939 = vmatpush2.bf16.msra.mxu0 0
        %2940 = vmatprep.subr.bf16.mxu0 0
        %2941 = vmatpush2.bf16.msra.mxu0 0
        %2942 = vmatprep.mubr.bf16.mxu0 0
        %2943 = vmatmul.mubr.bf16.gmra.mxu0 %v2905
        %v2944 = vpop.f32.mrf.mxu0
        %v2945 = vadd.f32 0.0, %v2944
        %v2946 = vpop.f32.mrf.mxu0
        %v2947 = vpop.f32.mrf.mxu0
        %v2948 = vpop.f32.mrf.mxu0
        %2949 = vdwg.mxu0
        %v2950 = vsel %vm482, %v2807, 0.0
        %v2951 = vsel %vm482, %v2853, 0.0
        %v2952 = vadd.f32 %v2950, %v2951
        %v2953 = vsel %vm482, %v2899, 0.0
        %v2954 = vadd.f32 %v2952, %v2953
        %v2955 = vsel %vm482, %v2945, 0.0
        %v2956 = vadd.f32 %v2954, %v2955
        %s2957 = scalar_lea.vmem %s4, 1
        %v2958 = vld [vmem:[%s2957] sm:$0x1]
        %v2960 = vlaneseq
        %v2961 = vshrl.u32 %v2960, 7
        %v2962 = vsub.s32 0, %v2961
        %v2963 = vrot.slane %v2958, %v2962
        %v2965 = vadd.f32 %v2956, %v2963
        %v2966 = vadd.f32 %v1817, %v2965
        %s2967 = scalar_lea.vmem %s5, 1
        %v2968 = vld [vmem:[%s2967] sm:$0x1]
        %s2969 = scalar_lea.vmem %s6, 1
        %v2970 = vld [vmem:[%s2969] sm:$0x1]
        %v2971 = vsel %vm482, %v2966, 0.0
        %2972 = vadd.xlane.f32.xlu0 %v2971
        %v2973 = vpop.xlane.xlu0 %2972
        %v2974 = vmul.f32 %v2973, %v1611
        %v2975 = vsub.f32 %v2966, %v2974
        %v2976 = vmul.f32 %v2975, %v2975
        %v2977 = vsel %vm482, %v2976, 0.0
        %2978 = vadd.xlane.f32.xlu0 %v2977
        %v2979 = vpop.xlane.xlu0 %2978
        %v2980 = vmul.f32 %v2979, %v1611
        %v2981 = vadd.f32 %v2980, 1e-05
        %v2982 = vrsqrt.pop %v2981
        %v2983 = vmul.f32 %v2975, %v2982
        %v2985 = vlaneseq
        %v2986 = vshrl.u32 %v2985, 7
        %v2987 = vsub.s32 0, %v2986
        %v2988 = vrot.slane %v2968, %v2987
        %v2990 = vmul.f32 %v2983, %v2988
        %v2992 = vlaneseq
        %v2993 = vshrl.u32 %v2992, 7
        %v2994 = vsub.s32 0, %v2993
        %v2995 = vrot.slane %v2970, %v2994
        %v2997 = vadd.f32 %v2990, %v2995
        %v2998 = vpack.c.bf16 %v2997, %v2997
        %s2999 = scalar_lea.vmem %s7, 16
        %v3000 = vld [vmem:[%s2999] sm:$0xf]
        %v3001 = vld [vmem:[%s2999 + $0x4] sm:$0xf]
        %v3002 = vld [vmem:[%s2999 + $0x8] sm:$0xf]
        %v3003 = vld [vmem:[%s2999 + $0xc] sm:$0xf]
        %s3004 = scalar_lea.vmem %s8, 1
        %v3005 = vld [vmem:[%s3004] sm:$0x1]
        %v3007 = vlaneseq
        %v3008 = vshrl.u32 %v3007, 7
        %v3009 = vsub.s32 0, %v3008
        %v3010 = vrot.slane %v3005, %v3009
        %v3016 = vunpack.c.l.b16 %v3000
        %v3017 = vunpack.c.l.b16 %v3001
        %v3018 = vunpack.c.l.b16 %v3002
        %v3019 = vunpack.c.l.b16 %v3003
        %v3020 = vpack.c.b16 %v3017, %v3016
        %v3021 = vpack.c.b16 %v3019, %v3018
        %v3025 = vsel %vm482, %v2998, 0
        %3027 = vmatprep.subr.bf16.mxu0 0
        %3028 = vmatpush1.bf16.msra.mxu0 0
        %3029 = vmatprep.subr.bf16.mxu0 0
        %3030 = vmatpush1.bf16.msra.mxu0 0
        %3031 = vmatprep.subr.bf16.mxu0 0
        %3032 = vmatpush1.bf16.msra.mxu0 0
        %3033 = vmatprep.subr.bf16.mxu0 0
        %3034 = vmatpush1.bf16.msra.mxu0 0
        %3035 = vmatprep.subr.bf16.mxu0 0
        %3036 = vmatpush1.bf16.msra.mxu0 0
        %3037 = vmatprep.subr.bf16.mxu0 0
        %3038 = vmatpush1.bf16.msra.mxu0 0
        %3039 = vmatprep.subr.bf16.mxu0 0
        %3040 = vmatpush1.bf16.msra.mxu0 %v3021
        %3041 = vmatprep.subr.bf16.mxu0 0
        %3042 = vmatpush1.bf16.msra.mxu0 %v3020
        %3043 = vmatprep.subr.bf16.mxu0 0
        %3044 = vmatpush2.bf16.msra.mxu0 0
        %3045 = vmatprep.subr.bf16.mxu0 0
        %3046 = vmatpush2.bf16.msra.mxu0 0
        %3047 = vmatprep.subr.bf16.mxu0 0
        %3048 = vmatpush2.bf16.msra.mxu0 0
        %3049 = vmatprep.subr.bf16.mxu0 0
        %3050 = vmatpush2.bf16.msra.mxu0 0
        %3051 = vmatprep.subr.bf16.mxu0 0
        %3052 = vmatpush2.bf16.msra.mxu0 0
        %3053 = vmatprep.subr.bf16.mxu0 0
        %3054 = vmatpush2.bf16.msra.mxu0 0
        %3055 = vmatprep.subr.bf16.mxu0 0
        %3056 = vmatpush2.bf16.msra.mxu0 0
        %3057 = vmatprep.subr.bf16.mxu0 0
        %3058 = vmatpush2.bf16.msra.mxu0 0
        %3059 = vmatprep.mubr.bf16.mxu0 0
        %3060 = vmatmul.mubr.bf16.gmra.mxu0 %v3025
        %v3061 = vpop.f32.mrf.mxu0
        %v3062 = vadd.f32 %v3010, %v3061
        %v3063 = vpop.f32.mrf.mxu0
        %v3064 = vpop.f32.mrf.mxu0
        %v3065 = vpop.f32.mrf.mxu0
        %3066 = vdwg.mxu0
        %v3067 = vmax.f32 %v3062, 0.0
        %v3068 = vpack.c.bf16 %v3067, %v3067
        %s3069 = scalar_lea.vmem %s9, 32
        %v3070 = vld [vmem:[%s3069] sm:$0xf]
        %v3071 = vld [vmem:[%s3069 + $0x4] sm:$0xf]
        %v3072 = vld [vmem:[%s3069 + $0x8] sm:$0xf]
        %v3073 = vld [vmem:[%s3069 + $0xc] sm:$0xf]
        %v3074 = vld [vmem:[%s3069 + $0x10] sm:$0xf]
        %v3075 = vld [vmem:[%s3069 + $0x14] sm:$0xf]
        %v3076 = vld [vmem:[%s3069 + $0x18] sm:$0xf]
        %v3077 = vld [vmem:[%s3069 + $0x1c] sm:$0xf]
        %s3078 = scalar_lea.vmem %s10, 1
        %v3079 = vld [vmem:[%s3078] sm:$0x1]
        %v3081 = vlaneseq
        %v3082 = vshrl.u32 %v3081, 7
        %v3083 = vsub.s32 0, %v3082
        %v3084 = vrot.slane %v3079, %v3083
        %v3094 = vunpack.c.l.b16 %v3070
        %v3095 = vunpack.c.l.b16 %v3071
        %v3096 = vunpack.c.l.b16 %v3072
        %v3097 = vunpack.c.l.b16 %v3073
        %v3098 = vunpack.c.l.b16 %v3074
        %v3099 = vunpack.c.l.b16 %v3075
        %v3100 = vunpack.c.l.b16 %v3076
        %v3101 = vunpack.c.l.b16 %v3077
        %v3102 = vpack.c.b16 %v3095, %v3094
        %v3103 = vpack.c.b16 %v3097, %v3096
        %v3104 = vpack.c.b16 %v3099, %v3098
        %v3105 = vpack.c.b16 %v3101, %v3100
        %v3111 = vsel %vm1744, %v3068, 0
        %3113 = vmatprep.subr.bf16.mxu0 0
        %3114 = vmatpush1.bf16.msra.mxu0 0
        %3115 = vmatprep.subr.bf16.mxu0 0
        %3116 = vmatpush1.bf16.msra.mxu0 0
        %3117 = vmatprep.subr.bf16.mxu0 0
        %3118 = vmatpush1.bf16.msra.mxu0 0
        %3119 = vmatprep.subr.bf16.mxu0 0
        %3120 = vmatpush1.bf16.msra.mxu0 0
        %3121 = vmatprep.subr.bf16.mxu0 0
        %3122 = vmatpush1.bf16.msra.mxu0 %v3105
        %3123 = vmatprep.subr.bf16.mxu0 0
        %3124 = vmatpush1.bf16.msra.mxu0 %v3104
        %3125 = vmatprep.subr.bf16.mxu0 0
        %3126 = vmatpush1.bf16.msra.mxu0 %v3103
        %3127 = vmatprep.subr.bf16.mxu0 0
        %3128 = vmatpush1.bf16.msra.mxu0 %v3102
        %3129 = vmatprep.subr.bf16.mxu0 0
        %3130 = vmatpush2.bf16.msra.mxu0 0
        %3131 = vmatprep.subr.bf16.mxu0 0
        %3132 = vmatpush2.bf16.msra.mxu0 0
        %3133 = vmatprep.subr.bf16.mxu0 0
        %3134 = vmatpush2.bf16.msra.mxu0 0
        %3135 = vmatprep.subr.bf16.mxu0 0
        %3136 = vmatpush2.bf16.msra.mxu0 0
        %3137 = vmatprep.subr.bf16.mxu0 0
        %3138 = vmatpush2.bf16.msra.mxu0 0
        %3139 = vmatprep.subr.bf16.mxu0 0
        %3140 = vmatpush2.bf16.msra.mxu0 0
        %3141 = vmatprep.subr.bf16.mxu0 0
        %3142 = vmatpush2.bf16.msra.mxu0 0
        %3143 = vmatprep.subr.bf16.mxu0 0
        %3144 = vmatpush2.bf16.msra.mxu0 0
        %3145 = vmatprep.mubr.bf16.mxu0 0
        %3146 = vmatmul.mubr.bf16.gmra.mxu0 %v3111
        %v3147 = vpop.f32.mrf.mxu0
        %v3148 = vadd.f32 %v3084, %v3147
        %v3149 = vpop.f32.mrf.mxu0
        %v3150 = vpop.f32.mrf.mxu0
        %v3151 = vpop.f32.mrf.mxu0
        %3152 = vdwg.mxu0
        %v3153 = vadd.f32 %v2997, %v3148
        %s3154 = scalar_lea.vmem %s11, 1
        %v3155 = vld [vmem:[%s3154] sm:$0x1]
        %s3156 = scalar_lea.vmem %s12, 1
        %v3157 = vld [vmem:[%s3156] sm:$0x1]
        %v3158 = vsel %vm482, %v3153, 0.0
        %3159 = vadd.xlane.f32.xlu0 %v3158
        %v3160 = vpop.xlane.xlu0 %3159
        %v3161 = vmul.f32 %v3160, %v1611
        %v3162 = vsub.f32 %v3153, %v3161
        %v3163 = vmul.f32 %v3162, %v3162
        %v3164 = vsel %vm482, %v3163, 0.0
        %3165 = vadd.xlane.f32.xlu0 %v3164
        %v3166 = vpop.xlane.xlu0 %3165
        %v3167 = vmul.f32 %v3166, %v1611
        %v3168 = vadd.f32 %v3167, 1e-05
        %v3169 = vrsqrt.pop %v3168
        %v3170 = vmul.f32 %v3162, %v3169
        %v3172 = vlaneseq
        %v3173 = vshrl.u32 %v3172, 7
        %v3174 = vsub.s32 0, %v3173
        %v3175 = vrot.slane %v3155, %v3174
        %v3177 = vmul.f32 %v3170, %v3175
        %v3179 = vlaneseq
        %v3180 = vshrl.u32 %v3179, 7
        %v3181 = vsub.s32 0, %v3180
        %v3182 = vrot.slane %v3157, %v3181
        %v3184 = vadd.f32 %v3177, %v3182
        %3185 = vst.msk [vmem:[%s455] sm:$0xff] %vm482, %v3184
        %s3186 = sand.u32 %s316, 1
        %s3187 = scalar_lea.sflag [#allocation4], %s3186
        %s3188 = sand.u32 %s316, 1
        %s3189 = smul.addr %s3188, 8
        %s3190 = scalar_lea.vmem [#allocation5], %s3189
        // Predicated region
        $region77: #{tpu_custom_call.1} parent=71 // pred_check
          %p3191 = pneg %p326
        $region78: #{tpu_custom_call.1} parent=71 // pred_check_branch
          %3193 = sbr.rel (%p3191) target = $region80
        $region79: #{tpu_custom_call.1} parent=71 // pred_region
          %s3195 = ssub.s32 128, 128
          %3196 = vsyncadd %s3187, %s3195
          %s3197 = smul.addr %s30, 128
          %s3198 = scalar_lea.hbm %s13, %s3197
          %s3200 = sshll.u32 %s3190, 4
          %s3201 = int_to_ptr.vmem [resolvable:$true] %s3200
          %3203 = dma.vmem_to_hbm [thread:$0]  %s3201, 128, %s3198, %s3187
        $region80: #{tpu_custom_call.1} parent=71 // pred_fallthru
          _
      $region72: #{tpu_custom_call.1} parent=5 // pred_fallthru
        _
      %p3204 = scmp.le.s32.totalorder 2, %s25
      // Predicated region
      $region81: #{tpu_custom_call.1} parent=5 // pred_check
        %p3205 = pneg %p3204
      $region82: #{tpu_custom_call.1} parent=5 // pred_check_branch
        %3207 = sbr.rel (%p3205) target = $region84
      $region83: #{tpu_custom_call.1} parent=5 // pred_region
        %s3208 = ssub.s32 %s25, 2
        // Predicated region
        $region85: #{tpu_custom_call.1} parent=83 // pred_check
          %p3209 = pneg %p332
        $region86: #{tpu_custom_call.1} parent=83 // pred_check_branch
          %3211 = sbr.rel (%p3209) target = $region88
        $region87: #{tpu_custom_call.1} parent=83 // pred_region
          %s3212 = sand.u32 %s317, 1
          %s3213 = scalar_lea.sflag [#allocation4], %s3212
          %s3214 = sand.u32 %s317, 1
          %s3215 = smul.addr %s3214, 8
          %s3216 = scalar_lea.vmem [#allocation5], %s3215
          %3217 = dma.done %s3213, 128
        $region88: #{tpu_custom_call.1} parent=83 // pred_fallthru
          _
      $region84: #{tpu_custom_call.1} parent=5 // pred_fallthru
        _
    $region6: #{tpu_custom_call.1} parent=1 // loop_footer
      %s29 = sadd.s32 1, %s25
    $region7: #{tpu_custom_call.1} parent=1 // loop_footer_branch
      %24 = sbr.rel target = $region3
    $region8: #{tpu_custom_call.1} parent=1 // loop_exit
      _
    %3218 = vsyncpa [#allocation3], 1
    %s3219 = scalar_lea.sflag [#allocation3], 1
    %3220 = vsyncpa %s3219, 1
    %3221 = vsyncpa [#allocation4], 1
    %s3222 = scalar_lea.sflag [#allocation4], 1
    %3223 = vsyncpa %s3222, 1

</llo_original>
